<compile_context>
chip_gen: v5e
topology: v5e:2x2
jax: 0.10.0
libtpu: 0.0.40
codegen_flags: <defaults>
</compile_context>

<pallas_src>
import functools

import jax
import jax.numpy as jnp
from jax.experimental import pallas as pl
from jax.experimental.pallas import tpu as pltpu


# ----------------------------------------------------------------------------
# Pallas kernel: full CVAE forward (encode -> reparameterize -> decode)
# ----------------------------------------------------------------------------
def cvae_kernel(
    x_ref, y_ref, eps_ref,
    w1x_ref, wy_ref, b1_ref,        # encoder_fc1 x-part, fused y-proj, bias
    w2_ref, b2_ref,                 # encoder_fc2
    wmulv_ref, bmulv_ref,           # fused, lane-padded fc_mu | fc_log_var
    wd1z_ref, bd1_ref,              # decoder_fc1 z-part (lane-padded rows), bias
    wd2_ref, bd2_ref,               # decoder_fc2
    wd3_ref, bd3_ref,               # decoder_fc3
    recon_ref, mulv_ref,
):
    bf16 = jnp.bfloat16
    enc_h = w1x_ref.shape[1]           # 512
    lat_pad = eps_ref.shape[-1]        # lane-aligned latent slot (multiple of 128)

    xb = x_ref[...].astype(bf16)
    yb = y_ref[...].astype(bf16)

    def mm(a, w_ref):
        # bf16 x bf16 -> f32 accumulation on the MXU
        return jnp.dot(a, w_ref[...], preferred_element_type=jnp.float32)

    # ---- fused y projection (one K=num_classes pass for both concat layers) --
    yproj = mm(yb, wy_ref)                       # (TB, 512 + 256)
    y_enc = yproj[:, :enc_h]                     # encoder_fc1 y-contribution
    y_dec = yproj[:, enc_h:]                     # decoder_fc1 y-contribution

    # ---- encode ----
    h = mm(xb, w1x_ref)
    h = jnp.maximum(h + y_enc + b1_ref[...], 0.0)                 # relu (f32)
    h = mm(h.astype(bf16), w2_ref)
    h = jnp.maximum(h + b2_ref[...], 0.0)                         # relu (f32)

    # ---- fused, lane-dense mu | log_var head ----
    mulv = mm(h.astype(bf16), wmulv_ref) + bmulv_ref[...]         # (TB, 2*lat_pad)
    mu = mulv[:, :lat_pad]                      # slice at the 128-lane boundary
    log_var = mulv[:, lat_pad:]

    # ---- reparameterize (f32 elementwise, exp on EUP) ----
    # Padded lanes: mu=0, log_var=0, eps=0 -> z=0; their wd1z rows are 0 too.
    z = mu + eps_ref[...] * jnp.exp(0.5 * log_var)

    # ---- decode ----
    d = mm(z.astype(bf16), wd1z_ref)
    d = jnp.maximum(d + y_dec + bd1_ref[...], 0.0)                # relu (f32)
    d = mm(d.astype(bf16), wd2_ref)
    d = jnp.maximum(d + bd2_ref[...], 0.0)                        # relu (f32)
    logits = mm(d.astype(bf16), wd3_ref) + bd3_ref[...]

    recon_ref[...] = jax.nn.sigmoid(logits)
    mulv_ref[...] = mulv


# ----------------------------------------------------------------------------
# Wrapper
# ----------------------------------------------------------------------------
def _round_up(a, m):
    return (a + m - 1) // m * m


def cvae_forward(x_img, y_onehot, eps, packed, *, tb=1024):
    """x_img: (B, C, H, W); y_onehot: (B, num_classes); eps: (B, latent_dim).

    Returns (reconstruction, mu, log_var) exactly like the PyTorch module.
    `packed` is the output of pack_params() (bf16 weights, fused/padded layouts).
    """
    B = x_img.shape[0]
    feature_dim = x_img.shape[1] * x_img.shape[2] * x_img.shape[3]
    num_classes = y_onehot.shape[-1]
    latent_dim = eps.shape[-1]
    lat_pad = packed["wd1z"].shape[0]          # lane-aligned latent slot (>=128)

    # Flatten == x.view(-1, feature_dim); contiguous reshape, no extra traffic.
    x = x_img.reshape(B, feature_dim).astype(jnp.float32)
    y = y_onehot.astype(jnp.float32)
    # Pad eps to the lane-aligned latent slot (tiny: B x lat_pad f32).
    if latent_dim == lat_pad:
        e = eps
    else:
        e = jnp.pad(eps, ((0, 0), (0, lat_pad - latent_dim)))

    # Batch tile: multiple of 8 sublanes, capped to (rounded-up) batch, and
    # capped at ceil(B/2) so the grid has >= 2 steps (both v7x TensorCores used).
    assert tb % 8 == 0, "batch tile must be a multiple of 8"
    tb = min(tb, _round_up(B, 8))
    if B > 8:
        tb = min(tb, max(8, _round_up(pl.cdiv(B, 2), 8)))
    grid_n = pl.cdiv(B, tb)   # ragged last block; OOB output rows are masked

    weight_order = (
        "w1x", "wy", "b1",
        "w2", "b2",
        "wmulv", "bmulv",
        "wd1z", "bd1",
        "wd2", "bd2",
        "wd3", "bd3",
    )
    weights = [packed[k] for k in weight_order]

    data_spec = lambda cols: pl.BlockSpec((tb, cols), lambda i: (i, 0))
    # Weights/biases are grid-invariant: constant index_map keeps them
    # VMEM-resident for the whole grid (DMA'd once).
    const_spec = lambda arr: pl.BlockSpec(arr.shape, lambda i: (0, 0))

    in_specs = (
        [data_spec(feature_dim), data_spec(num_classes), data_spec(lat_pad)]
        + [const_spec(w) for w in weights]
    )
    out_specs = (data_spec(feature_dim), data_spec(2 * lat_pad))

    inputs = (x, y, e, *weights)

    # Advisory cost hint so XLA schedules neighboring ops sensibly.
    flops = 2 * B * (
        feature_dim * 512 + num_classes * (512 + 256) + 512 * 256
        + 256 * (2 * lat_pad) + lat_pad * 256 + 256 * 512 + 512 * feature_dim
    )
    transcendentals = B * (lat_pad + 2 * feature_dim)   # exp + sigmoid(exp, recip)
    bytes_accessed = (
        sum(int(a.size) * a.dtype.itemsize for a in inputs)
        + B * feature_dim * 4 + B * 2 * lat_pad * 4
    )

    recon, mulv = pl.pallas_call(
        cvae_kernel,
        grid=(grid_n,),
        in_specs=in_specs,
        out_specs=out_specs,
        out_shape=(
            jax.ShapeDtypeStruct((B, feature_dim), jnp.float32),   # reconstruction
            jax.ShapeDtypeStruct((B, 2 * lat_pad), jnp.float32),   # mu | log_var (lane-dense)
        ),
        compiler_params=pltpu.CompilerParams(
            dimension_semantics=("parallel",),
        ),
        cost_estimate=pl.CostEstimate(
            flops=flops,
            transcendentals=transcendentals,
            bytes_accessed=bytes_accessed,
        ),
    )(*inputs)

    mu = mulv[:, :latent_dim]
    log_var = mulv[:, lat_pad:lat_pad + latent_dim]
    return recon, mu, log_var


# ----------------------------------------------------------------------------
# Parameter init (PyTorch-Linear-style uniform bounds) + kernel-layout packing
# ----------------------------------------------------------------------------
def init_params(key, feature_dim, latent_dim, num_classes):
    """Returns f32, PyTorch-semantics params (W stored as (in, out), b as (1, out))."""
    def linear(key, fan_in, fan_out):
        kw, kb = jax.random.split(key)
        bound = 1.0 / jnp.sqrt(fan_in)
        w = jax.random.uniform(kw, (fan_in, fan_out), jnp.float32, -bound, bound)
        b = jax.random.uniform(kb, (1, fan_out), jnp.float32, -bound, bound)
        return w, b

    keys = jax.random.split(key, 7)
    w1, b1 = linear(keys[0], feature_dim + num_classes, 512)     # encoder_fc1
    w2, b2 = linear(keys[1], 512, 256)                           # encoder_fc2
    wmu, bmu = linear(keys[2], 256, latent_dim)                  # fc_mu
    wlv, blv = linear(keys[3], 256, latent_dim)                  # fc_log_var
    wd1, bd1 = linear(keys[4], latent_dim + num_classes, 256)    # decoder_fc1
    wd2, bd2 = linear(keys[5], 256, 512)                         # decoder_fc2
    wd3, bd3 = linear(keys[6], 512, feature_dim)                 # decoder_fc3

    return {
        "w1": w1, "b1": b1, "w2": w2, "b2": b2,
        "wmu": wmu, "bmu": bmu, "wlv": wlv, "blv": blv,
        "wd1": wd1, "bd1": bd1, "wd2": wd2, "bd2": bd2, "wd3": wd3, "bd3": bd3,
    }


def pack_params(p, feature_dim, latent_dim, num_classes):
    """Kernel layout: bf16 weights, split concat weights, fused y-proj,
    lane-dense (128-padded) fused mu|log_var head and matching decoder z-rows."""
    bf = lambda a: a.astype(jnp.bfloat16)
    lat_pad = _round_up(latent_dim, 128)
    pad_c = lat_pad - latent_dim

    # Lane-dense fused head: mu in lanes [0, lat_pad), log_var in [lat_pad, 2*lat_pad)
    wmu_p = jnp.pad(p["wmu"], ((0, 0), (0, pad_c)))
    wlv_p = jnp.pad(p["wlv"], ((0, 0), (0, pad_c)))
    bmu_p = jnp.pad(p["bmu"], ((0, 0), (0, pad_c)))
    blv_p = jnp.pad(p["blv"], ((0, 0), (0, pad_c)))
    # decoder_fc1 z-rows padded with zeros so padded z-lanes contribute nothing.
    wd1z_p = jnp.pad(p["wd1"][:latent_dim], ((0, pad_c), (0, 0)))

    return {
        "w1x": bf(p["w1"][:feature_dim]),                                  # (F, 512)
        # fused y-projection: [encoder_fc1 y-rows | decoder_fc1 y-rows]
        "wy": bf(jnp.concatenate([p["w1"][feature_dim:], p["wd1"][latent_dim:]], axis=1)),
        "b1": p["b1"],
        "w2": bf(p["w2"]), "b2": p["b2"],
        "wmulv": bf(jnp.concatenate([wmu_p, wlv_p], axis=1)),             # (256, 2*lat_pad)
        "bmulv": jnp.concatenate([bmu_p, blv_p], axis=1),                 # (1, 2*lat_pad)
        "wd1z": bf(wd1z_p), "bd1": p["bd1"],                              # (lat_pad, 256)
        "wd2": bf(p["wd2"]), "bd2": p["bd2"],
        "wd3": bf(p["wd3"]), "bd3": p["bd3"],
    }


# ----------------------------------------------------------------------------
# Pure-JAX reference mirroring the PyTorch forward (and the kernel's bf16
# matmul-input precision) for the correctness check
# ----------------------------------------------------------------------------
def cvae_reference(x_img, y, eps, p):
    def mm(a, w):
        return jnp.dot(a.astype(jnp.bfloat16), w.astype(jnp.bfloat16),
                       preferred_element_type=jnp.float32)

    B = x_img.shape[0]
    x = x_img.reshape(B, -1)
    h = jax.nn.relu(mm(jnp.concatenate([x, y], 1), p["w1"]) + p["b1"])
    h = jax.nn.relu(mm(h, p["w2"]) + p["b2"])
    mu = mm(h, p["wmu"]) + p["bmu"]
    log_var = mm(h, p["wlv"]) + p["blv"]
    z = mu + eps * jnp.exp(0.5 * log_var)
    d = jax.nn.relu(mm(jnp.concatenate([z, y], 1), p["wd1"]) + p["bd1"])
    d = jax.nn.relu(mm(d, p["wd2"]) + p["bd2"])
    recon = jax.nn.sigmoid(mm(d, p["wd3"]) + p["bd3"])
    return recon, mu, log_var


if __name__ == "__main__":
    # Small MNIST-like shapes: 16x16 single-channel images, 10 classes.
    # B=29 deliberately exercises the ragged last grid block + multi-step grid.
    B, C, H, W = 29, 1, 16, 16
    feature_dim = C * H * W          # 256
    latent_dim = 32
    num_classes = 10

    key = jax.random.PRNGKey(0)
    k_x, k_y, k_eps, k_params = jax.random.split(key, 4)

    x_img = jax.random.uniform(k_x, (B, C, H, W), jnp.float32)            # NCHW image
    labels = jax.random.randint(k_y, (B,), 0, num_classes)
    y_onehot = jax.nn.one_hot(labels, num_classes, dtype=jnp.float32)     # (B, 10)
    # eps ~ N(0,1) drawn in the wrapper (reparameterization noise), same role
    # as torch.randn_like inside CVAE.reparameterize.
    eps = jax.random.normal(k_eps, (B, latent_dim), jnp.float32)

    params = init_params(k_params, feature_dim, latent_dim, num_classes)
    packed = pack_params(params, feature_dim, latent_dim, num_classes)

    r_ref, mu_ref, lv_ref = cvae_reference(x_img, y_onehot, eps, params)

    # Default tile (auto-capped so grid >= 2) and a tiny tile (4 grid steps);
    # both must match the reference.
    for tb in (1024, 8):
        recon, mu, log_var = cvae_forward(x_img, y_onehot, eps, packed, tb=tb)
        jax.block_until_ready((recon, mu, log_var))

        assert recon.shape == (B, feature_dim)
        assert mu.shape == (B, latent_dim) and log_var.shape == (B, latent_dim)
        assert jnp.allclose(recon, r_ref, atol=2e-3, rtol=2e-3)
        assert jnp.allclose(mu, mu_ref, atol=2e-3, rtol=2e-3)
        assert jnp.allclose(log_var, lv_ref, atol=2e-3, rtol=2e-3)

    print("KERNEL_OK")
</pallas_src>

<mosaic_0001>
module attributes {stable_mosaic.version = 11 : i64} {
  func.func @cvae_kernel(%arg0: i32, %arg1: memref<16x256xf32, #tpu.memory_space<vmem>>, %arg2: memref<16x10xf32, #tpu.memory_space<vmem>>, %arg3: memref<16x128xf32, #tpu.memory_space<vmem>>, %arg4: memref<256x512xbf16, #tpu.memory_space<vmem>>, %arg5: memref<10x768xbf16, #tpu.memory_space<vmem>>, %arg6: memref<1x512xf32, #tpu.memory_space<vmem>>, %arg7: memref<512x256xbf16, #tpu.memory_space<vmem>>, %arg8: memref<1x256xf32, #tpu.memory_space<vmem>>, %arg9: memref<256x256xbf16, #tpu.memory_space<vmem>>, %arg10: memref<1x256xf32, #tpu.memory_space<vmem>>, %arg11: memref<128x256xbf16, #tpu.memory_space<vmem>>, %arg12: memref<1x256xf32, #tpu.memory_space<vmem>>, %arg13: memref<256x512xbf16, #tpu.memory_space<vmem>>, %arg14: memref<1x512xf32, #tpu.memory_space<vmem>>, %arg15: memref<512x256xbf16, #tpu.memory_space<vmem>>, %arg16: memref<1x256xf32, #tpu.memory_space<vmem>>, %arg17: memref<16x256xf32, #tpu.memory_space<vmem>>, %arg18: memref<16x256xf32, #tpu.memory_space<vmem>>) attributes {dimension_semantics = [#tpu.dimension_semantics<parallel>], iteration_bounds = array<i64: 2>, scalar_prefetch = 0 : i64, scratch_operands = 0 : i64, tpu.core_type = #tpu.core_type<tc>, window_params = [{transform_indices = @transform_0, window_bounds = array<i64: 16, 256>}, {transform_indices = @transform_1, window_bounds = array<i64: 16, 10>}, {transform_indices = @transform_2, window_bounds = array<i64: 16, 128>}, {pipeline_mode = #tpu.pipeline_mode<synchronous>, transform_indices = @transform_3, window_bounds = array<i64: 256, 512>}, {pipeline_mode = #tpu.pipeline_mode<synchronous>, transform_indices = @transform_4, window_bounds = array<i64: 10, 768>}, {pipeline_mode = #tpu.pipeline_mode<synchronous>, transform_indices = @transform_5, window_bounds = array<i64: 1, 512>}, {pipeline_mode = #tpu.pipeline_mode<synchronous>, transform_indices = @transform_6, window_bounds = array<i64: 512, 256>}, {pipeline_mode = #tpu.pipeline_mode<synchronous>, transform_indices = @transform_7, window_bounds = array<i64: 1, 256>}, {pipeline_mode = #tpu.pipeline_mode<synchronous>, transform_indices = @transform_8, window_bounds = array<i64: 256, 256>}, {pipeline_mode = #tpu.pipeline_mode<synchronous>, transform_indices = @transform_9, window_bounds = array<i64: 1, 256>}, {pipeline_mode = #tpu.pipeline_mode<synchronous>, transform_indices = @transform_10, window_bounds = array<i64: 128, 256>}, {pipeline_mode = #tpu.pipeline_mode<synchronous>, transform_indices = @transform_11, window_bounds = array<i64: 1, 256>}, {pipeline_mode = #tpu.pipeline_mode<synchronous>, transform_indices = @transform_12, window_bounds = array<i64: 256, 512>}, {pipeline_mode = #tpu.pipeline_mode<synchronous>, transform_indices = @transform_13, window_bounds = array<i64: 1, 512>}, {pipeline_mode = #tpu.pipeline_mode<synchronous>, transform_indices = @transform_14, window_bounds = array<i64: 512, 256>}, {pipeline_mode = #tpu.pipeline_mode<synchronous>, transform_indices = @transform_15, window_bounds = array<i64: 1, 256>}, {transform_indices = @transform_16, window_bounds = array<i64: 16, 256>}, {transform_indices = @transform_17, window_bounds = array<i64: 16, 256>}]} {
    %c0 = arith.constant 0 : index
    %c0_0 = arith.constant 0 : index
    %0 = vector.load %arg1[%c0, %c0_0] : memref<16x256xf32, #tpu.memory_space<vmem>>, vector<16x256xf32>
    %1 = arith.truncf %0 : vector<16x256xf32> to vector<16x256xbf16>
    %c0_1 = arith.constant 0 : index
    %c0_2 = arith.constant 0 : index
    %2 = vector.load %arg2[%c0_1, %c0_2] : memref<16x10xf32, #tpu.memory_space<vmem>>, vector<16x10xf32>
    %3 = arith.truncf %2 : vector<16x10xf32> to vector<16x10xbf16>
    %c0_3 = arith.constant 0 : index
    %c0_4 = arith.constant 0 : index
    %4 = vector.load %arg5[%c0_3, %c0_4] : memref<10x768xbf16, #tpu.memory_space<vmem>>, vector<10x768xbf16>
    %cst = arith.constant dense<0.000000e+00> : vector<16x768xf32>
    %5 = tpu.matmul %3, %4, %cst {dimension_numbers = #tpu.dot_dimension_numbers<[1], [0], [0], [1], [0, 0, 1, 1], [], []>} : vector<16x10xbf16>, vector<10x768xbf16>, vector<16x768xf32> -> vector<16x768xf32>
    %6 = vector.extract_strided_slice %5 {offsets = [0, 0], sizes = [16, 512], strides = [1, 1]} : vector<16x768xf32> to vector<16x512xf32>
    %7 = vector.extract_strided_slice %5 {offsets = [0, 512], sizes = [16, 256], strides = [1, 1]} : vector<16x768xf32> to vector<16x256xf32>
    %c0_5 = arith.constant 0 : index
    %c0_6 = arith.constant 0 : index
    %8 = vector.load %arg4[%c0_5, %c0_6] : memref<256x512xbf16, #tpu.memory_space<vmem>>, vector<256x512xbf16>
    %cst_7 = arith.constant dense<0.000000e+00> : vector<16x512xf32>
    %9 = tpu.matmul %1, %8, %cst_7 {dimension_numbers = #tpu.dot_dimension_numbers<[1], [0], [0], [1], [0, 0, 1, 1], [], []>} : vector<16x256xbf16>, vector<256x512xbf16>, vector<16x512xf32> -> vector<16x512xf32>
    %10 = arith.addf %9, %6 : vector<16x512xf32>
    %c0_8 = arith.constant 0 : index
    %c0_9 = arith.constant 0 : index
    %11 = vector.load %arg6[%c0_8, %c0_9] : memref<1x512xf32, #tpu.memory_space<vmem>>, vector<1x512xf32>
    %12 = vector.broadcast %11 : vector<1x512xf32> to vector<16x512xf32>
    %13 = arith.addf %10, %12 : vector<16x512xf32>
    %cst_10 = arith.constant 0.000000e+00 : f32
    %14 = vector.broadcast %cst_10 : f32 to vector<16x512xf32>
    %15 = arith.maximumf %13, %14 : vector<16x512xf32>
    %16 = arith.truncf %15 : vector<16x512xf32> to vector<16x512xbf16>
    %c0_11 = arith.constant 0 : index
    %c0_12 = arith.constant 0 : index
    %17 = vector.load %arg7[%c0_11, %c0_12] : memref<512x256xbf16, #tpu.memory_space<vmem>>, vector<512x256xbf16>
    %cst_13 = arith.constant dense<0.000000e+00> : vector<16x256xf32>
    %18 = tpu.matmul %16, %17, %cst_13 {dimension_numbers = #tpu.dot_dimension_numbers<[1], [0], [0], [1], [0, 0, 1, 1], [], []>} : vector<16x512xbf16>, vector<512x256xbf16>, vector<16x256xf32> -> vector<16x256xf32>
    %c0_14 = arith.constant 0 : index
    %c0_15 = arith.constant 0 : index
    %19 = vector.load %arg8[%c0_14, %c0_15] : memref<1x256xf32, #tpu.memory_space<vmem>>, vector<1x256xf32>
    %20 = vector.broadcast %19 : vector<1x256xf32> to vector<16x256xf32>
    %21 = arith.addf %18, %20 : vector<16x256xf32>
    %cst_16 = arith.constant 0.000000e+00 : f32
    %22 = vector.broadcast %cst_16 : f32 to vector<16x256xf32>
    %23 = arith.maximumf %21, %22 : vector<16x256xf32>
    %24 = arith.truncf %23 : vector<16x256xf32> to vector<16x256xbf16>
    %c0_17 = arith.constant 0 : index
    %c0_18 = arith.constant 0 : index
    %25 = vector.load %arg9[%c0_17, %c0_18] : memref<256x256xbf16, #tpu.memory_space<vmem>>, vector<256x256xbf16>
    %cst_19 = arith.constant dense<0.000000e+00> : vector<16x256xf32>
    %26 = tpu.matmul %24, %25, %cst_19 {dimension_numbers = #tpu.dot_dimension_numbers<[1], [0], [0], [1], [0, 0, 1, 1], [], []>} : vector<16x256xbf16>, vector<256x256xbf16>, vector<16x256xf32> -> vector<16x256xf32>
    %c0_20 = arith.constant 0 : index
    %c0_21 = arith.constant 0 : index
    %27 = vector.load %arg10[%c0_20, %c0_21] : memref<1x256xf32, #tpu.memory_space<vmem>>, vector<1x256xf32>
    %28 = vector.broadcast %27 : vector<1x256xf32> to vector<16x256xf32>
    %29 = arith.addf %26, %28 : vector<16x256xf32>
    %30 = vector.extract_strided_slice %29 {offsets = [0, 0], sizes = [16, 128], strides = [1, 1]} : vector<16x256xf32> to vector<16x128xf32>
    %31 = vector.extract_strided_slice %29 {offsets = [0, 128], sizes = [16, 128], strides = [1, 1]} : vector<16x256xf32> to vector<16x128xf32>
    %c0_22 = arith.constant 0 : index
    %c0_23 = arith.constant 0 : index
    %32 = vector.load %arg3[%c0_22, %c0_23] : memref<16x128xf32, #tpu.memory_space<vmem>>, vector<16x128xf32>
    %cst_24 = arith.constant 5.000000e-01 : f32
    %33 = vector.broadcast %cst_24 : f32 to vector<16x128xf32>
    %34 = arith.mulf %33, %31 : vector<16x128xf32>
    %35 = math.exp %34 : vector<16x128xf32>
    %36 = arith.mulf %32, %35 : vector<16x128xf32>
    %37 = arith.addf %30, %36 : vector<16x128xf32>
    %38 = arith.truncf %37 : vector<16x128xf32> to vector<16x128xbf16>
    %c0_25 = arith.constant 0 : index
    %c0_26 = arith.constant 0 : index
    %39 = vector.load %arg11[%c0_25, %c0_26] : memref<128x256xbf16, #tpu.memory_space<vmem>>, vector<128x256xbf16>
    %cst_27 = arith.constant dense<0.000000e+00> : vector<16x256xf32>
    %40 = tpu.matmul %38, %39, %cst_27 {dimension_numbers = #tpu.dot_dimension_numbers<[1], [0], [0], [1], [0, 0, 1, 1], [], []>} : vector<16x128xbf16>, vector<128x256xbf16>, vector<16x256xf32> -> vector<16x256xf32>
    %41 = arith.addf %40, %7 : vector<16x256xf32>
    %c0_28 = arith.constant 0 : index
    %c0_29 = arith.constant 0 : index
    %42 = vector.load %arg12[%c0_28, %c0_29] : memref<1x256xf32, #tpu.memory_space<vmem>>, vector<1x256xf32>
    %43 = vector.broadcast %42 : vector<1x256xf32> to vector<16x256xf32>
    %44 = arith.addf %41, %43 : vector<16x256xf32>
    %cst_30 = arith.constant 0.000000e+00 : f32
    %45 = vector.broadcast %cst_30 : f32 to vector<16x256xf32>
    %46 = arith.maximumf %44, %45 : vector<16x256xf32>
    %47 = arith.truncf %46 : vector<16x256xf32> to vector<16x256xbf16>
    %c0_31 = arith.constant 0 : index
    %c0_32 = arith.constant 0 : index
    %48 = vector.load %arg13[%c0_31, %c0_32] : memref<256x512xbf16, #tpu.memory_space<vmem>>, vector<256x512xbf16>
    %cst_33 = arith.constant dense<0.000000e+00> : vector<16x512xf32>
    %49 = tpu.matmul %47, %48, %cst_33 {dimension_numbers = #tpu.dot_dimension_numbers<[1], [0], [0], [1], [0, 0, 1, 1], [], []>} : vector<16x256xbf16>, vector<256x512xbf16>, vector<16x512xf32> -> vector<16x512xf32>
    %c0_34 = arith.constant 0 : index
    %c0_35 = arith.constant 0 : index
    %50 = vector.load %arg14[%c0_34, %c0_35] : memref<1x512xf32, #tpu.memory_space<vmem>>, vector<1x512xf32>
    %51 = vector.broadcast %50 : vector<1x512xf32> to vector<16x512xf32>
    %52 = arith.addf %49, %51 : vector<16x512xf32>
    %cst_36 = arith.constant 0.000000e+00 : f32
    %53 = vector.broadcast %cst_36 : f32 to vector<16x512xf32>
    %54 = arith.maximumf %52, %53 : vector<16x512xf32>
    %55 = arith.truncf %54 : vector<16x512xf32> to vector<16x512xbf16>
    %c0_37 = arith.constant 0 : index
    %c0_38 = arith.constant 0 : index
    %56 = vector.load %arg15[%c0_37, %c0_38] : memref<512x256xbf16, #tpu.memory_space<vmem>>, vector<512x256xbf16>
    %cst_39 = arith.constant dense<0.000000e+00> : vector<16x256xf32>
    %57 = tpu.matmul %55, %56, %cst_39 {dimension_numbers = #tpu.dot_dimension_numbers<[1], [0], [0], [1], [0, 0, 1, 1], [], []>} : vector<16x512xbf16>, vector<512x256xbf16>, vector<16x256xf32> -> vector<16x256xf32>
    %c0_40 = arith.constant 0 : index
    %c0_41 = arith.constant 0 : index
    %58 = vector.load %arg16[%c0_40, %c0_41] : memref<1x256xf32, #tpu.memory_space<vmem>>, vector<1x256xf32>
    %59 = vector.broadcast %58 : vector<1x256xf32> to vector<16x256xf32>
    %60 = arith.addf %57, %59 : vector<16x256xf32>
    %61 = arith.negf %60 : vector<16x256xf32>
    %62 = math.exp %61 : vector<16x256xf32>
    %cst_42 = arith.constant 1.000000e+00 : f32
    %63 = vector.broadcast %cst_42 : f32 to vector<16x256xf32>
    %64 = arith.addf %63, %62 : vector<16x256xf32>
    %65 = arith.divf %63, %64 : vector<16x256xf32>
    %c0_43 = arith.constant 0 : index
    %c0_44 = arith.constant 0 : index
    %66 = vector.load %arg17[%c0_43, %c0_44] : memref<16x256xf32, #tpu.memory_space<vmem>>, vector<16x256xf32>
    tpu.vector_store %arg17[%c0_43, %c0_44], %65 {strides = array<i32>} : memref<16x256xf32, #tpu.memory_space<vmem>>, vector<16x256xf32>,
    %c0_45 = arith.constant 0 : index
    %c0_46 = arith.constant 0 : index
    %67 = vector.load %arg18[%c0_45, %c0_46] : memref<16x256xf32, #tpu.memory_space<vmem>>, vector<16x256xf32>
    tpu.vector_store %arg18[%c0_45, %c0_46], %29 {strides = array<i32>} : memref<16x256xf32, #tpu.memory_space<vmem>>, vector<16x256xf32>,
    return
  }
  func.func @transform_0(%arg0: i32) -> (i32, i32) {
    %c0_i32 = arith.constant 0 : i32
    %c0_i32_0 = arith.constant 0 : i32
    return %arg0, %c0_i32 : i32, i32
  }
  func.func @transform_1(%arg0: i32) -> (i32, i32) {
    %c0_i32 = arith.constant 0 : i32
    %c0_i32_0 = arith.constant 0 : i32
    return %arg0, %c0_i32 : i32, i32
  }
  func.func @transform_2(%arg0: i32) -> (i32, i32) {
    %c0_i32 = arith.constant 0 : i32
    %c0_i32_0 = arith.constant 0 : i32
    return %arg0, %c0_i32 : i32, i32
  }
  func.func @transform_3(%arg0: i32) -> (i32, i32) {
    %c0_i32 = arith.constant 0 : i32
    %c0_i32_0 = arith.constant 0 : i32
    %c0_i32_1 = arith.constant 0 : i32
    return %c0_i32, %c0_i32_0 : i32, i32
  }
  func.func @transform_4(%arg0: i32) -> (i32, i32) {
    %c0_i32 = arith.constant 0 : i32
    %c0_i32_0 = arith.constant 0 : i32
    %c0_i32_1 = arith.constant 0 : i32
    return %c0_i32, %c0_i32_0 : i32, i32
  }
  func.func @transform_5(%arg0: i32) -> (i32, i32) {
    %c0_i32 = arith.constant 0 : i32
    %c0_i32_0 = arith.constant 0 : i32
    %c0_i32_1 = arith.constant 0 : i32
    return %c0_i32, %c0_i32_0 : i32, i32
  }
  func.func @transform_6(%arg0: i32) -> (i32, i32) {
    %c0_i32 = arith.constant 0 : i32
    %c0_i32_0 = arith.constant 0 : i32
    %c0_i32_1 = arith.constant 0 : i32
    return %c0_i32, %c0_i32_0 : i32, i32
  }
  func.func @transform_7(%arg0: i32) -> (i32, i32) {
    %c0_i32 = arith.constant 0 : i32
    %c0_i32_0 = arith.constant 0 : i32
    %c0_i32_1 = arith.constant 0 : i32
    return %c0_i32, %c0_i32_0 : i32, i32
  }
  func.func @transform_8(%arg0: i32) -> (i32, i32) {
    %c0_i32 = arith.constant 0 : i32
    %c0_i32_0 = arith.constant 0 : i32
    %c0_i32_1 = arith.constant 0 : i32
    return %c0_i32, %c0_i32_0 : i32, i32
  }
  func.func @transform_9(%arg0: i32) -> (i32, i32) {
    %c0_i32 = arith.constant 0 : i32
    %c0_i32_0 = arith.constant 0 : i32
    %c0_i32_1 = arith.constant 0 : i32
    return %c0_i32, %c0_i32_0 : i32, i32
  }
  func.func @transform_10(%arg0: i32) -> (i32, i32) {
    %c0_i32 = arith.constant 0 : i32
    %c0_i32_0 = arith.constant 0 : i32
    %c0_i32_1 = arith.constant 0 : i32
    return %c0_i32, %c0_i32_0 : i32, i32
  }
  func.func @transform_11(%arg0: i32) -> (i32, i32) {
    %c0_i32 = arith.constant 0 : i32
    %c0_i32_0 = arith.constant 0 : i32
    %c0_i32_1 = arith.constant 0 : i32
    return %c0_i32, %c0_i32_0 : i32, i32
  }
  func.func @transform_12(%arg0: i32) -> (i32, i32) {
    %c0_i32 = arith.constant 0 : i32
    %c0_i32_0 = arith.constant 0 : i32
    %c0_i32_1 = arith.constant 0 : i32
    return %c0_i32, %c0_i32_0 : i32, i32
  }
  func.func @transform_13(%arg0: i32) -> (i32, i32) {
    %c0_i32 = arith.constant 0 : i32
    %c0_i32_0 = arith.constant 0 : i32
    %c0_i32_1 = arith.constant 0 : i32
    return %c0_i32, %c0_i32_0 : i32, i32
  }
  func.func @transform_14(%arg0: i32) -> (i32, i32) {
    %c0_i32 = arith.constant 0 : i32
    %c0_i32_0 = arith.constant 0 : i32
    %c0_i32_1 = arith.constant 0 : i32
    return %c0_i32, %c0_i32_0 : i32, i32
  }
  func.func @transform_15(%arg0: i32) -> (i32, i32) {
    %c0_i32 = arith.constant 0 : i32
    %c0_i32_0 = arith.constant 0 : i32
    %c0_i32_1 = arith.constant 0 : i32
    return %c0_i32, %c0_i32_0 : i32, i32
  }
  func.func @transform_16(%arg0: i32) -> (i32, i32) {
    %c0_i32 = arith.constant 0 : i32
    %c0_i32_0 = arith.constant 0 : i32
    return %arg0, %c0_i32 : i32, i32
  }
  func.func @transform_17(%arg0: i32) -> (i32, i32) {
    %c0_i32 = arith.constant 0 : i32
    %c0_i32_0 = arith.constant 0 : i32
    return %arg0, %c0_i32 : i32, i32
  }
}

</mosaic_0001>

<llo_original>
// kernel: tpu_custom_call.1
$region0: #{tpu_custom_call.1}
  #allocation0 [shape = 'u32[]', space=smem, size = 0x4, offset = 0x4, fixed_abs, tag = 'smem constant byte address 0x4 - core index']
  #allocation1 [shape = 'u32[72,128]{1,0:T(1,128)}', space=vmem, size = 0x9000, scoped, tag = 'internal scratch']
  %s0 = inlined_call_operand.hbm [shape: f32[29,256], index: 0, kind: input, shape index: {}]
  %s1 = inlined_call_operand.vmem [shape: f32[29,10], index: 1, kind: input, shape index: {}]
  %s2 = inlined_call_operand.hbm [shape: f32[29,128], index: 2, kind: input, shape index: {}]
  %s3 = inlined_call_operand.hbm [shape: bf16[256,512], index: 3, kind: input, shape index: {}]
  %s4 = inlined_call_operand.vmem [shape: bf16[10,768], index: 4, kind: input, shape index: {}]
  %s5 = inlined_call_operand.vmem [shape: f32[1,512], index: 5, kind: input, shape index: {}]
  %s6 = inlined_call_operand.hbm [shape: bf16[512,256], index: 6, kind: input, shape index: {}]
  %s7 = inlined_call_operand.hbm [shape: f32[1,256], index: 7, kind: input, shape index: {}]
  %s8 = inlined_call_operand.hbm [shape: bf16[256,256], index: 8, kind: input, shape index: {}]
  %s9 = inlined_call_operand.hbm [shape: f32[1,256], index: 9, kind: input, shape index: {}]
  %s10 = inlined_call_operand.hbm [shape: bf16[128,256], index: 10, kind: input, shape index: {}]
  %s11 = inlined_call_operand.vmem [shape: f32[1,256], index: 11, kind: input, shape index: {}]
  %s12 = inlined_call_operand.hbm [shape: bf16[256,512], index: 12, kind: input, shape index: {}]
  %s13 = inlined_call_operand.vmem [shape: f32[1,512], index: 13, kind: input, shape index: {}]
  %s14 = inlined_call_operand.hbm [shape: bf16[512,256], index: 14, kind: input, shape index: {}]
  %s15 = inlined_call_operand.vmem [shape: f32[1,256], index: 15, kind: input, shape index: {}]
  %s16 = inlined_call_operand.hbm [shape: f32[29,256], index: 16, kind: output, shape index: {0}]
  %s17 = inlined_call_operand.hbm [shape: f32[29,256], index: 17, kind: output, shape index: {1}]
  %18 = xla_tuple %s16, %s17
  %s19 = sld [smem:[#allocation0]]
  $region145: #{tpu_custom_call.1} parent=0
    _
  %s21 = ssub.s32 1, %s19
  %s22 = scalar_select 0, %s21, %s19
  $region1: #{tpu_custom_call.1} parent=0
    #allocation2 [shape = 'u8[32768]{0}', space=vmem, size = 0x8000, scoped, tag = 'input window, operand 0']
    #allocation3 [shape = 's32[2]{0}', space=sflag, size = 0x8, scoped, tag = 'scoped memory for tpu_custom_call.1']
    #allocation4 [shape = 's32[2]{0}', space=sflag, size = 0x8, scoped, tag = 'scoped memory for tpu_custom_call.1']
    #allocation5 [shape = 'u8[16384]{0}', space=vmem, size = 0x4000, scoped, tag = 'input window, operand 2']
    #allocation6 [shape = 's32[2]{0}', space=sflag, size = 0x8, scoped, tag = 'scoped memory for tpu_custom_call.1']
    #allocation7 [shape = 'u8[262144]{0}', space=vmem, size = 0x40000, scoped, tag = 'input window, operand 3, single buffered']
    #allocation8 [shape = 'u8[262144]{0}', space=vmem, size = 0x40000, scoped, tag = 'input window, operand 6, single buffered']
    #allocation9 [shape = 's32[1]{0}', space=sflag, size = 0x4, scoped, tag = 'scoped memory for tpu_custom_call.1']
    #allocation10 [shape = 'u8[1024]{0}', space=vmem, size = 0x400, scoped, tag = 'input window, operand 7, single buffered']
    #allocation11 [shape = 'u8[131072]{0}', space=vmem, size = 0x20000, scoped, tag = 'input window, operand 8, single buffered']
    #allocation12 [shape = 's32[1]{0}', space=sflag, size = 0x4, scoped, tag = 'scoped memory for tpu_custom_call.1']
    #allocation13 [shape = 'u8[1024]{0}', space=vmem, size = 0x400, scoped, tag = 'input window, operand 9, single buffered']
    #allocation14 [shape = 'u8[65536]{0}', space=vmem, size = 0x10000, scoped, tag = 'input window, operand 10, single buffered']
    #allocation15 [shape = 's32[1]{0}', space=sflag, size = 0x4, scoped, tag = 'scoped memory for tpu_custom_call.1']
    #allocation16 [shape = 'u8[262144]{0}', space=vmem, size = 0x40000, scoped, tag = 'input window, operand 12, single buffered']
    #allocation17 [shape = 'u8[262144]{0}', space=vmem, size = 0x40000, scoped, tag = 'input window, operand 14, single buffered']
    #allocation18 [shape = 's32[1]{0}', space=sflag, size = 0x4, scoped, tag = 'scoped memory for tpu_custom_call.1']
    #allocation19 [shape = 'u8[32768]{0}', space=vmem, size = 0x8000, scoped, tag = 'output window, operand 0']
    #allocation20 [shape = 'u8[32768]{0}', space=vmem, size = 0x8000, scoped, tag = 'output window, operand 1']
    #allocation21 [shape = 's32[2]{0}', space=sflag, size = 0x8, scoped, tag = 'scoped memory for tpu_custom_call.1']
    %23 = vsyncpa [#allocation3], 0
    %s24 = scalar_lea.sflag [#allocation3], 1
    %25 = vsyncpa %s24, 0
    %26 = vsyncpa [#allocation6], 0
    %s27 = scalar_lea.sflag [#allocation6], 1
    %28 = vsyncpa %s27, 0
    %29 = vsyncpa [#allocation9], 0
    %30 = vsyncpa [#allocation12], 0
    %31 = vsyncpa [#allocation15], 0
    %32 = vsyncpa [#allocation18], 0
    %33 = vsyncpa [#allocation4], 0
    %s34 = scalar_lea.sflag [#allocation4], 1
    %35 = vsyncpa %s34, 0
    %36 = vsyncpa [#allocation21], 0
    %s37 = scalar_lea.sflag [#allocation21], 1
    %38 = vsyncpa %s37, 0
    loop: start=0, step=1, limit=4
    $region2: #{tpu_custom_call.1} parent=1 // loop_pre_header
      _
    $region3: #{tpu_custom_call.1} parent=1 // loop_header
      %s40 = sphi 0, %s44
      %p41 = scmp.ge.s32.totalorder %s40, 4
      %s50 = sphi 0, %s52
      %s53 = sphi 0, %s50
      %s54 = sphi 0, %s53
      %s70 = sphi 0, %s54
      %s76 = sphi 0, %s78
      %s79 = sphi 0, %s76
      %s80 = sphi 0, %s79
      %s96 = sphi 0, %s80
      %s102 = sphi 0, %s104
      %s105 = sphi 0, %s102
      %s106 = sphi 0, %s105
      %s122 = sphi 0, %s106
      %s126 = sphi 0, %s126
      %s128 = sphi 0, %s126
      %s129 = sphi 0, %s128
      %s143 = sphi 0, %s129
      %s147 = sphi 0, %s147
      %s149 = sphi 0, %s147
      %s150 = sphi 0, %s149
      %s164 = sphi 0, %s150
      %s168 = sphi 0, %s168
      %s170 = sphi 0, %s168
      %s171 = sphi 0, %s170
      %s185 = sphi 0, %s171
      %s189 = sphi 0, %s189
      %s191 = sphi 0, %s189
      %s192 = sphi 0, %s191
      %s206 = sphi 0, %s192
      %s210 = sphi 0, %s210
      %s212 = sphi 0, %s210
      %s213 = sphi 0, %s212
      %s227 = sphi 0, %s213
      %s231 = sphi 0, %s231
      %s233 = sphi 0, %s231
      %s234 = sphi 0, %s233
      %s248 = sphi 0, %s234
      %s252 = sphi 0, %s252
      %s254 = sphi 0, %s252
      %s255 = sphi 0, %s254
      %s269 = sphi 0, %s255
      %s273 = sphi 0, %s273
      %s275 = sphi 0, %s273
      %s276 = sphi 0, %s275
      %s290 = sphi 0, %s276
      %s294 = sphi 0, %s294
      %s296 = sphi 0, %s294
      %s297 = sphi 0, %s296
      %s311 = sphi 0, %s297
      %s315 = sphi 0, %s315
      %s317 = sphi 0, %s315
      %s318 = sphi 0, %s317
      %s332 = sphi 0, %s318
      %s336 = sphi 0, %s336
      %s338 = sphi 0, %s336
      %s339 = sphi 0, %s338
      %s353 = sphi 0, %s339
      %s357 = sphi 0, %s357
      %s359 = sphi 0, %s357
      %s360 = sphi 0, %s359
      %s374 = sphi 0, %s360
      %s378 = sphi 0, %s378
      %s380 = sphi 0, %s378
      %s381 = sphi 0, %s380
      %s395 = sphi 0, %s381
      %s401 = sphi 0, %s403
      %s404 = sphi 0, %s401
      %s405 = sphi 0, %s404
      %s421 = sphi 0, %s405
      %s427 = sphi 0, %s429
      %s430 = sphi 0, %s427
      %s431 = sphi 0, %s430
      %s447 = sphi 0, %s431
    $region4: #{tpu_custom_call.1} parent=1 // loop_header_branch
      %43 = sbr.rel (%p41) target = $region8
    $region5: #{tpu_custom_call.1} parent=1 // loop_body
      %s45 = ssub.s32 %s40, 1
      %s46 = ssub.s32 %s40, 2
      %s47 = sadd.s32 %s40, 1
      %s48 = ssub.s32 %s40, %s47
      %p49 = scmp.eq.s32.totalorder %s48, 0
      %s51 = sadd.s32 %s50, 1
      %s52 = scalar_select %p49, %s50, %s51
      %p55 = pneg %p49
      %p56 = scmp.eq.s32.totalorder %s40, 1
      %p57 = por %p55, %p56
      %p58 = scmp.ne.s32.totalorder %s50, %s53
      %p59 = scmp.eq.s32.totalorder %s40, 0
      %p60 = por %p58, %p59
      %p61 = scmp.ne.s32.totalorder %s50, %s53
      %p62 = scmp.eq.s32.totalorder %s45, 1
      %p63 = por %p61, %p62
      %p64 = scmp.ne.s32.totalorder %s53, %s54
      %p65 = scmp.eq.s32.totalorder %s45, 0
      %p66 = por %p64, %p65
      %p67 = scmp.ne.s32.totalorder %s53, %s54
      %p68 = scmp.eq.s32.totalorder %s46, 1
      %p69 = por %p67, %p68
      %p71 = scmp.ne.s32.totalorder %s54, %s70
      %p72 = scmp.eq.s32.totalorder %s46, 0
      %p73 = por %p71, %p72
      %s74 = ssub.s32 %s40, %s47
      %p75 = scmp.eq.s32.totalorder %s74, 0
      %s77 = sadd.s32 %s76, 1
      %s78 = scalar_select %p75, %s76, %s77
      %p81 = pneg %p75
      %p82 = scmp.eq.s32.totalorder %s40, 1
      %p83 = por %p81, %p82
      %p84 = scmp.ne.s32.totalorder %s76, %s79
      %p85 = scmp.eq.s32.totalorder %s40, 0
      %p86 = por %p84, %p85
      %p87 = scmp.ne.s32.totalorder %s76, %s79
      %p88 = scmp.eq.s32.totalorder %s45, 1
      %p89 = por %p87, %p88
      %p90 = scmp.ne.s32.totalorder %s79, %s80
      %p91 = scmp.eq.s32.totalorder %s45, 0
      %p92 = por %p90, %p91
      %p93 = scmp.ne.s32.totalorder %s79, %s80
      %p94 = scmp.eq.s32.totalorder %s46, 1
      %p95 = por %p93, %p94
      %p97 = scmp.ne.s32.totalorder %s80, %s96
      %p98 = scmp.eq.s32.totalorder %s46, 0
      %p99 = por %p97, %p98
      %s100 = ssub.s32 %s40, %s47
      %p101 = scmp.eq.s32.totalorder %s100, 0
      %s103 = sadd.s32 %s102, 1
      %s104 = scalar_select %p101, %s102, %s103
      %p107 = pneg %p101
      %p108 = scmp.eq.s32.totalorder %s40, 1
      %p109 = por %p107, %p108
      %p110 = scmp.ne.s32.totalorder %s102, %s105
      %p111 = scmp.eq.s32.totalorder %s40, 0
      %p112 = por %p110, %p111
      %p113 = scmp.ne.s32.totalorder %s102, %s105
      %p114 = scmp.eq.s32.totalorder %s45, 1
      %p115 = por %p113, %p114
      %p116 = scmp.ne.s32.totalorder %s105, %s106
      %p117 = scmp.eq.s32.totalorder %s45, 0
      %p118 = por %p116, %p117
      %p119 = scmp.ne.s32.totalorder %s105, %s106
      %p120 = scmp.eq.s32.totalorder %s46, 1
      %p121 = por %p119, %p120
      %p123 = scmp.ne.s32.totalorder %s106, %s122
      %p124 = scmp.eq.s32.totalorder %s46, 0
      %p125 = por %p123, %p124
      %s127 = sadd.s32 %s126, 1
      %p130 = scmp.eq.s32.totalorder %s40, 1
      %p131 = scmp.ne.s32.totalorder %s126, %s128
      %p132 = scmp.eq.s32.totalorder %s40, 0
      %p133 = por %p131, %p132
      %p134 = scmp.ne.s32.totalorder %s126, %s128
      %p135 = scmp.eq.s32.totalorder %s45, 1
      %p136 = por %p134, %p135
      %p137 = scmp.ne.s32.totalorder %s128, %s129
      %p138 = scmp.eq.s32.totalorder %s45, 0
      %p139 = por %p137, %p138
      %p140 = scmp.ne.s32.totalorder %s128, %s129
      %p141 = scmp.eq.s32.totalorder %s46, 1
      %p142 = por %p140, %p141
      %p144 = scmp.ne.s32.totalorder %s129, %s143
      %p145 = scmp.eq.s32.totalorder %s46, 0
      %p146 = por %p144, %p145
      %s148 = sadd.s32 %s147, 1
      %p151 = scmp.eq.s32.totalorder %s40, 1
      %p152 = scmp.ne.s32.totalorder %s147, %s149
      %p153 = scmp.eq.s32.totalorder %s40, 0
      %p154 = por %p152, %p153
      %p155 = scmp.ne.s32.totalorder %s147, %s149
      %p156 = scmp.eq.s32.totalorder %s45, 1
      %p157 = por %p155, %p156
      %p158 = scmp.ne.s32.totalorder %s149, %s150
      %p159 = scmp.eq.s32.totalorder %s45, 0
      %p160 = por %p158, %p159
      %p161 = scmp.ne.s32.totalorder %s149, %s150
      %p162 = scmp.eq.s32.totalorder %s46, 1
      %p163 = por %p161, %p162
      %p165 = scmp.ne.s32.totalorder %s150, %s164
      %p166 = scmp.eq.s32.totalorder %s46, 0
      %p167 = por %p165, %p166
      %s169 = sadd.s32 %s168, 1
      %p172 = scmp.eq.s32.totalorder %s40, 1
      %p173 = scmp.ne.s32.totalorder %s168, %s170
      %p174 = scmp.eq.s32.totalorder %s40, 0
      %p175 = por %p173, %p174
      %p176 = scmp.ne.s32.totalorder %s168, %s170
      %p177 = scmp.eq.s32.totalorder %s45, 1
      %p178 = por %p176, %p177
      %p179 = scmp.ne.s32.totalorder %s170, %s171
      %p180 = scmp.eq.s32.totalorder %s45, 0
      %p181 = por %p179, %p180
      %p182 = scmp.ne.s32.totalorder %s170, %s171
      %p183 = scmp.eq.s32.totalorder %s46, 1
      %p184 = por %p182, %p183
      %p186 = scmp.ne.s32.totalorder %s171, %s185
      %p187 = scmp.eq.s32.totalorder %s46, 0
      %p188 = por %p186, %p187
      %s190 = sadd.s32 %s189, 1
      %p193 = scmp.eq.s32.totalorder %s40, 1
      %p194 = scmp.ne.s32.totalorder %s189, %s191
      %p195 = scmp.eq.s32.totalorder %s40, 0
      %p196 = por %p194, %p195
      %p197 = scmp.ne.s32.totalorder %s189, %s191
      %p198 = scmp.eq.s32.totalorder %s45, 1
      %p199 = por %p197, %p198
      %p200 = scmp.ne.s32.totalorder %s191, %s192
      %p201 = scmp.eq.s32.totalorder %s45, 0
      %p202 = por %p200, %p201
      %p203 = scmp.ne.s32.totalorder %s191, %s192
      %p204 = scmp.eq.s32.totalorder %s46, 1
      %p205 = por %p203, %p204
      %p207 = scmp.ne.s32.totalorder %s192, %s206
      %p208 = scmp.eq.s32.totalorder %s46, 0
      %p209 = por %p207, %p208
      %s211 = sadd.s32 %s210, 1
      %p214 = scmp.eq.s32.totalorder %s40, 1
      %p215 = scmp.ne.s32.totalorder %s210, %s212
      %p216 = scmp.eq.s32.totalorder %s40, 0
      %p217 = por %p215, %p216
      %p218 = scmp.ne.s32.totalorder %s210, %s212
      %p219 = scmp.eq.s32.totalorder %s45, 1
      %p220 = por %p218, %p219
      %p221 = scmp.ne.s32.totalorder %s212, %s213
      %p222 = scmp.eq.s32.totalorder %s45, 0
      %p223 = por %p221, %p222
      %p224 = scmp.ne.s32.totalorder %s212, %s213
      %p225 = scmp.eq.s32.totalorder %s46, 1
      %p226 = por %p224, %p225
      %p228 = scmp.ne.s32.totalorder %s213, %s227
      %p229 = scmp.eq.s32.totalorder %s46, 0
      %p230 = por %p228, %p229
      %s232 = sadd.s32 %s231, 1
      %p235 = scmp.eq.s32.totalorder %s40, 1
      %p236 = scmp.ne.s32.totalorder %s231, %s233
      %p237 = scmp.eq.s32.totalorder %s40, 0
      %p238 = por %p236, %p237
      %p239 = scmp.ne.s32.totalorder %s231, %s233
      %p240 = scmp.eq.s32.totalorder %s45, 1
      %p241 = por %p239, %p240
      %p242 = scmp.ne.s32.totalorder %s233, %s234
      %p243 = scmp.eq.s32.totalorder %s45, 0
      %p244 = por %p242, %p243
      %p245 = scmp.ne.s32.totalorder %s233, %s234
      %p246 = scmp.eq.s32.totalorder %s46, 1
      %p247 = por %p245, %p246
      %p249 = scmp.ne.s32.totalorder %s234, %s248
      %p250 = scmp.eq.s32.totalorder %s46, 0
      %p251 = por %p249, %p250
      %s253 = sadd.s32 %s252, 1
      %p256 = scmp.eq.s32.totalorder %s40, 1
      %p257 = scmp.ne.s32.totalorder %s252, %s254
      %p258 = scmp.eq.s32.totalorder %s40, 0
      %p259 = por %p257, %p258
      %p260 = scmp.ne.s32.totalorder %s252, %s254
      %p261 = scmp.eq.s32.totalorder %s45, 1
      %p262 = por %p260, %p261
      %p263 = scmp.ne.s32.totalorder %s254, %s255
      %p264 = scmp.eq.s32.totalorder %s45, 0
      %p265 = por %p263, %p264
      %p266 = scmp.ne.s32.totalorder %s254, %s255
      %p267 = scmp.eq.s32.totalorder %s46, 1
      %p268 = por %p266, %p267
      %p270 = scmp.ne.s32.totalorder %s255, %s269
      %p271 = scmp.eq.s32.totalorder %s46, 0
      %p272 = por %p270, %p271
      %s274 = sadd.s32 %s273, 1
      %p277 = scmp.eq.s32.totalorder %s40, 1
      %p278 = scmp.ne.s32.totalorder %s273, %s275
      %p279 = scmp.eq.s32.totalorder %s40, 0
      %p280 = por %p278, %p279
      %p281 = scmp.ne.s32.totalorder %s273, %s275
      %p282 = scmp.eq.s32.totalorder %s45, 1
      %p283 = por %p281, %p282
      %p284 = scmp.ne.s32.totalorder %s275, %s276
      %p285 = scmp.eq.s32.totalorder %s45, 0
      %p286 = por %p284, %p285
      %p287 = scmp.ne.s32.totalorder %s275, %s276
      %p288 = scmp.eq.s32.totalorder %s46, 1
      %p289 = por %p287, %p288
      %p291 = scmp.ne.s32.totalorder %s276, %s290
      %p292 = scmp.eq.s32.totalorder %s46, 0
      %p293 = por %p291, %p292
      %s295 = sadd.s32 %s294, 1
      %p298 = scmp.eq.s32.totalorder %s40, 1
      %p299 = scmp.ne.s32.totalorder %s294, %s296
      %p300 = scmp.eq.s32.totalorder %s40, 0
      %p301 = por %p299, %p300
      %p302 = scmp.ne.s32.totalorder %s294, %s296
      %p303 = scmp.eq.s32.totalorder %s45, 1
      %p304 = por %p302, %p303
      %p305 = scmp.ne.s32.totalorder %s296, %s297
      %p306 = scmp.eq.s32.totalorder %s45, 0
      %p307 = por %p305, %p306
      %p308 = scmp.ne.s32.totalorder %s296, %s297
      %p309 = scmp.eq.s32.totalorder %s46, 1
      %p310 = por %p308, %p309
      %p312 = scmp.ne.s32.totalorder %s297, %s311
      %p313 = scmp.eq.s32.totalorder %s46, 0
      %p314 = por %p312, %p313
      %s316 = sadd.s32 %s315, 1
      %p319 = scmp.eq.s32.totalorder %s40, 1
      %p320 = scmp.ne.s32.totalorder %s315, %s317
      %p321 = scmp.eq.s32.totalorder %s40, 0
      %p322 = por %p320, %p321
      %p323 = scmp.ne.s32.totalorder %s315, %s317
      %p324 = scmp.eq.s32.totalorder %s45, 1
      %p325 = por %p323, %p324
      %p326 = scmp.ne.s32.totalorder %s317, %s318
      %p327 = scmp.eq.s32.totalorder %s45, 0
      %p328 = por %p326, %p327
      %p329 = scmp.ne.s32.totalorder %s317, %s318
      %p330 = scmp.eq.s32.totalorder %s46, 1
      %p331 = por %p329, %p330
      %p333 = scmp.ne.s32.totalorder %s318, %s332
      %p334 = scmp.eq.s32.totalorder %s46, 0
      %p335 = por %p333, %p334
      %s337 = sadd.s32 %s336, 1
      %p340 = scmp.eq.s32.totalorder %s40, 1
      %p341 = scmp.ne.s32.totalorder %s336, %s338
      %p342 = scmp.eq.s32.totalorder %s40, 0
      %p343 = por %p341, %p342
      %p344 = scmp.ne.s32.totalorder %s336, %s338
      %p345 = scmp.eq.s32.totalorder %s45, 1
      %p346 = por %p344, %p345
      %p347 = scmp.ne.s32.totalorder %s338, %s339
      %p348 = scmp.eq.s32.totalorder %s45, 0
      %p349 = por %p347, %p348
      %p350 = scmp.ne.s32.totalorder %s338, %s339
      %p351 = scmp.eq.s32.totalorder %s46, 1
      %p352 = por %p350, %p351
      %p354 = scmp.ne.s32.totalorder %s339, %s353
      %p355 = scmp.eq.s32.totalorder %s46, 0
      %p356 = por %p354, %p355
      %s358 = sadd.s32 %s357, 1
      %p361 = scmp.eq.s32.totalorder %s40, 1
      %p362 = scmp.ne.s32.totalorder %s357, %s359
      %p363 = scmp.eq.s32.totalorder %s40, 0
      %p364 = por %p362, %p363
      %p365 = scmp.ne.s32.totalorder %s357, %s359
      %p366 = scmp.eq.s32.totalorder %s45, 1
      %p367 = por %p365, %p366
      %p368 = scmp.ne.s32.totalorder %s359, %s360
      %p369 = scmp.eq.s32.totalorder %s45, 0
      %p370 = por %p368, %p369
      %p371 = scmp.ne.s32.totalorder %s359, %s360
      %p372 = scmp.eq.s32.totalorder %s46, 1
      %p373 = por %p371, %p372
      %p375 = scmp.ne.s32.totalorder %s360, %s374
      %p376 = scmp.eq.s32.totalorder %s46, 0
      %p377 = por %p375, %p376
      %s379 = sadd.s32 %s378, 1
      %p382 = scmp.eq.s32.totalorder %s40, 1
      %p383 = scmp.ne.s32.totalorder %s378, %s380
      %p384 = scmp.eq.s32.totalorder %s40, 0
      %p385 = por %p383, %p384
      %p386 = scmp.ne.s32.totalorder %s378, %s380
      %p387 = scmp.eq.s32.totalorder %s45, 1
      %p388 = por %p386, %p387
      %p389 = scmp.ne.s32.totalorder %s380, %s381
      %p390 = scmp.eq.s32.totalorder %s45, 0
      %p391 = por %p389, %p390
      %p392 = scmp.ne.s32.totalorder %s380, %s381
      %p393 = scmp.eq.s32.totalorder %s46, 1
      %p394 = por %p392, %p393
      %p396 = scmp.ne.s32.totalorder %s381, %s395
      %p397 = scmp.eq.s32.totalorder %s46, 0
      %p398 = por %p396, %p397
      %s399 = ssub.s32 %s40, %s47
      %p400 = scmp.eq.s32.totalorder %s399, 0
      %s402 = sadd.s32 %s401, 1
      %s403 = scalar_select %p400, %s401, %s402
      %p406 = pneg %p400
      %p407 = scmp.eq.s32.totalorder %s40, 1
      %p408 = por %p406, %p407
      %p409 = scmp.ne.s32.totalorder %s401, %s404
      %p410 = scmp.eq.s32.totalorder %s40, 0
      %p411 = por %p409, %p410
      %p412 = scmp.ne.s32.totalorder %s401, %s404
      %p413 = scmp.eq.s32.totalorder %s45, 1
      %p414 = por %p412, %p413
      %p415 = scmp.ne.s32.totalorder %s404, %s405
      %p416 = scmp.eq.s32.totalorder %s45, 0
      %p417 = por %p415, %p416
      %p418 = scmp.ne.s32.totalorder %s404, %s405
      %p419 = scmp.eq.s32.totalorder %s46, 1
      %p420 = por %p418, %p419
      %p422 = scmp.ne.s32.totalorder %s405, %s421
      %p423 = scmp.eq.s32.totalorder %s46, 0
      %p424 = por %p422, %p423
      %s425 = ssub.s32 %s40, %s47
      %p426 = scmp.eq.s32.totalorder %s425, 0
      %s428 = sadd.s32 %s427, 1
      %s429 = scalar_select %p426, %s427, %s428
      %p432 = pneg %p426
      %p433 = scmp.eq.s32.totalorder %s40, 1
      %p434 = por %p432, %p433
      %p435 = scmp.ne.s32.totalorder %s427, %s430
      %p436 = scmp.eq.s32.totalorder %s40, 0
      %p437 = por %p435, %p436
      %p438 = scmp.ne.s32.totalorder %s427, %s430
      %p439 = scmp.eq.s32.totalorder %s45, 1
      %p440 = por %p438, %p439
      %p441 = scmp.ne.s32.totalorder %s430, %s431
      %p442 = scmp.eq.s32.totalorder %s45, 0
      %p443 = por %p441, %p442
      %p444 = scmp.ne.s32.totalorder %s430, %s431
      %p445 = scmp.eq.s32.totalorder %s46, 1
      %p446 = por %p444, %p445
      %p448 = scmp.ne.s32.totalorder %s431, %s447
      %p449 = scmp.eq.s32.totalorder %s46, 0
      %p450 = por %p448, %p449
      %p451 = scmp.le.s32.totalorder 1, %s40
      %p452 = scmp.lt.s32.totalorder %s40, 3
      %p453 = pnand %p451, %p452
      %p454 = pneg %p453
      // Predicated region
      $region9: #{tpu_custom_call.1} parent=5 // pred_check
        _
      $region10: #{tpu_custom_call.1} parent=5 // pred_check_branch
        %456 = sbr.rel (%p453) target = $region12
      $region11: #{tpu_custom_call.1} parent=5 // pred_region
        %s457 = ssub.s32 %s40, 1
        // Predicated region
        $region13: #{tpu_custom_call.1} parent=11 // pred_check
          %p458 = pneg %p139
        $region14: #{tpu_custom_call.1} parent=11 // pred_check_branch
          %460 = sbr.rel (%p458) target = $region16
        $region15: #{tpu_custom_call.1} parent=11 // pred_region
          %462 = vsyncadd [#allocation6], 0
          %s463 = sshll.u32 %s3, 4
          %s464 = int_to_ptr.hbm [resolvable:$true] %s463
          %s465 = sshll.u32 [#allocation7], 4
          %s466 = int_to_ptr.vmem [resolvable:$true] %s465
          %471 = dma.hbm_to_vmem [thread:$0]  %s464, 8192, %s466, [#allocation6], 256, 256, 16
        $region16: #{tpu_custom_call.1} parent=11 // pred_fallthru
          _
        // Predicated region
        $region17: #{tpu_custom_call.1} parent=11 // pred_check
          %p472 = pneg %p160
        $region18: #{tpu_custom_call.1} parent=11 // pred_check_branch
          %474 = sbr.rel (%p472) target = $region20
        $region19: #{tpu_custom_call.1} parent=11 // pred_region
          _
        $region20: #{tpu_custom_call.1} parent=11 // pred_fallthru
          _
        // Predicated region
        $region21: #{tpu_custom_call.1} parent=11 // pred_check
          %p475 = pneg %p181
        $region22: #{tpu_custom_call.1} parent=11 // pred_check_branch
          %477 = sbr.rel (%p475) target = $region24
        $region23: #{tpu_custom_call.1} parent=11 // pred_region
          _
        $region24: #{tpu_custom_call.1} parent=11 // pred_fallthru
          _
        // Predicated region
        $region25: #{tpu_custom_call.1} parent=11 // pred_check
          %p478 = pneg %p202
        $region26: #{tpu_custom_call.1} parent=11 // pred_check_branch
          %480 = sbr.rel (%p478) target = $region28
        $region27: #{tpu_custom_call.1} parent=11 // pred_region
          %482 = vsyncadd [#allocation9], 0
          %s483 = sshll.u32 %s6, 4
          %s484 = int_to_ptr.hbm [resolvable:$true] %s483
          %s485 = sshll.u32 [#allocation8], 4
          %s486 = int_to_ptr.vmem [resolvable:$true] %s485
          %491 = dma.hbm_to_vmem [thread:$0]  %s484, 8192, %s486, [#allocation9], 128, 128, 8
        $region28: #{tpu_custom_call.1} parent=11 // pred_fallthru
          _
        // Predicated region
        $region29: #{tpu_custom_call.1} parent=11 // pred_check
          %p492 = pneg %p223
        $region30: #{tpu_custom_call.1} parent=11 // pred_check_branch
          %494 = sbr.rel (%p492) target = $region32
        $region31: #{tpu_custom_call.1} parent=11 // pred_region
          %496 = vsyncadd [#allocation9], 0
          %s498 = sshll.u32 %s7, 4
          %s499 = int_to_ptr.hbm [resolvable:$true] %s498
          %s500 = sshll.u32 [#allocation10], 4
          %s501 = int_to_ptr.vmem [resolvable:$true] %s500
          %503 = dma.hbm_to_vmem [thread:$0]  %s499, 32, %s501, [#allocation9]
        $region32: #{tpu_custom_call.1} parent=11 // pred_fallthru
          _
        // Predicated region
        $region33: #{tpu_custom_call.1} parent=11 // pred_check
          %p504 = pneg %p244
        $region34: #{tpu_custom_call.1} parent=11 // pred_check_branch
          %506 = sbr.rel (%p504) target = $region36
        $region35: #{tpu_custom_call.1} parent=11 // pred_region
          %508 = vsyncadd [#allocation12], 0
          %s509 = sshll.u32 %s8, 4
          %s510 = int_to_ptr.hbm [resolvable:$true] %s509
          %s511 = sshll.u32 [#allocation11], 4
          %s512 = int_to_ptr.vmem [resolvable:$true] %s511
          %517 = dma.hbm_to_vmem [thread:$0]  %s510, 4096, %s512, [#allocation12], 128, 128, 8
        $region36: #{tpu_custom_call.1} parent=11 // pred_fallthru
          _
        // Predicated region
        $region37: #{tpu_custom_call.1} parent=11 // pred_check
          %p518 = pneg %p265
        $region38: #{tpu_custom_call.1} parent=11 // pred_check_branch
          %520 = sbr.rel (%p518) target = $region40
        $region39: #{tpu_custom_call.1} parent=11 // pred_region
          %522 = vsyncadd [#allocation12], 0
          %s524 = sshll.u32 %s9, 4
          %s525 = int_to_ptr.hbm [resolvable:$true] %s524
          %s526 = sshll.u32 [#allocation13], 4
          %s527 = int_to_ptr.vmem [resolvable:$true] %s526
          %529 = dma.hbm_to_vmem [thread:$0]  %s525, 32, %s527, [#allocation12]
        $region40: #{tpu_custom_call.1} parent=11 // pred_fallthru
          _
        // Predicated region
        $region41: #{tpu_custom_call.1} parent=11 // pred_check
          %p530 = pneg %p286
        $region42: #{tpu_custom_call.1} parent=11 // pred_check_branch
          %532 = sbr.rel (%p530) target = $region44
        $region43: #{tpu_custom_call.1} parent=11 // pred_region
          %534 = vsyncadd [#allocation15], 0
          %s535 = sshll.u32 %s10, 4
          %s536 = int_to_ptr.hbm [resolvable:$true] %s535
          %s537 = sshll.u32 [#allocation14], 4
          %s538 = int_to_ptr.vmem [resolvable:$true] %s537
          %543 = dma.hbm_to_vmem [thread:$0]  %s536, 2048, %s538, [#allocation15], 128, 128, 8
        $region44: #{tpu_custom_call.1} parent=11 // pred_fallthru
          _
        // Predicated region
        $region45: #{tpu_custom_call.1} parent=11 // pred_check
          %p544 = pneg %p307
        $region46: #{tpu_custom_call.1} parent=11 // pred_check_branch
          %546 = sbr.rel (%p544) target = $region48
        $region47: #{tpu_custom_call.1} parent=11 // pred_region
          _
        $region48: #{tpu_custom_call.1} parent=11 // pred_fallthru
          _
        // Predicated region
        $region49: #{tpu_custom_call.1} parent=11 // pred_check
          %p547 = pneg %p328
        $region50: #{tpu_custom_call.1} parent=11 // pred_check_branch
          %549 = sbr.rel (%p547) target = $region52
        $region51: #{tpu_custom_call.1} parent=11 // pred_region
          %551 = vsyncadd [#allocation15], 0
          %s552 = sshll.u32 %s12, 4
          %s553 = int_to_ptr.hbm [resolvable:$true] %s552
          %s554 = sshll.u32 [#allocation16], 4
          %s555 = int_to_ptr.vmem [resolvable:$true] %s554
          %560 = dma.hbm_to_vmem [thread:$0]  %s553, 8192, %s555, [#allocation15], 256, 256, 16
        $region52: #{tpu_custom_call.1} parent=11 // pred_fallthru
          _
        // Predicated region
        $region53: #{tpu_custom_call.1} parent=11 // pred_check
          %p561 = pneg %p349
        $region54: #{tpu_custom_call.1} parent=11 // pred_check_branch
          %563 = sbr.rel (%p561) target = $region56
        $region55: #{tpu_custom_call.1} parent=11 // pred_region
          _
        $region56: #{tpu_custom_call.1} parent=11 // pred_fallthru
          _
        // Predicated region
        $region57: #{tpu_custom_call.1} parent=11 // pred_check
          %p564 = pneg %p370
        $region58: #{tpu_custom_call.1} parent=11 // pred_check_branch
          %566 = sbr.rel (%p564) target = $region60
        $region59: #{tpu_custom_call.1} parent=11 // pred_region
          %568 = vsyncadd [#allocation18], 0
          %s569 = sshll.u32 %s14, 4
          %s570 = int_to_ptr.hbm [resolvable:$true] %s569
          %s571 = sshll.u32 [#allocation17], 4
          %s572 = int_to_ptr.vmem [resolvable:$true] %s571
          %577 = dma.hbm_to_vmem [thread:$0]  %s570, 8192, %s572, [#allocation18], 128, 128, 8
        $region60: #{tpu_custom_call.1} parent=11 // pred_fallthru
          _
        // Predicated region
        $region61: #{tpu_custom_call.1} parent=11 // pred_check
          %p578 = pneg %p391
        $region62: #{tpu_custom_call.1} parent=11 // pred_check_branch
          %580 = sbr.rel (%p578) target = $region64
        $region63: #{tpu_custom_call.1} parent=11 // pred_region
          _
        $region64: #{tpu_custom_call.1} parent=11 // pred_fallthru
          _
      $region12: #{tpu_custom_call.1} parent=5 // pred_fallthru
        _
      %p581 = scmp.lt.s32.totalorder %s40, 2
      // Predicated region
      $region65: #{tpu_custom_call.1} parent=5 // pred_check
        %p582 = pneg %p581
      $region66: #{tpu_custom_call.1} parent=5 // pred_check_branch
        %584 = sbr.rel (%p582) target = $region68
      $region67: #{tpu_custom_call.1} parent=5 // pred_region
        // Predicated region
        $region69: #{tpu_custom_call.1} parent=67 // pred_check
          %p585 = pneg %p60
        $region70: #{tpu_custom_call.1} parent=67 // pred_check_branch
          %587 = sbr.rel (%p585) target = $region72
        $region71: #{tpu_custom_call.1} parent=67 // pred_region
          %s588 = sand.u32 %s50, 1
          %s589 = scalar_lea.sflag [#allocation3], %s588
          %s590 = sand.u32 %s50, 1
          %s591 = smul.addr %s590, 32
          %s592 = scalar_lea.vmem [#allocation2], %s591
          %s593 = smul.u32 2, %s40
          %595 = vsyncadd %s589, 0
          %s596 = smul.addr %s593, 2
          %s597 = smul.addr %s596, 8
          %s598 = scalar_lea.hbm %s0, %s597
          %s599 = sshll.u32 %s598, 4
          %s600 = int_to_ptr.hbm [resolvable:$true] %s599
          %s601 = sshll.u32 %s592, 4
          %s602 = int_to_ptr.vmem [resolvable:$true] %s601
          %607 = dma.hbm_to_vmem [thread:$0]  %s600, 512, %s602, %s589, 256, 256, 16
        $region72: #{tpu_custom_call.1} parent=67 // pred_fallthru
          _
        // Predicated region
        $region73: #{tpu_custom_call.1} parent=67 // pred_check
          %p608 = pneg %p86
        $region74: #{tpu_custom_call.1} parent=67 // pred_check_branch
          %610 = sbr.rel (%p608) target = $region76
        $region75: #{tpu_custom_call.1} parent=67 // pred_region
          %s611 = smul.u32 2, %s40
          %p612 = scmp.lt.s32.totalorder %s611, 3
          %s613 = scalar_select %p612, %s611, 3
          %s614 = smul.addr %s613, 8
          %s615 = scalar_lea.vmem %s1, %s614
          %s616 = smul.u32 2, %s40
        $region76: #{tpu_custom_call.1} parent=67 // pred_fallthru
          _
        // Predicated region
        $region77: #{tpu_custom_call.1} parent=67 // pred_check
          %p617 = pneg %p112
        $region78: #{tpu_custom_call.1} parent=67 // pred_check_branch
          %619 = sbr.rel (%p617) target = $region80
        $region79: #{tpu_custom_call.1} parent=67 // pred_region
          %s620 = sand.u32 %s40, 1
          %s621 = scalar_lea.sflag [#allocation6], %s620
          %s622 = sand.u32 %s102, 1
          %s623 = smul.addr %s622, 16
          %s624 = scalar_lea.vmem [#allocation5], %s623
          %s625 = smul.u32 2, %s40
          %627 = vsyncadd %s621, 0
          %s628 = smul.addr %s625, 8
          %s629 = scalar_lea.hbm %s2, %s628
          %s630 = sshll.u32 %s629, 4
          %s631 = int_to_ptr.hbm [resolvable:$true] %s630
          %s632 = sshll.u32 %s624, 4
          %s633 = int_to_ptr.vmem [resolvable:$true] %s632
          %638 = dma.hbm_to_vmem [thread:$0]  %s631, 256, %s633, %s621, 128, 128, 8
        $region80: #{tpu_custom_call.1} parent=67 // pred_fallthru
          _
      $region68: #{tpu_custom_call.1} parent=5 // pred_fallthru
        _
      %p639 = scmp.le.s32.totalorder 1, %s40
      %p640 = scmp.lt.s32.totalorder %s40, 3
      %p641 = pnand %p639, %p640
      %p642 = pneg %p641
      // Predicated region
      $region81: #{tpu_custom_call.1} parent=5 // pred_check
        _
      $region82: #{tpu_custom_call.1} parent=5 // pred_check_branch
        %644 = sbr.rel (%p641) target = $region84
      $region83: #{tpu_custom_call.1} parent=5 // pred_region
        %s645 = ssub.s32 %s40, 1
        %s646 = sand.u32 %s53, 1
        %s647 = scalar_lea.sflag [#allocation3], %s646
        %s648 = sand.u32 %s53, 1
        %s649 = smul.addr %s648, 32
        %s650 = scalar_lea.vmem [#allocation2], %s649
        // Predicated region
        $region85: #{tpu_custom_call.1} parent=83 // pred_check
          %p651 = pneg %p66
        $region86: #{tpu_custom_call.1} parent=83 // pred_check_branch
          %653 = sbr.rel (%p651) target = $region88
        $region87: #{tpu_custom_call.1} parent=83 // pred_region
          %655 = dma.done %s647, 512
        $region88: #{tpu_custom_call.1} parent=83 // pred_fallthru
          _
        %s656 = sand.u32 %s45, 1
        %s657 = scalar_lea.sflag [#allocation6], %s656
        %s658 = sand.u32 %s105, 1
        %s659 = smul.addr %s658, 16
        %s660 = scalar_lea.vmem [#allocation5], %s659
        // Predicated region
        $region89: #{tpu_custom_call.1} parent=83 // pred_check
          %p661 = pneg %p118
        $region90: #{tpu_custom_call.1} parent=83 // pred_check_branch
          %663 = sbr.rel (%p661) target = $region92
        $region91: #{tpu_custom_call.1} parent=83 // pred_region
          %665 = dma.done %s657, 256
        $region92: #{tpu_custom_call.1} parent=83 // pred_fallthru
          _
        // Predicated region
        $region93: #{tpu_custom_call.1} parent=83 // pred_check
          %p666 = pneg %p139
        $region94: #{tpu_custom_call.1} parent=83 // pred_check_branch
          %668 = sbr.rel (%p666) target = $region96
        $region95: #{tpu_custom_call.1} parent=83 // pred_region
          %670 = dma.done [#allocation6], 8192
        $region96: #{tpu_custom_call.1} parent=83 // pred_fallthru
          _
        // Predicated region
        $region97: #{tpu_custom_call.1} parent=83 // pred_check
          %p671 = pneg %p202
        $region98: #{tpu_custom_call.1} parent=83 // pred_check_branch
          %673 = sbr.rel (%p671) target = $region100
        $region99: #{tpu_custom_call.1} parent=83 // pred_region
          %675 = dma.done [#allocation9], 8192
        $region100: #{tpu_custom_call.1} parent=83 // pred_fallthru
          _
        // Predicated region
        $region101: #{tpu_custom_call.1} parent=83 // pred_check
          %p676 = pneg %p223
        $region102: #{tpu_custom_call.1} parent=83 // pred_check_branch
          %678 = sbr.rel (%p676) target = $region104
        $region103: #{tpu_custom_call.1} parent=83 // pred_region
          %680 = dma.done [#allocation9], 32
        $region104: #{tpu_custom_call.1} parent=83 // pred_fallthru
          _
        // Predicated region
        $region105: #{tpu_custom_call.1} parent=83 // pred_check
          %p681 = pneg %p244
        $region106: #{tpu_custom_call.1} parent=83 // pred_check_branch
          %683 = sbr.rel (%p681) target = $region108
        $region107: #{tpu_custom_call.1} parent=83 // pred_region
          %685 = dma.done [#allocation12], 4096
        $region108: #{tpu_custom_call.1} parent=83 // pred_fallthru
          _
        // Predicated region
        $region109: #{tpu_custom_call.1} parent=83 // pred_check
          %p686 = pneg %p265
        $region110: #{tpu_custom_call.1} parent=83 // pred_check_branch
          %688 = sbr.rel (%p686) target = $region112
        $region111: #{tpu_custom_call.1} parent=83 // pred_region
          %690 = dma.done [#allocation12], 32
        $region112: #{tpu_custom_call.1} parent=83 // pred_fallthru
          _
        // Predicated region
        $region113: #{tpu_custom_call.1} parent=83 // pred_check
          %p691 = pneg %p286
        $region114: #{tpu_custom_call.1} parent=83 // pred_check_branch
          %693 = sbr.rel (%p691) target = $region116
        $region115: #{tpu_custom_call.1} parent=83 // pred_region
          %695 = dma.done [#allocation15], 2048
        $region116: #{tpu_custom_call.1} parent=83 // pred_fallthru
          _
        // Predicated region
        $region117: #{tpu_custom_call.1} parent=83 // pred_check
          %p696 = pneg %p328
        $region118: #{tpu_custom_call.1} parent=83 // pred_check_branch
          %698 = sbr.rel (%p696) target = $region120
        $region119: #{tpu_custom_call.1} parent=83 // pred_region
          %700 = dma.done [#allocation15], 8192
        $region120: #{tpu_custom_call.1} parent=83 // pred_fallthru
          _
        // Predicated region
        $region121: #{tpu_custom_call.1} parent=83 // pred_check
          %p701 = pneg %p370
        $region122: #{tpu_custom_call.1} parent=83 // pred_check_branch
          %703 = sbr.rel (%p701) target = $region124
        $region123: #{tpu_custom_call.1} parent=83 // pred_region
          %705 = dma.done [#allocation18], 8192
        $region124: #{tpu_custom_call.1} parent=83 // pred_fallthru
          _
        %s706 = sand.u32 %s53, 1
        %s707 = scalar_lea.sflag [#allocation3], %s706
        %s708 = sand.u32 %s53, 1
        %s709 = smul.addr %s708, 32
        %s710 = scalar_lea.vmem [#allocation2], %s709
        %p711 = pneg %p66
        %p712 = pneg %p63
        %s713 = smul.u32 2, %s45
        %p714 = scmp.lt.s32.totalorder %s713, 3
        %s715 = scalar_select %p714, %s713, 3
        %s716 = smul.addr %s715, 8
        %s717 = scalar_lea.vmem %s1, %s716
        %p718 = pneg %p92
        %p719 = pneg %p89
        %s720 = sand.u32 %s45, 1
        %s721 = scalar_lea.sflag [#allocation6], %s720
        %s722 = sand.u32 %s105, 1
        %s723 = smul.addr %s722, 16
        %s724 = scalar_lea.vmem [#allocation5], %s723
        %p725 = pneg %p118
        %p726 = pneg %p115
        %p727 = pneg %p139
        %p728 = pneg %p136
        %p729 = pneg %p160
        %p730 = pneg %p157
        %p731 = pneg %p181
        %p732 = pneg %p178
        %p733 = pneg %p202
        %p734 = pneg %p199
        %p735 = pneg %p223
        %p736 = pneg %p220
        %p737 = pneg %p244
        %p738 = pneg %p241
        %p739 = pneg %p265
        %p740 = pneg %p262
        %p741 = pneg %p286
        %p742 = pneg %p283
        %p743 = pneg %p307
        %p744 = pneg %p304
        %p745 = pneg %p328
        %p746 = pneg %p325
        %p747 = pneg %p349
        %p748 = pneg %p346
        %p749 = pneg %p370
        %p750 = pneg %p367
        %p751 = pneg %p391
        %p752 = pneg %p388
        %p753 = pneg %p417
        %p754 = pneg %p414
        %s755 = sand.u32 %s404, 1
        %s756 = scalar_lea.sflag [#allocation4], %s755
        %s757 = sand.u32 %s404, 1
        %s758 = smul.addr %s757, 32
        %s759 = scalar_lea.vmem [#allocation19], %s758
        %p760 = pneg %p443
        %p761 = pneg %p440
        %s762 = sand.u32 %s430, 1
        %s763 = scalar_lea.sflag [#allocation21], %s762
        %s764 = sand.u32 %s430, 1
        %s765 = smul.addr %s764, 32
        %s766 = scalar_lea.vmem [#allocation20], %s765
        %s767 = smul.u32 2, %s45
        %s768 = smul.u32 2, %s45
        %p769 = scmp.lt.s32.totalorder %s768, 3
        %s770 = scalar_select %p769, %s768, 3
        %s771 = smul.addr %s770, 8
        %s772 = scalar_lea.vmem %s1, %s771
        %s773 = smul.u32 2, %s45
        %s774 = smul.u32 2, %s45
        %s775 = smul.u32 2, %s45
        %s776 = smul.u32 2, %s45
        %v778 = vld [vmem:[%s650] sm:$0xff]
        %v779 = vld [vmem:[%s650 + $0x8] sm:$0xff]
        %v780 = vld [vmem:[%s650 + $0x10] sm:$0xff]
        %v781 = vld [vmem:[%s650 + $0x18] sm:$0xff]
        %v782 = vpack.c.bf16 %v780, %v778
        %v783 = vpack.c.bf16 %v781, %v779
        %v784 = vld [vmem:[%s772] sm:$0xff]
        %v785 = vld [vmem:[%s772 + $0x8] sm:$0xff]
        %v786 = vpack.c.bf16 %v785, %v784
        %v787 = vld [vmem:[%s4] sm:$0xff]
        %v788 = vld [vmem:[%s4 + $0x8] sm:$0xff]
        %v789 = vld [vmem:[%s4 + $0x10] sm:$0xff]
        %v790 = vld [vmem:[%s4 + $0x18] sm:$0x11]
        %v791 = vld [vmem:[%s4 + $0x20] sm:$0x11]
        %v792 = vld [vmem:[%s4 + $0x28] sm:$0x11]
        %v799 = vunpack.c.l.b16 %v787
        %v800 = vunpack.c.h.b16 %v787
        %v801 = vunpack.c.l.b16 %v788
        %v802 = vunpack.c.h.b16 %v788
        %v803 = vunpack.c.l.b16 %v789
        %v804 = vunpack.c.h.b16 %v789
        %v805 = vunpack.c.l.b16 %v790
        %v806 = vunpack.c.h.b16 %v790
        %v807 = vunpack.c.l.b16 %v791
        %v808 = vunpack.c.h.b16 %v791
        %v809 = vunpack.c.l.b16 %v792
        %v810 = vunpack.c.h.b16 %v792
        %v811 = vpack.c.b16 %v805, %v799
        %v812 = vpack.c.b16 %v806, %v800
        %v813 = vpack.c.b16 %v807, %v801
        %v814 = vpack.c.b16 %v808, %v802
        %v815 = vpack.c.b16 %v809, %v803
        %v816 = vpack.c.b16 %v810, %v804
        %vm817 = vcmask 80896
        %v819 = vsel %vm817, %v786, 0
        %vm821 = vcmask 1044480
        %v823 = vsel %vm821, %v811, 0
        %v826 = vsel %vm821, %v812, 0
        %v829 = vsel %vm821, %v813, 0
        %v832 = vsel %vm821, %v814, 0
        %v835 = vsel %vm821, %v815, 0
        %v838 = vsel %vm821, %v816, 0
        %840 = vmatpush.bf16.msra.mxu0 0
        %841 = vmatpush.bf16.msra.mxu0 0
        %842 = vmatpush.bf16.msra.mxu0 0
        %843 = vmatpush.bf16.msra.mxu0 0
        %844 = vmatpush.bf16.msra.mxu0 0
        %845 = vmatpush.bf16.msra.mxu0 0
        %846 = vmatpush.bf16.msra.mxu0 0
        %847 = vmatpush.bf16.msra.mxu0 %v823
        %848 = vmatmul.bf16.gmra.mxu0 %v819
        %v849 = vpop.f32.mrf.mxu0
        %v850 = vadd.f32 0.0, %v849
        %v851 = vpop.f32.mrf.mxu0
        %v852 = vadd.f32 0.0, %v851
        %853 = vdwg.mxu0
        %854 = vmatpush.bf16.msra.mxu0 0
        %855 = vmatpush.bf16.msra.mxu0 0
        %856 = vmatpush.bf16.msra.mxu0 0
        %857 = vmatpush.bf16.msra.mxu0 0
        %858 = vmatpush.bf16.msra.mxu0 0
        %859 = vmatpush.bf16.msra.mxu0 0
        %860 = vmatpush.bf16.msra.mxu0 0
        %861 = vmatpush.bf16.msra.mxu0 %v826
        %862 = vmatmul.bf16.gmra.mxu0 %v819
        %v863 = vpop.f32.mrf.mxu0
        %v864 = vadd.f32 0.0, %v863
        %v865 = vpop.f32.mrf.mxu0
        %v866 = vadd.f32 0.0, %v865
        %867 = vdwg.mxu0
        %868 = vmatpush.bf16.msra.mxu0 0
        %869 = vmatpush.bf16.msra.mxu0 0
        %870 = vmatpush.bf16.msra.mxu0 0
        %871 = vmatpush.bf16.msra.mxu0 0
        %872 = vmatpush.bf16.msra.mxu0 0
        %873 = vmatpush.bf16.msra.mxu0 0
        %874 = vmatpush.bf16.msra.mxu0 0
        %875 = vmatpush.bf16.msra.mxu0 %v829
        %876 = vmatmul.bf16.gmra.mxu0 %v819
        %v877 = vpop.f32.mrf.mxu0
        %v878 = vadd.f32 0.0, %v877
        %v879 = vpop.f32.mrf.mxu0
        %v880 = vadd.f32 0.0, %v879
        %881 = vdwg.mxu0
        %882 = vmatpush.bf16.msra.mxu0 0
        %883 = vmatpush.bf16.msra.mxu0 0
        %884 = vmatpush.bf16.msra.mxu0 0
        %885 = vmatpush.bf16.msra.mxu0 0
        %886 = vmatpush.bf16.msra.mxu0 0
        %887 = vmatpush.bf16.msra.mxu0 0
        %888 = vmatpush.bf16.msra.mxu0 0
        %889 = vmatpush.bf16.msra.mxu0 %v832
        %890 = vmatmul.bf16.gmra.mxu0 %v819
        %v891 = vpop.f32.mrf.mxu0
        %v892 = vadd.f32 0.0, %v891
        %v893 = vpop.f32.mrf.mxu0
        %v894 = vadd.f32 0.0, %v893
        %895 = vdwg.mxu0
        %896 = vmatpush.bf16.msra.mxu0 0
        %897 = vmatpush.bf16.msra.mxu0 0
        %898 = vmatpush.bf16.msra.mxu0 0
        %899 = vmatpush.bf16.msra.mxu0 0
        %900 = vmatpush.bf16.msra.mxu0 0
        %901 = vmatpush.bf16.msra.mxu0 0
        %902 = vmatpush.bf16.msra.mxu0 0
        %903 = vmatpush.bf16.msra.mxu0 %v835
        %904 = vmatmul.bf16.gmra.mxu0 %v819
        %v905 = vpop.f32.mrf.mxu0
        %v906 = vadd.f32 0.0, %v905
        %v907 = vpop.f32.mrf.mxu0
        %v908 = vadd.f32 0.0, %v907
        %909 = vdwg.mxu0
        %910 = vmatpush.bf16.msra.mxu0 0
        %911 = vmatpush.bf16.msra.mxu0 0
        %912 = vmatpush.bf16.msra.mxu0 0
        %913 = vmatpush.bf16.msra.mxu0 0
        %914 = vmatpush.bf16.msra.mxu0 0
        %915 = vmatpush.bf16.msra.mxu0 0
        %916 = vmatpush.bf16.msra.mxu0 0
        %917 = vmatpush.bf16.msra.mxu0 %v838
        %918 = vmatmul.bf16.gmra.mxu0 %v819
        %v919 = vpop.f32.mrf.mxu0
        %v920 = vadd.f32 0.0, %v919
        %v921 = vpop.f32.mrf.mxu0
        %v922 = vadd.f32 0.0, %v921
        %923 = vdwg.mxu0
        %v924 = vld [vmem:[#allocation7] sm:$0xff]
        %v925 = vld [vmem:[#allocation7 + $0x8] sm:$0xff]
        %v926 = vld [vmem:[#allocation7 + $0x10] sm:$0xff]
        %v927 = vld [vmem:[#allocation7 + $0x18] sm:$0xff]
        %v928 = vld [vmem:[#allocation7 + $0x20] sm:$0xff]
        %v929 = vld [vmem:[#allocation7 + $0x28] sm:$0xff]
        %v930 = vld [vmem:[#allocation7 + $0x30] sm:$0xff]
        %v931 = vld [vmem:[#allocation7 + $0x38] sm:$0xff]
        %v932 = vld [vmem:[#allocation7 + $0x40] sm:$0xff]
        %v933 = vld [vmem:[#allocation7 + $0x48] sm:$0xff]
        %v934 = vld [vmem:[#allocation7 + $0x50] sm:$0xff]
        %v935 = vld [vmem:[#allocation7 + $0x58] sm:$0xff]
        %v936 = vld [vmem:[#allocation7 + $0x60] sm:$0xff]
        %v937 = vld [vmem:[#allocation7 + $0x68] sm:$0xff]
        %v938 = vld [vmem:[#allocation7 + $0x70] sm:$0xff]
        %v939 = vld [vmem:[#allocation7 + $0x78] sm:$0xff]
        %v940 = vld [vmem:[#allocation7 + $0x80] sm:$0xff]
        %v941 = vld [vmem:[#allocation7 + $0x88] sm:$0xff]
        %v942 = vld [vmem:[#allocation7 + $0x90] sm:$0xff]
        %v943 = vld [vmem:[#allocation7 + $0x98] sm:$0xff]
        %v944 = vld [vmem:[#allocation7 + $0xa0] sm:$0xff]
        %v945 = vld [vmem:[#allocation7 + $0xa8] sm:$0xff]
        %v946 = vld [vmem:[#allocation7 + $0xb0] sm:$0xff]
        %v947 = vld [vmem:[#allocation7 + $0xb8] sm:$0xff]
        %v948 = vld [vmem:[#allocation7 + $0xc0] sm:$0xff]
        %v949 = vld [vmem:[#allocation7 + $0xc8] sm:$0xff]
        %v950 = vld [vmem:[#allocation7 + $0xd0] sm:$0xff]
        %v951 = vld [vmem:[#allocation7 + $0xd8] sm:$0xff]
        %v952 = vld [vmem:[#allocation7 + $0xe0] sm:$0xff]
        %v953 = vld [vmem:[#allocation7 + $0xe8] sm:$0xff]
        %v954 = vld [vmem:[#allocation7 + $0xf0] sm:$0xff]
        %v955 = vld [vmem:[#allocation7 + $0xf8] sm:$0xff]
        %v956 = vld [vmem:[#allocation7 + $0x100] sm:$0xff]
        %v957 = vld [vmem:[#allocation7 + $0x108] sm:$0xff]
        %v958 = vld [vmem:[#allocation7 + $0x110] sm:$0xff]
        %v959 = vld [vmem:[#allocation7 + $0x118] sm:$0xff]
        %v960 = vld [vmem:[#allocation7 + $0x120] sm:$0xff]
        %v961 = vld [vmem:[#allocation7 + $0x128] sm:$0xff]
        %v962 = vld [vmem:[#allocation7 + $0x130] sm:$0xff]
        %v963 = vld [vmem:[#allocation7 + $0x138] sm:$0xff]
        %v964 = vld [vmem:[#allocation7 + $0x140] sm:$0xff]
        %v965 = vld [vmem:[#allocation7 + $0x148] sm:$0xff]
        %v966 = vld [vmem:[#allocation7 + $0x150] sm:$0xff]
        %v967 = vld [vmem:[#allocation7 + $0x158] sm:$0xff]
        %v968 = vld [vmem:[#allocation7 + $0x160] sm:$0xff]
        %v969 = vld [vmem:[#allocation7 + $0x168] sm:$0xff]
        %v970 = vld [vmem:[#allocation7 + $0x170] sm:$0xff]
        %v971 = vld [vmem:[#allocation7 + $0x178] sm:$0xff]
        %v972 = vld [vmem:[#allocation7 + $0x180] sm:$0xff]
        %v973 = vld [vmem:[#allocation7 + $0x188] sm:$0xff]
        %v974 = vld [vmem:[#allocation7 + $0x190] sm:$0xff]
        %v975 = vld [vmem:[#allocation7 + $0x198] sm:$0xff]
        %v976 = vld [vmem:[#allocation7 + $0x1a0] sm:$0xff]
        %v977 = vld [vmem:[#allocation7 + $0x1a8] sm:$0xff]
        %v978 = vld [vmem:[#allocation7 + $0x1b0] sm:$0xff]
        %v979 = vld [vmem:[#allocation7 + $0x1b8] sm:$0xff]
        %v980 = vld [vmem:[#allocation7 + $0x1c0] sm:$0xff]
        %v981 = vld [vmem:[#allocation7 + $0x1c8] sm:$0xff]
        %v982 = vld [vmem:[#allocation7 + $0x1d0] sm:$0xff]
        %v983 = vld [vmem:[#allocation7 + $0x1d8] sm:$0xff]
        %v984 = vld [vmem:[#allocation7 + $0x1e0] sm:$0xff]
        %v985 = vld [vmem:[#allocation7 + $0x1e8] sm:$0xff]
        %v986 = vld [vmem:[#allocation7 + $0x1f0] sm:$0xff]
        %v987 = vld [vmem:[#allocation7 + $0x1f8] sm:$0xff]
        %v1052 = vunpack.c.l.b16 %v924
        %v1053 = vunpack.c.h.b16 %v924
        %v1054 = vunpack.c.l.b16 %v925
        %v1055 = vunpack.c.h.b16 %v925
        %v1056 = vunpack.c.l.b16 %v926
        %v1057 = vunpack.c.h.b16 %v926
        %v1058 = vunpack.c.l.b16 %v927
        %v1059 = vunpack.c.h.b16 %v927
        %v1060 = vunpack.c.l.b16 %v928
        %v1061 = vunpack.c.h.b16 %v928
        %v1062 = vunpack.c.l.b16 %v929
        %v1063 = vunpack.c.h.b16 %v929
        %v1064 = vunpack.c.l.b16 %v930
        %v1065 = vunpack.c.h.b16 %v930
        %v1066 = vunpack.c.l.b16 %v931
        %v1067 = vunpack.c.h.b16 %v931
        %v1068 = vunpack.c.l.b16 %v932
        %v1069 = vunpack.c.h.b16 %v932
        %v1070 = vunpack.c.l.b16 %v933
        %v1071 = vunpack.c.h.b16 %v933
        %v1072 = vunpack.c.l.b16 %v934
        %v1073 = vunpack.c.h.b16 %v934
        %v1074 = vunpack.c.l.b16 %v935
        %v1075 = vunpack.c.h.b16 %v935
        %v1076 = vunpack.c.l.b16 %v936
        %v1077 = vunpack.c.h.b16 %v936
        %v1078 = vunpack.c.l.b16 %v937
        %v1079 = vunpack.c.h.b16 %v937
        %v1080 = vunpack.c.l.b16 %v938
        %v1081 = vunpack.c.h.b16 %v938
        %v1082 = vunpack.c.l.b16 %v939
        %v1083 = vunpack.c.h.b16 %v939
        %v1084 = vunpack.c.l.b16 %v940
        %v1085 = vunpack.c.h.b16 %v940
        %v1086 = vunpack.c.l.b16 %v941
        %v1087 = vunpack.c.h.b16 %v941
        %v1088 = vunpack.c.l.b16 %v942
        %v1089 = vunpack.c.h.b16 %v942
        %v1090 = vunpack.c.l.b16 %v943
        %v1091 = vunpack.c.h.b16 %v943
        %v1092 = vunpack.c.l.b16 %v944
        %v1093 = vunpack.c.h.b16 %v944
        %v1094 = vunpack.c.l.b16 %v945
        %v1095 = vunpack.c.h.b16 %v945
        %v1096 = vunpack.c.l.b16 %v946
        %v1097 = vunpack.c.h.b16 %v946
        %v1098 = vunpack.c.l.b16 %v947
        %v1099 = vunpack.c.h.b16 %v947
        %v1100 = vunpack.c.l.b16 %v948
        %v1101 = vunpack.c.h.b16 %v948
        %v1102 = vunpack.c.l.b16 %v949
        %v1103 = vunpack.c.h.b16 %v949
        %v1104 = vunpack.c.l.b16 %v950
        %v1105 = vunpack.c.h.b16 %v950
        %v1106 = vunpack.c.l.b16 %v951
        %v1107 = vunpack.c.h.b16 %v951
        %v1108 = vunpack.c.l.b16 %v952
        %v1109 = vunpack.c.h.b16 %v952
        %v1110 = vunpack.c.l.b16 %v953
        %v1111 = vunpack.c.h.b16 %v953
        %v1112 = vunpack.c.l.b16 %v954
        %v1113 = vunpack.c.h.b16 %v954
        %v1114 = vunpack.c.l.b16 %v955
        %v1115 = vunpack.c.h.b16 %v955
        %v1116 = vunpack.c.l.b16 %v956
        %v1117 = vunpack.c.h.b16 %v956
        %v1118 = vunpack.c.l.b16 %v957
        %v1119 = vunpack.c.h.b16 %v957
        %v1120 = vunpack.c.l.b16 %v958
        %v1121 = vunpack.c.h.b16 %v958
        %v1122 = vunpack.c.l.b16 %v959
        %v1123 = vunpack.c.h.b16 %v959
        %v1124 = vunpack.c.l.b16 %v960
        %v1125 = vunpack.c.h.b16 %v960
        %v1126 = vunpack.c.l.b16 %v961
        %v1127 = vunpack.c.h.b16 %v961
        %v1128 = vunpack.c.l.b16 %v962
        %v1129 = vunpack.c.h.b16 %v962
        %v1130 = vunpack.c.l.b16 %v963
        %v1131 = vunpack.c.h.b16 %v963
        %v1132 = vunpack.c.l.b16 %v964
        %v1133 = vunpack.c.h.b16 %v964
        %v1134 = vunpack.c.l.b16 %v965
        %v1135 = vunpack.c.h.b16 %v965
        %v1136 = vunpack.c.l.b16 %v966
        %v1137 = vunpack.c.h.b16 %v966
        %v1138 = vunpack.c.l.b16 %v967
        %v1139 = vunpack.c.h.b16 %v967
        %v1140 = vunpack.c.l.b16 %v968
        %v1141 = vunpack.c.h.b16 %v968
        %v1142 = vunpack.c.l.b16 %v969
        %v1143 = vunpack.c.h.b16 %v969
        %v1144 = vunpack.c.l.b16 %v970
        %v1145 = vunpack.c.h.b16 %v970
        %v1146 = vunpack.c.l.b16 %v971
        %v1147 = vunpack.c.h.b16 %v971
        %v1148 = vunpack.c.l.b16 %v972
        %v1149 = vunpack.c.h.b16 %v972
        %v1150 = vunpack.c.l.b16 %v973
        %v1151 = vunpack.c.h.b16 %v973
        %v1152 = vunpack.c.l.b16 %v974
        %v1153 = vunpack.c.h.b16 %v974
        %v1154 = vunpack.c.l.b16 %v975
        %v1155 = vunpack.c.h.b16 %v975
        %v1156 = vunpack.c.l.b16 %v976
        %v1157 = vunpack.c.h.b16 %v976
        %v1158 = vunpack.c.l.b16 %v977
        %v1159 = vunpack.c.h.b16 %v977
        %v1160 = vunpack.c.l.b16 %v978
        %v1161 = vunpack.c.h.b16 %v978
        %v1162 = vunpack.c.l.b16 %v979
        %v1163 = vunpack.c.h.b16 %v979
        %v1164 = vunpack.c.l.b16 %v980
        %v1165 = vunpack.c.h.b16 %v980
        %v1166 = vunpack.c.l.b16 %v981
        %v1167 = vunpack.c.h.b16 %v981
        %v1168 = vunpack.c.l.b16 %v982
        %v1169 = vunpack.c.h.b16 %v982
        %v1170 = vunpack.c.l.b16 %v983
        %v1171 = vunpack.c.h.b16 %v983
        %v1172 = vunpack.c.l.b16 %v984
        %v1173 = vunpack.c.h.b16 %v984
        %v1174 = vunpack.c.l.b16 %v985
        %v1175 = vunpack.c.h.b16 %v985
        %v1176 = vunpack.c.l.b16 %v986
        %v1177 = vunpack.c.h.b16 %v986
        %v1178 = vunpack.c.l.b16 %v987
        %v1179 = vunpack.c.h.b16 %v987
        %v1180 = vpack.c.b16 %v1056, %v1052
        %v1181 = vpack.c.b16 %v1057, %v1053
        %v1182 = vpack.c.b16 %v1058, %v1054
        %v1183 = vpack.c.b16 %v1059, %v1055
        %v1184 = vpack.c.b16 %v1064, %v1060
        %v1185 = vpack.c.b16 %v1065, %v1061
        %v1186 = vpack.c.b16 %v1066, %v1062
        %v1187 = vpack.c.b16 %v1067, %v1063
        %v1188 = vpack.c.b16 %v1072, %v1068
        %v1189 = vpack.c.b16 %v1073, %v1069
        %v1190 = vpack.c.b16 %v1074, %v1070
        %v1191 = vpack.c.b16 %v1075, %v1071
        %v1192 = vpack.c.b16 %v1080, %v1076
        %v1193 = vpack.c.b16 %v1081, %v1077
        %v1194 = vpack.c.b16 %v1082, %v1078
        %v1195 = vpack.c.b16 %v1083, %v1079
        %v1196 = vpack.c.b16 %v1088, %v1084
        %v1197 = vpack.c.b16 %v1089, %v1085
        %v1198 = vpack.c.b16 %v1090, %v1086
        %v1199 = vpack.c.b16 %v1091, %v1087
        %v1200 = vpack.c.b16 %v1096, %v1092
        %v1201 = vpack.c.b16 %v1097, %v1093
        %v1202 = vpack.c.b16 %v1098, %v1094
        %v1203 = vpack.c.b16 %v1099, %v1095
        %v1204 = vpack.c.b16 %v1104, %v1100
        %v1205 = vpack.c.b16 %v1105, %v1101
        %v1206 = vpack.c.b16 %v1106, %v1102
        %v1207 = vpack.c.b16 %v1107, %v1103
        %v1208 = vpack.c.b16 %v1112, %v1108
        %v1209 = vpack.c.b16 %v1113, %v1109
        %v1210 = vpack.c.b16 %v1114, %v1110
        %v1211 = vpack.c.b16 %v1115, %v1111
        %v1212 = vpack.c.b16 %v1120, %v1116
        %v1213 = vpack.c.b16 %v1121, %v1117
        %v1214 = vpack.c.b16 %v1122, %v1118
        %v1215 = vpack.c.b16 %v1123, %v1119
        %v1216 = vpack.c.b16 %v1128, %v1124
        %v1217 = vpack.c.b16 %v1129, %v1125
        %v1218 = vpack.c.b16 %v1130, %v1126
        %v1219 = vpack.c.b16 %v1131, %v1127
        %v1220 = vpack.c.b16 %v1136, %v1132
        %v1221 = vpack.c.b16 %v1137, %v1133
        %v1222 = vpack.c.b16 %v1138, %v1134
        %v1223 = vpack.c.b16 %v1139, %v1135
        %v1224 = vpack.c.b16 %v1144, %v1140
        %v1225 = vpack.c.b16 %v1145, %v1141
        %v1226 = vpack.c.b16 %v1146, %v1142
        %v1227 = vpack.c.b16 %v1147, %v1143
        %v1228 = vpack.c.b16 %v1152, %v1148
        %v1229 = vpack.c.b16 %v1153, %v1149
        %v1230 = vpack.c.b16 %v1154, %v1150
        %v1231 = vpack.c.b16 %v1155, %v1151
        %v1232 = vpack.c.b16 %v1160, %v1156
        %v1233 = vpack.c.b16 %v1161, %v1157
        %v1234 = vpack.c.b16 %v1162, %v1158
        %v1235 = vpack.c.b16 %v1163, %v1159
        %v1236 = vpack.c.b16 %v1168, %v1164
        %v1237 = vpack.c.b16 %v1169, %v1165
        %v1238 = vpack.c.b16 %v1170, %v1166
        %v1239 = vpack.c.b16 %v1171, %v1167
        %v1240 = vpack.c.b16 %v1176, %v1172
        %v1241 = vpack.c.b16 %v1177, %v1173
        %v1242 = vpack.c.b16 %v1178, %v1174
        %v1243 = vpack.c.b16 %v1179, %v1175
        %1308 = vmatpush.bf16.msra.mxu0 %v1208
        %1309 = vmatpush.bf16.msra.mxu0 %v1204
        %1310 = vmatpush.bf16.msra.mxu0 %v1200
        %1311 = vmatpush.bf16.msra.mxu0 %v1196
        %1312 = vmatpush.bf16.msra.mxu0 %v1192
        %1313 = vmatpush.bf16.msra.mxu0 %v1188
        %1314 = vmatpush.bf16.msra.mxu0 %v1184
        %1315 = vmatpush.bf16.msra.mxu0 %v1180
        %1316 = vmatmul.bf16.gmra.mxu0 %v782
        %v1317 = vpop.f32.mrf.mxu0
        %v1318 = vadd.f32 %v850, %v1317
        %v1319 = vpop.f32.mrf.mxu0
        %v1320 = vadd.f32 %v852, %v1319
        %1321 = vdwg.mxu0
        %1322 = vmatpush.bf16.msra.mxu0 %v1240
        %1323 = vmatpush.bf16.msra.mxu0 %v1236
        %1324 = vmatpush.bf16.msra.mxu0 %v1232
        %1325 = vmatpush.bf16.msra.mxu0 %v1228
        %1326 = vmatpush.bf16.msra.mxu0 %v1224
        %1327 = vmatpush.bf16.msra.mxu0 %v1220
        %1328 = vmatpush.bf16.msra.mxu0 %v1216
        %1329 = vmatpush.bf16.msra.mxu0 %v1212
        %1330 = vmatmul.bf16.gmra.mxu0 %v783
        %v1331 = vpop.f32.mrf.mxu0
        %v1332 = vadd.f32 %v1318, %v1331
        %v1333 = vpop.f32.mrf.mxu0
        %v1334 = vadd.f32 %v1320, %v1333
        %1335 = vdwg.mxu0
        %1336 = vmatpush.bf16.msra.mxu0 %v1209
        %1337 = vmatpush.bf16.msra.mxu0 %v1205
        %1338 = vmatpush.bf16.msra.mxu0 %v1201
        %1339 = vmatpush.bf16.msra.mxu0 %v1197
        %1340 = vmatpush.bf16.msra.mxu0 %v1193
        %1341 = vmatpush.bf16.msra.mxu0 %v1189
        %1342 = vmatpush.bf16.msra.mxu0 %v1185
        %1343 = vmatpush.bf16.msra.mxu0 %v1181
        %1344 = vmatmul.bf16.gmra.mxu0 %v782
        %v1345 = vpop.f32.mrf.mxu0
        %v1346 = vadd.f32 %v864, %v1345
        %v1347 = vpop.f32.mrf.mxu0
        %v1348 = vadd.f32 %v866, %v1347
        %1349 = vdwg.mxu0
        %1350 = vmatpush.bf16.msra.mxu0 %v1241
        %1351 = vmatpush.bf16.msra.mxu0 %v1237
        %1352 = vmatpush.bf16.msra.mxu0 %v1233
        %1353 = vmatpush.bf16.msra.mxu0 %v1229
        %1354 = vmatpush.bf16.msra.mxu0 %v1225
        %1355 = vmatpush.bf16.msra.mxu0 %v1221
        %1356 = vmatpush.bf16.msra.mxu0 %v1217
        %1357 = vmatpush.bf16.msra.mxu0 %v1213
        %1358 = vmatmul.bf16.gmra.mxu0 %v783
        %v1359 = vpop.f32.mrf.mxu0
        %v1360 = vadd.f32 %v1346, %v1359
        %v1361 = vpop.f32.mrf.mxu0
        %v1362 = vadd.f32 %v1348, %v1361
        %1363 = vdwg.mxu0
        %1364 = vmatpush.bf16.msra.mxu0 %v1210
        %1365 = vmatpush.bf16.msra.mxu0 %v1206
        %1366 = vmatpush.bf16.msra.mxu0 %v1202
        %1367 = vmatpush.bf16.msra.mxu0 %v1198
        %1368 = vmatpush.bf16.msra.mxu0 %v1194
        %1369 = vmatpush.bf16.msra.mxu0 %v1190
        %1370 = vmatpush.bf16.msra.mxu0 %v1186
        %1371 = vmatpush.bf16.msra.mxu0 %v1182
        %1372 = vmatmul.bf16.gmra.mxu0 %v782
        %v1373 = vpop.f32.mrf.mxu0
        %v1374 = vadd.f32 %v878, %v1373
        %v1375 = vpop.f32.mrf.mxu0
        %v1376 = vadd.f32 %v880, %v1375
        %1377 = vdwg.mxu0
        %1378 = vmatpush.bf16.msra.mxu0 %v1242
        %1379 = vmatpush.bf16.msra.mxu0 %v1238
        %1380 = vmatpush.bf16.msra.mxu0 %v1234
        %1381 = vmatpush.bf16.msra.mxu0 %v1230
        %1382 = vmatpush.bf16.msra.mxu0 %v1226
        %1383 = vmatpush.bf16.msra.mxu0 %v1222
        %1384 = vmatpush.bf16.msra.mxu0 %v1218
        %1385 = vmatpush.bf16.msra.mxu0 %v1214
        %1386 = vmatmul.bf16.gmra.mxu0 %v783
        %v1387 = vpop.f32.mrf.mxu0
        %v1388 = vadd.f32 %v1374, %v1387
        %v1389 = vpop.f32.mrf.mxu0
        %v1390 = vadd.f32 %v1376, %v1389
        %1391 = vdwg.mxu0
        %1392 = vmatpush.bf16.msra.mxu0 %v1211
        %1393 = vmatpush.bf16.msra.mxu0 %v1207
        %1394 = vmatpush.bf16.msra.mxu0 %v1203
        %1395 = vmatpush.bf16.msra.mxu0 %v1199
        %1396 = vmatpush.bf16.msra.mxu0 %v1195
        %1397 = vmatpush.bf16.msra.mxu0 %v1191
        %1398 = vmatpush.bf16.msra.mxu0 %v1187
        %1399 = vmatpush.bf16.msra.mxu0 %v1183
        %1400 = vmatmul.bf16.gmra.mxu0 %v782
        %v1401 = vpop.f32.mrf.mxu0
        %v1402 = vadd.f32 %v892, %v1401
        %v1403 = vpop.f32.mrf.mxu0
        %v1404 = vadd.f32 %v894, %v1403
        %1405 = vdwg.mxu0
        %1406 = vmatpush.bf16.msra.mxu0 %v1243
        %1407 = vmatpush.bf16.msra.mxu0 %v1239
        %1408 = vmatpush.bf16.msra.mxu0 %v1235
        %1409 = vmatpush.bf16.msra.mxu0 %v1231
        %1410 = vmatpush.bf16.msra.mxu0 %v1227
        %1411 = vmatpush.bf16.msra.mxu0 %v1223
        %1412 = vmatpush.bf16.msra.mxu0 %v1219
        %1413 = vmatpush.bf16.msra.mxu0 %v1215
        %1414 = vmatmul.bf16.gmra.mxu0 %v783
        %v1415 = vpop.f32.mrf.mxu0
        %v1416 = vadd.f32 %v1402, %v1415
        %v1417 = vpop.f32.mrf.mxu0
        %v1418 = vadd.f32 %v1404, %v1417
        %1419 = vdwg.mxu0
        %v1420 = vld [vmem:[%s5] sm:$0xf]
        %v1422 = vperm.slane %v1420, 0
        %v1423 = vperm.slane %v1420, 1
        %v1424 = vperm.slane %v1420, 2
        %v1425 = vperm.slane %v1420, 3
        %v1430 = vadd.f32 %v1332, %v1422
        %v1431 = vadd.f32 %v1360, %v1423
        %v1432 = vadd.f32 %v1388, %v1424
        %v1433 = vadd.f32 %v1416, %v1425
        %v1434 = vadd.f32 %v1334, %v1422
        %v1435 = vadd.f32 %v1362, %v1423
        %v1436 = vadd.f32 %v1390, %v1424
        %v1437 = vadd.f32 %v1418, %v1425
        %v1438 = vmax.f32 %v1430, 0.0
        %v1439 = vmax.f32 %v1431, 0.0
        %v1440 = vmax.f32 %v1432, 0.0
        %v1441 = vmax.f32 %v1433, 0.0
        %v1442 = vmax.f32 %v1434, 0.0
        %v1443 = vmax.f32 %v1435, 0.0
        %v1444 = vmax.f32 %v1436, 0.0
        %v1445 = vmax.f32 %v1437, 0.0
        %v1446 = vpack.c.bf16 %v1442, %v1438
        %v1447 = vpack.c.bf16 %v1443, %v1439
        %v1448 = vpack.c.bf16 %v1444, %v1440
        %v1449 = vpack.c.bf16 %v1445, %v1441
        %v1450 = vld [vmem:[#allocation8] sm:$0xff]
        %v1451 = vld [vmem:[#allocation8 + $0x8] sm:$0xff]
        %v1452 = vld [vmem:[#allocation8 + $0x10] sm:$0xff]
        %v1453 = vld [vmem:[#allocation8 + $0x18] sm:$0xff]
        %v1454 = vld [vmem:[#allocation8 + $0x20] sm:$0xff]
        %v1455 = vld [vmem:[#allocation8 + $0x28] sm:$0xff]
        %v1456 = vld [vmem:[#allocation8 + $0x30] sm:$0xff]
        %v1457 = vld [vmem:[#allocation8 + $0x38] sm:$0xff]
        %v1458 = vld [vmem:[#allocation8 + $0x40] sm:$0xff]
        %v1459 = vld [vmem:[#allocation8 + $0x48] sm:$0xff]
        %v1460 = vld [vmem:[#allocation8 + $0x50] sm:$0xff]
        %v1461 = vld [vmem:[#allocation8 + $0x58] sm:$0xff]
        %v1462 = vld [vmem:[#allocation8 + $0x60] sm:$0xff]
        %v1463 = vld [vmem:[#allocation8 + $0x68] sm:$0xff]
        %v1464 = vld [vmem:[#allocation8 + $0x70] sm:$0xff]
        %v1465 = vld [vmem:[#allocation8 + $0x78] sm:$0xff]
        %v1466 = vld [vmem:[#allocation8 + $0x80] sm:$0xff]
        %v1467 = vld [vmem:[#allocation8 + $0x88] sm:$0xff]
        %v1468 = vld [vmem:[#allocation8 + $0x90] sm:$0xff]
        %v1469 = vld [vmem:[#allocation8 + $0x98] sm:$0xff]
        %v1470 = vld [vmem:[#allocation8 + $0xa0] sm:$0xff]
        %v1471 = vld [vmem:[#allocation8 + $0xa8] sm:$0xff]
        %v1472 = vld [vmem:[#allocation8 + $0xb0] sm:$0xff]
        %v1473 = vld [vmem:[#allocation8 + $0xb8] sm:$0xff]
        %v1474 = vld [vmem:[#allocation8 + $0xc0] sm:$0xff]
        %v1475 = vld [vmem:[#allocation8 + $0xc8] sm:$0xff]
        %v1476 = vld [vmem:[#allocation8 + $0xd0] sm:$0xff]
        %v1477 = vld [vmem:[#allocation8 + $0xd8] sm:$0xff]
        %v1478 = vld [vmem:[#allocation8 + $0xe0] sm:$0xff]
        %v1479 = vld [vmem:[#allocation8 + $0xe8] sm:$0xff]
        %v1480 = vld [vmem:[#allocation8 + $0xf0] sm:$0xff]
        %v1481 = vld [vmem:[#allocation8 + $0xf8] sm:$0xff]
        %v1482 = vld [vmem:[#allocation8 + $0x100] sm:$0xff]
        %v1483 = vld [vmem:[#allocation8 + $0x108] sm:$0xff]
        %v1484 = vld [vmem:[#allocation8 + $0x110] sm:$0xff]
        %v1485 = vld [vmem:[#allocation8 + $0x118] sm:$0xff]
        %v1486 = vld [vmem:[#allocation8 + $0x120] sm:$0xff]
        %v1487 = vld [vmem:[#allocation8 + $0x128] sm:$0xff]
        %v1488 = vld [vmem:[#allocation8 + $0x130] sm:$0xff]
        %v1489 = vld [vmem:[#allocation8 + $0x138] sm:$0xff]
        %v1490 = vld [vmem:[#allocation8 + $0x140] sm:$0xff]
        %v1491 = vld [vmem:[#allocation8 + $0x148] sm:$0xff]
        %v1492 = vld [vmem:[#allocation8 + $0x150] sm:$0xff]
        %v1493 = vld [vmem:[#allocation8 + $0x158] sm:$0xff]
        %v1494 = vld [vmem:[#allocation8 + $0x160] sm:$0xff]
        %v1495 = vld [vmem:[#allocation8 + $0x168] sm:$0xff]
        %v1496 = vld [vmem:[#allocation8 + $0x170] sm:$0xff]
        %v1497 = vld [vmem:[#allocation8 + $0x178] sm:$0xff]
        %v1498 = vld [vmem:[#allocation8 + $0x180] sm:$0xff]
        %v1499 = vld [vmem:[#allocation8 + $0x188] sm:$0xff]
        %v1500 = vld [vmem:[#allocation8 + $0x190] sm:$0xff]
        %v1501 = vld [vmem:[#allocation8 + $0x198] sm:$0xff]
        %v1502 = vld [vmem:[#allocation8 + $0x1a0] sm:$0xff]
        %v1503 = vld [vmem:[#allocation8 + $0x1a8] sm:$0xff]
        %v1504 = vld [vmem:[#allocation8 + $0x1b0] sm:$0xff]
        %v1505 = vld [vmem:[#allocation8 + $0x1b8] sm:$0xff]
        %v1506 = vld [vmem:[#allocation8 + $0x1c0] sm:$0xff]
        %v1507 = vld [vmem:[#allocation8 + $0x1c8] sm:$0xff]
        %v1508 = vld [vmem:[#allocation8 + $0x1d0] sm:$0xff]
        %v1509 = vld [vmem:[#allocation8 + $0x1d8] sm:$0xff]
        %v1510 = vld [vmem:[#allocation8 + $0x1e0] sm:$0xff]
        %v1511 = vld [vmem:[#allocation8 + $0x1e8] sm:$0xff]
        %v1512 = vld [vmem:[#allocation8 + $0x1f0] sm:$0xff]
        %v1513 = vld [vmem:[#allocation8 + $0x1f8] sm:$0xff]
        %v1514 = vld [vmem:[#allocation10] sm:$0x3]
        %v1516 = vperm.slane %v1514, 0
        %v1517 = vperm.slane %v1514, 1
        %v1584 = vunpack.c.l.b16 %v1450
        %v1585 = vunpack.c.h.b16 %v1450
        %v1586 = vunpack.c.l.b16 %v1451
        %v1587 = vunpack.c.h.b16 %v1451
        %v1588 = vunpack.c.l.b16 %v1452
        %v1589 = vunpack.c.h.b16 %v1452
        %v1590 = vunpack.c.l.b16 %v1453
        %v1591 = vunpack.c.h.b16 %v1453
        %v1592 = vunpack.c.l.b16 %v1454
        %v1593 = vunpack.c.h.b16 %v1454
        %v1594 = vunpack.c.l.b16 %v1455
        %v1595 = vunpack.c.h.b16 %v1455
        %v1596 = vunpack.c.l.b16 %v1456
        %v1597 = vunpack.c.h.b16 %v1456
        %v1598 = vunpack.c.l.b16 %v1457
        %v1599 = vunpack.c.h.b16 %v1457
        %v1600 = vunpack.c.l.b16 %v1458
        %v1601 = vunpack.c.h.b16 %v1458
        %v1602 = vunpack.c.l.b16 %v1459
        %v1603 = vunpack.c.h.b16 %v1459
        %v1604 = vunpack.c.l.b16 %v1460
        %v1605 = vunpack.c.h.b16 %v1460
        %v1606 = vunpack.c.l.b16 %v1461
        %v1607 = vunpack.c.h.b16 %v1461
        %v1608 = vunpack.c.l.b16 %v1462
        %v1609 = vunpack.c.h.b16 %v1462
        %v1610 = vunpack.c.l.b16 %v1463
        %v1611 = vunpack.c.h.b16 %v1463
        %v1612 = vunpack.c.l.b16 %v1464
        %v1613 = vunpack.c.h.b16 %v1464
        %v1614 = vunpack.c.l.b16 %v1465
        %v1615 = vunpack.c.h.b16 %v1465
        %v1616 = vunpack.c.l.b16 %v1466
        %v1617 = vunpack.c.h.b16 %v1466
        %v1618 = vunpack.c.l.b16 %v1467
        %v1619 = vunpack.c.h.b16 %v1467
        %v1620 = vunpack.c.l.b16 %v1468
        %v1621 = vunpack.c.h.b16 %v1468
        %v1622 = vunpack.c.l.b16 %v1469
        %v1623 = vunpack.c.h.b16 %v1469
        %v1624 = vunpack.c.l.b16 %v1470
        %v1625 = vunpack.c.h.b16 %v1470
        %v1626 = vunpack.c.l.b16 %v1471
        %v1627 = vunpack.c.h.b16 %v1471
        %v1628 = vunpack.c.l.b16 %v1472
        %v1629 = vunpack.c.h.b16 %v1472
        %v1630 = vunpack.c.l.b16 %v1473
        %v1631 = vunpack.c.h.b16 %v1473
        %v1632 = vunpack.c.l.b16 %v1474
        %v1633 = vunpack.c.h.b16 %v1474
        %v1634 = vunpack.c.l.b16 %v1475
        %v1635 = vunpack.c.h.b16 %v1475
        %v1636 = vunpack.c.l.b16 %v1476
        %v1637 = vunpack.c.h.b16 %v1476
        %v1638 = vunpack.c.l.b16 %v1477
        %v1639 = vunpack.c.h.b16 %v1477
        %v1640 = vunpack.c.l.b16 %v1478
        %v1641 = vunpack.c.h.b16 %v1478
        %v1642 = vunpack.c.l.b16 %v1479
        %v1643 = vunpack.c.h.b16 %v1479
        %v1644 = vunpack.c.l.b16 %v1480
        %v1645 = vunpack.c.h.b16 %v1480
        %v1646 = vunpack.c.l.b16 %v1481
        %v1647 = vunpack.c.h.b16 %v1481
        %v1648 = vunpack.c.l.b16 %v1482
        %v1649 = vunpack.c.h.b16 %v1482
        %v1650 = vunpack.c.l.b16 %v1483
        %v1651 = vunpack.c.h.b16 %v1483
        %v1652 = vunpack.c.l.b16 %v1484
        %v1653 = vunpack.c.h.b16 %v1484
        %v1654 = vunpack.c.l.b16 %v1485
        %v1655 = vunpack.c.h.b16 %v1485
        %v1656 = vunpack.c.l.b16 %v1486
        %v1657 = vunpack.c.h.b16 %v1486
        %v1658 = vunpack.c.l.b16 %v1487
        %v1659 = vunpack.c.h.b16 %v1487
        %v1660 = vunpack.c.l.b16 %v1488
        %v1661 = vunpack.c.h.b16 %v1488
        %v1662 = vunpack.c.l.b16 %v1489
        %v1663 = vunpack.c.h.b16 %v1489
        %v1664 = vunpack.c.l.b16 %v1490
        %v1665 = vunpack.c.h.b16 %v1490
        %v1666 = vunpack.c.l.b16 %v1491
        %v1667 = vunpack.c.h.b16 %v1491
        %v1668 = vunpack.c.l.b16 %v1492
        %v1669 = vunpack.c.h.b16 %v1492
        %v1670 = vunpack.c.l.b16 %v1493
        %v1671 = vunpack.c.h.b16 %v1493
        %v1672 = vunpack.c.l.b16 %v1494
        %v1673 = vunpack.c.h.b16 %v1494
        %v1674 = vunpack.c.l.b16 %v1495
        %v1675 = vunpack.c.h.b16 %v1495
        %v1676 = vunpack.c.l.b16 %v1496
        %v1677 = vunpack.c.h.b16 %v1496
        %v1678 = vunpack.c.l.b16 %v1497
        %v1679 = vunpack.c.h.b16 %v1497
        %v1680 = vunpack.c.l.b16 %v1498
        %v1681 = vunpack.c.h.b16 %v1498
        %v1682 = vunpack.c.l.b16 %v1499
        %v1683 = vunpack.c.h.b16 %v1499
        %v1684 = vunpack.c.l.b16 %v1500
        %v1685 = vunpack.c.h.b16 %v1500
        %v1686 = vunpack.c.l.b16 %v1501
        %v1687 = vunpack.c.h.b16 %v1501
        %v1688 = vunpack.c.l.b16 %v1502
        %v1689 = vunpack.c.h.b16 %v1502
        %v1690 = vunpack.c.l.b16 %v1503
        %v1691 = vunpack.c.h.b16 %v1503
        %v1692 = vunpack.c.l.b16 %v1504
        %v1693 = vunpack.c.h.b16 %v1504
        %v1694 = vunpack.c.l.b16 %v1505
        %v1695 = vunpack.c.h.b16 %v1505
        %v1696 = vunpack.c.l.b16 %v1506
        %v1697 = vunpack.c.h.b16 %v1506
        %v1698 = vunpack.c.l.b16 %v1507
        %v1699 = vunpack.c.h.b16 %v1507
        %v1700 = vunpack.c.l.b16 %v1508
        %v1701 = vunpack.c.h.b16 %v1508
        %v1702 = vunpack.c.l.b16 %v1509
        %v1703 = vunpack.c.h.b16 %v1509
        %v1704 = vunpack.c.l.b16 %v1510
        %v1705 = vunpack.c.h.b16 %v1510
        %v1706 = vunpack.c.l.b16 %v1511
        %v1707 = vunpack.c.h.b16 %v1511
        %v1708 = vunpack.c.l.b16 %v1512
        %v1709 = vunpack.c.h.b16 %v1512
        %v1710 = vunpack.c.l.b16 %v1513
        %v1711 = vunpack.c.h.b16 %v1513
        %v1712 = vpack.c.b16 %v1586, %v1584
        %v1713 = vpack.c.b16 %v1587, %v1585
        %v1714 = vpack.c.b16 %v1590, %v1588
        %v1715 = vpack.c.b16 %v1591, %v1589
        %v1716 = vpack.c.b16 %v1594, %v1592
        %v1717 = vpack.c.b16 %v1595, %v1593
        %v1718 = vpack.c.b16 %v1598, %v1596
        %v1719 = vpack.c.b16 %v1599, %v1597
        %v1720 = vpack.c.b16 %v1602, %v1600
        %v1721 = vpack.c.b16 %v1603, %v1601
        %v1722 = vpack.c.b16 %v1606, %v1604
        %v1723 = vpack.c.b16 %v1607, %v1605
        %v1724 = vpack.c.b16 %v1610, %v1608
        %v1725 = vpack.c.b16 %v1611, %v1609
        %v1726 = vpack.c.b16 %v1614, %v1612
        %v1727 = vpack.c.b16 %v1615, %v1613
        %v1728 = vpack.c.b16 %v1618, %v1616
        %v1729 = vpack.c.b16 %v1619, %v1617
        %v1730 = vpack.c.b16 %v1622, %v1620
        %v1731 = vpack.c.b16 %v1623, %v1621
        %v1732 = vpack.c.b16 %v1626, %v1624
        %v1733 = vpack.c.b16 %v1627, %v1625
        %v1734 = vpack.c.b16 %v1630, %v1628
        %v1735 = vpack.c.b16 %v1631, %v1629
        %v1736 = vpack.c.b16 %v1634, %v1632
        %v1737 = vpack.c.b16 %v1635, %v1633
        %v1738 = vpack.c.b16 %v1638, %v1636
        %v1739 = vpack.c.b16 %v1639, %v1637
        %v1740 = vpack.c.b16 %v1642, %v1640
        %v1741 = vpack.c.b16 %v1643, %v1641
        %v1742 = vpack.c.b16 %v1646, %v1644
        %v1743 = vpack.c.b16 %v1647, %v1645
        %v1744 = vpack.c.b16 %v1650, %v1648
        %v1745 = vpack.c.b16 %v1651, %v1649
        %v1746 = vpack.c.b16 %v1654, %v1652
        %v1747 = vpack.c.b16 %v1655, %v1653
        %v1748 = vpack.c.b16 %v1658, %v1656
        %v1749 = vpack.c.b16 %v1659, %v1657
        %v1750 = vpack.c.b16 %v1662, %v1660
        %v1751 = vpack.c.b16 %v1663, %v1661
        %v1752 = vpack.c.b16 %v1666, %v1664
        %v1753 = vpack.c.b16 %v1667, %v1665
        %v1754 = vpack.c.b16 %v1670, %v1668
        %v1755 = vpack.c.b16 %v1671, %v1669
        %v1756 = vpack.c.b16 %v1674, %v1672
        %v1757 = vpack.c.b16 %v1675, %v1673
        %v1758 = vpack.c.b16 %v1678, %v1676
        %v1759 = vpack.c.b16 %v1679, %v1677
        %v1760 = vpack.c.b16 %v1682, %v1680
        %v1761 = vpack.c.b16 %v1683, %v1681
        %v1762 = vpack.c.b16 %v1686, %v1684
        %v1763 = vpack.c.b16 %v1687, %v1685
        %v1764 = vpack.c.b16 %v1690, %v1688
        %v1765 = vpack.c.b16 %v1691, %v1689
        %v1766 = vpack.c.b16 %v1694, %v1692
        %v1767 = vpack.c.b16 %v1695, %v1693
        %v1768 = vpack.c.b16 %v1698, %v1696
        %v1769 = vpack.c.b16 %v1699, %v1697
        %v1770 = vpack.c.b16 %v1702, %v1700
        %v1771 = vpack.c.b16 %v1703, %v1701
        %v1772 = vpack.c.b16 %v1706, %v1704
        %v1773 = vpack.c.b16 %v1707, %v1705
        %v1774 = vpack.c.b16 %v1710, %v1708
        %v1775 = vpack.c.b16 %v1711, %v1709
        %1840 = vmatpush.bf16.msra.mxu0 %v1726
        %1841 = vmatpush.bf16.msra.mxu0 %v1724
        %1842 = vmatpush.bf16.msra.mxu0 %v1722
        %1843 = vmatpush.bf16.msra.mxu0 %v1720
        %1844 = vmatpush.bf16.msra.mxu0 %v1718
        %1845 = vmatpush.bf16.msra.mxu0 %v1716
        %1846 = vmatpush.bf16.msra.mxu0 %v1714
        %1847 = vmatpush.bf16.msra.mxu0 %v1712
        %1848 = vmatmul.bf16.gmra.mxu0 %v1446
        %v1849 = vpop.f32.mrf.mxu0
        %v1850 = vadd.f32 %v1516, %v1849
        %v1851 = vpop.f32.mrf.mxu0
        %v1852 = vadd.f32 %v1516, %v1851
        %1853 = vdwg.mxu0
        %1854 = vmatpush.bf16.msra.mxu0 %v1742
        %1855 = vmatpush.bf16.msra.mxu0 %v1740
        %1856 = vmatpush.bf16.msra.mxu0 %v1738
        %1857 = vmatpush.bf16.msra.mxu0 %v1736
        %1858 = vmatpush.bf16.msra.mxu0 %v1734
        %1859 = vmatpush.bf16.msra.mxu0 %v1732
        %1860 = vmatpush.bf16.msra.mxu0 %v1730
        %1861 = vmatpush.bf16.msra.mxu0 %v1728
        %1862 = vmatmul.bf16.gmra.mxu0 %v1447
        %v1863 = vpop.f32.mrf.mxu0
        %v1864 = vadd.f32 %v1850, %v1863
        %v1865 = vpop.f32.mrf.mxu0
        %v1866 = vadd.f32 %v1852, %v1865
        %1867 = vdwg.mxu0
        %1868 = vmatpush.bf16.msra.mxu0 %v1758
        %1869 = vmatpush.bf16.msra.mxu0 %v1756
        %1870 = vmatpush.bf16.msra.mxu0 %v1754
        %1871 = vmatpush.bf16.msra.mxu0 %v1752
        %1872 = vmatpush.bf16.msra.mxu0 %v1750
        %1873 = vmatpush.bf16.msra.mxu0 %v1748
        %1874 = vmatpush.bf16.msra.mxu0 %v1746
        %1875 = vmatpush.bf16.msra.mxu0 %v1744
        %1876 = vmatmul.bf16.gmra.mxu0 %v1448
        %v1877 = vpop.f32.mrf.mxu0
        %v1878 = vadd.f32 %v1864, %v1877
        %v1879 = vpop.f32.mrf.mxu0
        %v1880 = vadd.f32 %v1866, %v1879
        %1881 = vdwg.mxu0
        %1882 = vmatpush.bf16.msra.mxu0 %v1774
        %1883 = vmatpush.bf16.msra.mxu0 %v1772
        %1884 = vmatpush.bf16.msra.mxu0 %v1770
        %1885 = vmatpush.bf16.msra.mxu0 %v1768
        %1886 = vmatpush.bf16.msra.mxu0 %v1766
        %1887 = vmatpush.bf16.msra.mxu0 %v1764
        %1888 = vmatpush.bf16.msra.mxu0 %v1762
        %1889 = vmatpush.bf16.msra.mxu0 %v1760
        %1890 = vmatmul.bf16.gmra.mxu0 %v1449
        %v1891 = vpop.f32.mrf.mxu0
        %v1892 = vadd.f32 %v1878, %v1891
        %v1893 = vpop.f32.mrf.mxu0
        %v1894 = vadd.f32 %v1880, %v1893
        %1895 = vdwg.mxu0
        %1896 = vmatpush.bf16.msra.mxu0 %v1727
        %1897 = vmatpush.bf16.msra.mxu0 %v1725
        %1898 = vmatpush.bf16.msra.mxu0 %v1723
        %1899 = vmatpush.bf16.msra.mxu0 %v1721
        %1900 = vmatpush.bf16.msra.mxu0 %v1719
        %1901 = vmatpush.bf16.msra.mxu0 %v1717
        %1902 = vmatpush.bf16.msra.mxu0 %v1715
        %1903 = vmatpush.bf16.msra.mxu0 %v1713
        %1904 = vmatmul.bf16.gmra.mxu0 %v1446
        %v1905 = vpop.f32.mrf.mxu0
        %v1906 = vadd.f32 %v1517, %v1905
        %v1907 = vpop.f32.mrf.mxu0
        %v1908 = vadd.f32 %v1517, %v1907
        %1909 = vdwg.mxu0
        %1910 = vmatpush.bf16.msra.mxu0 %v1743
        %1911 = vmatpush.bf16.msra.mxu0 %v1741
        %1912 = vmatpush.bf16.msra.mxu0 %v1739
        %1913 = vmatpush.bf16.msra.mxu0 %v1737
        %1914 = vmatpush.bf16.msra.mxu0 %v1735
        %1915 = vmatpush.bf16.msra.mxu0 %v1733
        %1916 = vmatpush.bf16.msra.mxu0 %v1731
        %1917 = vmatpush.bf16.msra.mxu0 %v1729
        %1918 = vmatmul.bf16.gmra.mxu0 %v1447
        %v1919 = vpop.f32.mrf.mxu0
        %v1920 = vadd.f32 %v1906, %v1919
        %v1921 = vpop.f32.mrf.mxu0
        %v1922 = vadd.f32 %v1908, %v1921
        %1923 = vdwg.mxu0
        %1924 = vmatpush.bf16.msra.mxu0 %v1759
        %1925 = vmatpush.bf16.msra.mxu0 %v1757
        %1926 = vmatpush.bf16.msra.mxu0 %v1755
        %1927 = vmatpush.bf16.msra.mxu0 %v1753
        %1928 = vmatpush.bf16.msra.mxu0 %v1751
        %1929 = vmatpush.bf16.msra.mxu0 %v1749
        %1930 = vmatpush.bf16.msra.mxu0 %v1747
        %1931 = vmatpush.bf16.msra.mxu0 %v1745
        %1932 = vmatmul.bf16.gmra.mxu0 %v1448
        %v1933 = vpop.f32.mrf.mxu0
        %v1934 = vadd.f32 %v1920, %v1933
        %v1935 = vpop.f32.mrf.mxu0
        %v1936 = vadd.f32 %v1922, %v1935
        %1937 = vdwg.mxu0
        %1938 = vmatpush.bf16.msra.mxu0 %v1775
        %1939 = vmatpush.bf16.msra.mxu0 %v1773
        %1940 = vmatpush.bf16.msra.mxu0 %v1771
        %1941 = vmatpush.bf16.msra.mxu0 %v1769
        %1942 = vmatpush.bf16.msra.mxu0 %v1767
        %1943 = vmatpush.bf16.msra.mxu0 %v1765
        %1944 = vmatpush.bf16.msra.mxu0 %v1763
        %1945 = vmatpush.bf16.msra.mxu0 %v1761
        %1946 = vmatmul.bf16.gmra.mxu0 %v1449
        %v1947 = vpop.f32.mrf.mxu0
        %v1948 = vadd.f32 %v1934, %v1947
        %v1949 = vpop.f32.mrf.mxu0
        %v1950 = vadd.f32 %v1936, %v1949
        %1951 = vdwg.mxu0
        %v1952 = vmax.f32 %v1892, 0.0
        %v1953 = vmax.f32 %v1948, 0.0
        %v1954 = vmax.f32 %v1894, 0.0
        %v1955 = vmax.f32 %v1950, 0.0
        %v1956 = vpack.c.bf16 %v1954, %v1952
        %v1957 = vpack.c.bf16 %v1955, %v1953
        %v1958 = vld [vmem:[#allocation11] sm:$0xff]
        %v1959 = vld [vmem:[#allocation11 + $0x8] sm:$0xff]
        %v1960 = vld [vmem:[#allocation11 + $0x10] sm:$0xff]
        %v1961 = vld [vmem:[#allocation11 + $0x18] sm:$0xff]
        %v1962 = vld [vmem:[#allocation11 + $0x20] sm:$0xff]
        %v1963 = vld [vmem:[#allocation11 + $0x28] sm:$0xff]
        %v1964 = vld [vmem:[#allocation11 + $0x30] sm:$0xff]
        %v1965 = vld [vmem:[#allocation11 + $0x38] sm:$0xff]
        %v1966 = vld [vmem:[#allocation11 + $0x40] sm:$0xff]
        %v1967 = vld [vmem:[#allocation11 + $0x48] sm:$0xff]
        %v1968 = vld [vmem:[#allocation11 + $0x50] sm:$0xff]
        %v1969 = vld [vmem:[#allocation11 + $0x58] sm:$0xff]
        %v1970 = vld [vmem:[#allocation11 + $0x60] sm:$0xff]
        %v1971 = vld [vmem:[#allocation11 + $0x68] sm:$0xff]
        %v1972 = vld [vmem:[#allocation11 + $0x70] sm:$0xff]
        %v1973 = vld [vmem:[#allocation11 + $0x78] sm:$0xff]
        %v1974 = vld [vmem:[#allocation11 + $0x80] sm:$0xff]
        %v1975 = vld [vmem:[#allocation11 + $0x88] sm:$0xff]
        %v1976 = vld [vmem:[#allocation11 + $0x90] sm:$0xff]
        %v1977 = vld [vmem:[#allocation11 + $0x98] sm:$0xff]
        %v1978 = vld [vmem:[#allocation11 + $0xa0] sm:$0xff]
        %v1979 = vld [vmem:[#allocation11 + $0xa8] sm:$0xff]
        %v1980 = vld [vmem:[#allocation11 + $0xb0] sm:$0xff]
        %v1981 = vld [vmem:[#allocation11 + $0xb8] sm:$0xff]
        %v1982 = vld [vmem:[#allocation11 + $0xc0] sm:$0xff]
        %v1983 = vld [vmem:[#allocation11 + $0xc8] sm:$0xff]
        %v1984 = vld [vmem:[#allocation11 + $0xd0] sm:$0xff]
        %v1985 = vld [vmem:[#allocation11 + $0xd8] sm:$0xff]
        %v1986 = vld [vmem:[#allocation11 + $0xe0] sm:$0xff]
        %v1987 = vld [vmem:[#allocation11 + $0xe8] sm:$0xff]
        %v1988 = vld [vmem:[#allocation11 + $0xf0] sm:$0xff]
        %v1989 = vld [vmem:[#allocation11 + $0xf8] sm:$0xff]
        %v1990 = vld [vmem:[#allocation13] sm:$0x3]
        %v1992 = vperm.slane %v1990, 0
        %v1993 = vperm.slane %v1990, 1
        %v2028 = vunpack.c.l.b16 %v1958
        %v2029 = vunpack.c.h.b16 %v1958
        %v2030 = vunpack.c.l.b16 %v1959
        %v2031 = vunpack.c.h.b16 %v1959
        %v2032 = vunpack.c.l.b16 %v1960
        %v2033 = vunpack.c.h.b16 %v1960
        %v2034 = vunpack.c.l.b16 %v1961
        %v2035 = vunpack.c.h.b16 %v1961
        %v2036 = vunpack.c.l.b16 %v1962
        %v2037 = vunpack.c.h.b16 %v1962
        %v2038 = vunpack.c.l.b16 %v1963
        %v2039 = vunpack.c.h.b16 %v1963
        %v2040 = vunpack.c.l.b16 %v1964
        %v2041 = vunpack.c.h.b16 %v1964
        %v2042 = vunpack.c.l.b16 %v1965
        %v2043 = vunpack.c.h.b16 %v1965
        %v2044 = vunpack.c.l.b16 %v1966
        %v2045 = vunpack.c.h.b16 %v1966
        %v2046 = vunpack.c.l.b16 %v1967
        %v2047 = vunpack.c.h.b16 %v1967
        %v2048 = vunpack.c.l.b16 %v1968
        %v2049 = vunpack.c.h.b16 %v1968
        %v2050 = vunpack.c.l.b16 %v1969
        %v2051 = vunpack.c.h.b16 %v1969
        %v2052 = vunpack.c.l.b16 %v1970
        %v2053 = vunpack.c.h.b16 %v1970
        %v2054 = vunpack.c.l.b16 %v1971
        %v2055 = vunpack.c.h.b16 %v1971
        %v2056 = vunpack.c.l.b16 %v1972
        %v2057 = vunpack.c.h.b16 %v1972
        %v2058 = vunpack.c.l.b16 %v1973
        %v2059 = vunpack.c.h.b16 %v1973
        %v2060 = vunpack.c.l.b16 %v1974
        %v2061 = vunpack.c.h.b16 %v1974
        %v2062 = vunpack.c.l.b16 %v1975
        %v2063 = vunpack.c.h.b16 %v1975
        %v2064 = vunpack.c.l.b16 %v1976
        %v2065 = vunpack.c.h.b16 %v1976
        %v2066 = vunpack.c.l.b16 %v1977
        %v2067 = vunpack.c.h.b16 %v1977
        %v2068 = vunpack.c.l.b16 %v1978
        %v2069 = vunpack.c.h.b16 %v1978
        %v2070 = vunpack.c.l.b16 %v1979
        %v2071 = vunpack.c.h.b16 %v1979
        %v2072 = vunpack.c.l.b16 %v1980
        %v2073 = vunpack.c.h.b16 %v1980
        %v2074 = vunpack.c.l.b16 %v1981
        %v2075 = vunpack.c.h.b16 %v1981
        %v2076 = vunpack.c.l.b16 %v1982
        %v2077 = vunpack.c.h.b16 %v1982
        %v2078 = vunpack.c.l.b16 %v1983
        %v2079 = vunpack.c.h.b16 %v1983
        %v2080 = vunpack.c.l.b16 %v1984
        %v2081 = vunpack.c.h.b16 %v1984
        %v2082 = vunpack.c.l.b16 %v1985
        %v2083 = vunpack.c.h.b16 %v1985
        %v2084 = vunpack.c.l.b16 %v1986
        %v2085 = vunpack.c.h.b16 %v1986
        %v2086 = vunpack.c.l.b16 %v1987
        %v2087 = vunpack.c.h.b16 %v1987
        %v2088 = vunpack.c.l.b16 %v1988
        %v2089 = vunpack.c.h.b16 %v1988
        %v2090 = vunpack.c.l.b16 %v1989
        %v2091 = vunpack.c.h.b16 %v1989
        %v2092 = vpack.c.b16 %v2030, %v2028
        %v2093 = vpack.c.b16 %v2031, %v2029
        %v2094 = vpack.c.b16 %v2034, %v2032
        %v2095 = vpack.c.b16 %v2035, %v2033
        %v2096 = vpack.c.b16 %v2038, %v2036
        %v2097 = vpack.c.b16 %v2039, %v2037
        %v2098 = vpack.c.b16 %v2042, %v2040
        %v2099 = vpack.c.b16 %v2043, %v2041
        %v2100 = vpack.c.b16 %v2046, %v2044
        %v2101 = vpack.c.b16 %v2047, %v2045
        %v2102 = vpack.c.b16 %v2050, %v2048
        %v2103 = vpack.c.b16 %v2051, %v2049
        %v2104 = vpack.c.b16 %v2054, %v2052
        %v2105 = vpack.c.b16 %v2055, %v2053
        %v2106 = vpack.c.b16 %v2058, %v2056
        %v2107 = vpack.c.b16 %v2059, %v2057
        %v2108 = vpack.c.b16 %v2062, %v2060
        %v2109 = vpack.c.b16 %v2063, %v2061
        %v2110 = vpack.c.b16 %v2066, %v2064
        %v2111 = vpack.c.b16 %v2067, %v2065
        %v2112 = vpack.c.b16 %v2070, %v2068
        %v2113 = vpack.c.b16 %v2071, %v2069
        %v2114 = vpack.c.b16 %v2074, %v2072
        %v2115 = vpack.c.b16 %v2075, %v2073
        %v2116 = vpack.c.b16 %v2078, %v2076
        %v2117 = vpack.c.b16 %v2079, %v2077
        %v2118 = vpack.c.b16 %v2082, %v2080
        %v2119 = vpack.c.b16 %v2083, %v2081
        %v2120 = vpack.c.b16 %v2086, %v2084
        %v2121 = vpack.c.b16 %v2087, %v2085
        %v2122 = vpack.c.b16 %v2090, %v2088
        %v2123 = vpack.c.b16 %v2091, %v2089
        %2156 = vmatpush.bf16.msra.mxu0 %v2106
        %2157 = vmatpush.bf16.msra.mxu0 %v2104
        %2158 = vmatpush.bf16.msra.mxu0 %v2102
        %2159 = vmatpush.bf16.msra.mxu0 %v2100
        %2160 = vmatpush.bf16.msra.mxu0 %v2098
        %2161 = vmatpush.bf16.msra.mxu0 %v2096
        %2162 = vmatpush.bf16.msra.mxu0 %v2094
        %2163 = vmatpush.bf16.msra.mxu0 %v2092
        %2164 = vmatmul.bf16.gmra.mxu0 %v1956
        %v2165 = vpop.f32.mrf.mxu0
        %v2166 = vadd.f32 %v1992, %v2165
        %v2167 = vpop.f32.mrf.mxu0
        %v2168 = vadd.f32 %v1992, %v2167
        %2169 = vdwg.mxu0
        %2170 = vmatpush.bf16.msra.mxu0 %v2122
        %2171 = vmatpush.bf16.msra.mxu0 %v2120
        %2172 = vmatpush.bf16.msra.mxu0 %v2118
        %2173 = vmatpush.bf16.msra.mxu0 %v2116
        %2174 = vmatpush.bf16.msra.mxu0 %v2114
        %2175 = vmatpush.bf16.msra.mxu0 %v2112
        %2176 = vmatpush.bf16.msra.mxu0 %v2110
        %2177 = vmatpush.bf16.msra.mxu0 %v2108
        %2178 = vmatmul.bf16.gmra.mxu0 %v1957
        %v2179 = vpop.f32.mrf.mxu0
        %v2180 = vadd.f32 %v2166, %v2179
        %v2181 = vpop.f32.mrf.mxu0
        %v2182 = vadd.f32 %v2168, %v2181
        %2183 = vdwg.mxu0
        %2184 = vmatpush.bf16.msra.mxu0 %v2107
        %2185 = vmatpush.bf16.msra.mxu0 %v2105
        %2186 = vmatpush.bf16.msra.mxu0 %v2103
        %2187 = vmatpush.bf16.msra.mxu0 %v2101
        %2188 = vmatpush.bf16.msra.mxu0 %v2099
        %2189 = vmatpush.bf16.msra.mxu0 %v2097
        %2190 = vmatpush.bf16.msra.mxu0 %v2095
        %2191 = vmatpush.bf16.msra.mxu0 %v2093
        %2192 = vmatmul.bf16.gmra.mxu0 %v1956
        %v2193 = vpop.f32.mrf.mxu0
        %v2194 = vadd.f32 %v1993, %v2193
        %v2195 = vpop.f32.mrf.mxu0
        %v2196 = vadd.f32 %v1993, %v2195
        %2197 = vdwg.mxu0
        %2198 = vmatpush.bf16.msra.mxu0 %v2123
        %2199 = vmatpush.bf16.msra.mxu0 %v2121
        %2200 = vmatpush.bf16.msra.mxu0 %v2119
        %2201 = vmatpush.bf16.msra.mxu0 %v2117
        %2202 = vmatpush.bf16.msra.mxu0 %v2115
        %2203 = vmatpush.bf16.msra.mxu0 %v2113
        %2204 = vmatpush.bf16.msra.mxu0 %v2111
        %2205 = vmatpush.bf16.msra.mxu0 %v2109
        %2206 = vmatmul.bf16.gmra.mxu0 %v1957
        %v2207 = vpop.f32.mrf.mxu0
        %v2208 = vadd.f32 %v2194, %v2207
        %v2209 = vpop.f32.mrf.mxu0
        %v2210 = vadd.f32 %v2196, %v2209
        %2211 = vdwg.mxu0
        %v2212 = vld [vmem:[%s660] sm:$0xff]
        %v2213 = vld [vmem:[%s660 + $0x8] sm:$0xff]
        %v2214 = vmul.f32 %v2208, 0.5
        %v2215 = vmul.f32 %v2210, 0.5
        %v2216 = vmul.f32 %v2214, 1.442695
        %v2217 = vpow.pop %v2216
        %v2218 = vmul.f32 %v2215, 1.442695
        %v2219 = vpow.pop %v2218
        %v2220 = vmul.f32 %v2212, %v2217
        %v2221 = vmul.f32 %v2213, %v2219
        %v2222 = vadd.f32 %v2180, %v2220
        %v2223 = vadd.f32 %v2182, %v2221
        %v2224 = vpack.c.bf16 %v2223, %v2222
        %v2225 = vld [vmem:[#allocation14] sm:$0xff]
        %v2226 = vld [vmem:[#allocation14 + $0x8] sm:$0xff]
        %v2227 = vld [vmem:[#allocation14 + $0x10] sm:$0xff]
        %v2228 = vld [vmem:[#allocation14 + $0x18] sm:$0xff]
        %v2229 = vld [vmem:[#allocation14 + $0x20] sm:$0xff]
        %v2230 = vld [vmem:[#allocation14 + $0x28] sm:$0xff]
        %v2231 = vld [vmem:[#allocation14 + $0x30] sm:$0xff]
        %v2232 = vld [vmem:[#allocation14 + $0x38] sm:$0xff]
        %v2233 = vld [vmem:[#allocation14 + $0x40] sm:$0xff]
        %v2234 = vld [vmem:[#allocation14 + $0x48] sm:$0xff]
        %v2235 = vld [vmem:[#allocation14 + $0x50] sm:$0xff]
        %v2236 = vld [vmem:[#allocation14 + $0x58] sm:$0xff]
        %v2237 = vld [vmem:[#allocation14 + $0x60] sm:$0xff]
        %v2238 = vld [vmem:[#allocation14 + $0x68] sm:$0xff]
        %v2239 = vld [vmem:[#allocation14 + $0x70] sm:$0xff]
        %v2240 = vld [vmem:[#allocation14 + $0x78] sm:$0xff]
        %v2257 = vunpack.c.l.b16 %v2225
        %v2258 = vunpack.c.h.b16 %v2225
        %v2259 = vunpack.c.l.b16 %v2226
        %v2260 = vunpack.c.h.b16 %v2226
        %v2261 = vunpack.c.l.b16 %v2227
        %v2262 = vunpack.c.h.b16 %v2227
        %v2263 = vunpack.c.l.b16 %v2228
        %v2264 = vunpack.c.h.b16 %v2228
        %v2265 = vunpack.c.l.b16 %v2229
        %v2266 = vunpack.c.h.b16 %v2229
        %v2267 = vunpack.c.l.b16 %v2230
        %v2268 = vunpack.c.h.b16 %v2230
        %v2269 = vunpack.c.l.b16 %v2231
        %v2270 = vunpack.c.h.b16 %v2231
        %v2271 = vunpack.c.l.b16 %v2232
        %v2272 = vunpack.c.h.b16 %v2232
        %v2273 = vunpack.c.l.b16 %v2233
        %v2274 = vunpack.c.h.b16 %v2233
        %v2275 = vunpack.c.l.b16 %v2234
        %v2276 = vunpack.c.h.b16 %v2234
        %v2277 = vunpack.c.l.b16 %v2235
        %v2278 = vunpack.c.h.b16 %v2235
        %v2279 = vunpack.c.l.b16 %v2236
        %v2280 = vunpack.c.h.b16 %v2236
        %v2281 = vunpack.c.l.b16 %v2237
        %v2282 = vunpack.c.h.b16 %v2237
        %v2283 = vunpack.c.l.b16 %v2238
        %v2284 = vunpack.c.h.b16 %v2238
        %v2285 = vunpack.c.l.b16 %v2239
        %v2286 = vunpack.c.h.b16 %v2239
        %v2287 = vunpack.c.l.b16 %v2240
        %v2288 = vunpack.c.h.b16 %v2240
        %v2289 = vpack.c.b16 %v2259, %v2257
        %v2290 = vpack.c.b16 %v2260, %v2258
        %v2291 = vpack.c.b16 %v2263, %v2261
        %v2292 = vpack.c.b16 %v2264, %v2262
        %v2293 = vpack.c.b16 %v2267, %v2265
        %v2294 = vpack.c.b16 %v2268, %v2266
        %v2295 = vpack.c.b16 %v2271, %v2269
        %v2296 = vpack.c.b16 %v2272, %v2270
        %v2297 = vpack.c.b16 %v2275, %v2273
        %v2298 = vpack.c.b16 %v2276, %v2274
        %v2299 = vpack.c.b16 %v2279, %v2277
        %v2300 = vpack.c.b16 %v2280, %v2278
        %v2301 = vpack.c.b16 %v2283, %v2281
        %v2302 = vpack.c.b16 %v2284, %v2282
        %v2303 = vpack.c.b16 %v2287, %v2285
        %v2304 = vpack.c.b16 %v2288, %v2286
        %2321 = vmatpush.bf16.msra.mxu0 %v2303
        %2322 = vmatpush.bf16.msra.mxu0 %v2301
        %2323 = vmatpush.bf16.msra.mxu0 %v2299
        %2324 = vmatpush.bf16.msra.mxu0 %v2297
        %2325 = vmatpush.bf16.msra.mxu0 %v2295
        %2326 = vmatpush.bf16.msra.mxu0 %v2293
        %2327 = vmatpush.bf16.msra.mxu0 %v2291
        %2328 = vmatpush.bf16.msra.mxu0 %v2289
        %2329 = vmatmul.bf16.gmra.mxu0 %v2224
        %v2330 = vpop.f32.mrf.mxu0
        %v2331 = vadd.f32 %v906, %v2330
        %v2332 = vpop.f32.mrf.mxu0
        %v2333 = vadd.f32 %v908, %v2332
        %2334 = vdwg.mxu0
        %2335 = vmatpush.bf16.msra.mxu0 %v2304
        %2336 = vmatpush.bf16.msra.mxu0 %v2302
        %2337 = vmatpush.bf16.msra.mxu0 %v2300
        %2338 = vmatpush.bf16.msra.mxu0 %v2298
        %2339 = vmatpush.bf16.msra.mxu0 %v2296
        %2340 = vmatpush.bf16.msra.mxu0 %v2294
        %2341 = vmatpush.bf16.msra.mxu0 %v2292
        %2342 = vmatpush.bf16.msra.mxu0 %v2290
        %2343 = vmatmul.bf16.gmra.mxu0 %v2224
        %v2344 = vpop.f32.mrf.mxu0
        %v2345 = vadd.f32 %v920, %v2344
        %v2346 = vpop.f32.mrf.mxu0
        %v2347 = vadd.f32 %v922, %v2346
        %2348 = vdwg.mxu0
        %v2349 = vld [vmem:[%s11] sm:$0x3]
        %v2351 = vperm.slane %v2349, 0
        %v2352 = vperm.slane %v2349, 1
        %v2355 = vadd.f32 %v2331, %v2351
        %v2356 = vadd.f32 %v2345, %v2352
        %v2357 = vadd.f32 %v2333, %v2351
        %v2358 = vadd.f32 %v2347, %v2352
        %v2359 = vmax.f32 %v2355, 0.0
        %v2360 = vmax.f32 %v2356, 0.0
        %v2361 = vmax.f32 %v2357, 0.0
        %v2362 = vmax.f32 %v2358, 0.0
        %v2363 = vpack.c.bf16 %v2361, %v2359
        %v2364 = vpack.c.bf16 %v2362, %v2360
        %v2365 = vld [vmem:[#allocation16] sm:$0xff]
        %v2366 = vld [vmem:[#allocation16 + $0x8] sm:$0xff]
        %v2367 = vld [vmem:[#allocation16 + $0x10] sm:$0xff]
        %v2368 = vld [vmem:[#allocation16 + $0x18] sm:$0xff]
        %v2369 = vld [vmem:[#allocation16 + $0x20] sm:$0xff]
        %v2370 = vld [vmem:[#allocation16 + $0x28] sm:$0xff]
        %v2371 = vld [vmem:[#allocation16 + $0x30] sm:$0xff]
        %v2372 = vld [vmem:[#allocation16 + $0x38] sm:$0xff]
        %v2373 = vld [vmem:[#allocation16 + $0x40] sm:$0xff]
        %v2374 = vld [vmem:[#allocation16 + $0x48] sm:$0xff]
        %v2375 = vld [vmem:[#allocation16 + $0x50] sm:$0xff]
        %v2376 = vld [vmem:[#allocation16 + $0x58] sm:$0xff]
        %v2377 = vld [vmem:[#allocation16 + $0x60] sm:$0xff]
        %v2378 = vld [vmem:[#allocation16 + $0x68] sm:$0xff]
        %v2379 = vld [vmem:[#allocation16 + $0x70] sm:$0xff]
        %v2380 = vld [vmem:[#allocation16 + $0x78] sm:$0xff]
        %v2381 = vld [vmem:[#allocation16 + $0x80] sm:$0xff]
        %v2382 = vld [vmem:[#allocation16 + $0x88] sm:$0xff]
        %v2383 = vld [vmem:[#allocation16 + $0x90] sm:$0xff]
        %v2384 = vld [vmem:[#allocation16 + $0x98] sm:$0xff]
        %v2385 = vld [vmem:[#allocation16 + $0xa0] sm:$0xff]
        %v2386 = vld [vmem:[#allocation16 + $0xa8] sm:$0xff]
        %v2387 = vld [vmem:[#allocation16 + $0xb0] sm:$0xff]
        %v2388 = vld [vmem:[#allocation16 + $0xb8] sm:$0xff]
        %v2389 = vld [vmem:[#allocation16 + $0xc0] sm:$0xff]
        %v2390 = vld [vmem:[#allocation16 + $0xc8] sm:$0xff]
        %v2391 = vld [vmem:[#allocation16 + $0xd0] sm:$0xff]
        %v2392 = vld [vmem:[#allocation16 + $0xd8] sm:$0xff]
        %v2393 = vld [vmem:[#allocation16 + $0xe0] sm:$0xff]
        %v2394 = vld [vmem:[#allocation16 + $0xe8] sm:$0xff]
        %v2395 = vld [vmem:[#allocation16 + $0xf0] sm:$0xff]
        %v2396 = vld [vmem:[#allocation16 + $0xf8] sm:$0xff]
        %v2397 = vld [vmem:[#allocation16 + $0x100] sm:$0xff]
        %v2398 = vld [vmem:[#allocation16 + $0x108] sm:$0xff]
        %v2399 = vld [vmem:[#allocation16 + $0x110] sm:$0xff]
        %v2400 = vld [vmem:[#allocation16 + $0x118] sm:$0xff]
        %v2401 = vld [vmem:[#allocation16 + $0x120] sm:$0xff]
        %v2402 = vld [vmem:[#allocation16 + $0x128] sm:$0xff]
        %v2403 = vld [vmem:[#allocation16 + $0x130] sm:$0xff]
        %v2404 = vld [vmem:[#allocation16 + $0x138] sm:$0xff]
        %v2405 = vld [vmem:[#allocation16 + $0x140] sm:$0xff]
        %v2406 = vld [vmem:[#allocation16 + $0x148] sm:$0xff]
        %v2407 = vld [vmem:[#allocation16 + $0x150] sm:$0xff]
        %v2408 = vld [vmem:[#allocation16 + $0x158] sm:$0xff]
        %v2409 = vld [vmem:[#allocation16 + $0x160] sm:$0xff]
        %v2410 = vld [vmem:[#allocation16 + $0x168] sm:$0xff]
        %v2411 = vld [vmem:[#allocation16 + $0x170] sm:$0xff]
        %v2412 = vld [vmem:[#allocation16 + $0x178] sm:$0xff]
        %v2413 = vld [vmem:[#allocation16 + $0x180] sm:$0xff]
        %v2414 = vld [vmem:[#allocation16 + $0x188] sm:$0xff]
        %v2415 = vld [vmem:[#allocation16 + $0x190] sm:$0xff]
        %v2416 = vld [vmem:[#allocation16 + $0x198] sm:$0xff]
        %v2417 = vld [vmem:[#allocation16 + $0x1a0] sm:$0xff]
        %v2418 = vld [vmem:[#allocation16 + $0x1a8] sm:$0xff]
        %v2419 = vld [vmem:[#allocation16 + $0x1b0] sm:$0xff]
        %v2420 = vld [vmem:[#allocation16 + $0x1b8] sm:$0xff]
        %v2421 = vld [vmem:[#allocation16 + $0x1c0] sm:$0xff]
        %v2422 = vld [vmem:[#allocation16 + $0x1c8] sm:$0xff]
        %v2423 = vld [vmem:[#allocation16 + $0x1d0] sm:$0xff]
        %v2424 = vld [vmem:[#allocation16 + $0x1d8] sm:$0xff]
        %v2425 = vld [vmem:[#allocation16 + $0x1e0] sm:$0xff]
        %v2426 = vld [vmem:[#allocation16 + $0x1e8] sm:$0xff]
        %v2427 = vld [vmem:[#allocation16 + $0x1f0] sm:$0xff]
        %v2428 = vld [vmem:[#allocation16 + $0x1f8] sm:$0xff]
        %v2429 = vld [vmem:[%s13] sm:$0xf]
        %v2431 = vperm.slane %v2429, 0
        %v2432 = vperm.slane %v2429, 1
        %v2433 = vperm.slane %v2429, 2
        %v2434 = vperm.slane %v2429, 3
        %v2503 = vunpack.c.l.b16 %v2365
        %v2504 = vunpack.c.h.b16 %v2365
        %v2505 = vunpack.c.l.b16 %v2366
        %v2506 = vunpack.c.h.b16 %v2366
        %v2507 = vunpack.c.l.b16 %v2367
        %v2508 = vunpack.c.h.b16 %v2367
        %v2509 = vunpack.c.l.b16 %v2368
        %v2510 = vunpack.c.h.b16 %v2368
        %v2511 = vunpack.c.l.b16 %v2369
        %v2512 = vunpack.c.h.b16 %v2369
        %v2513 = vunpack.c.l.b16 %v2370
        %v2514 = vunpack.c.h.b16 %v2370
        %v2515 = vunpack.c.l.b16 %v2371
        %v2516 = vunpack.c.h.b16 %v2371
        %v2517 = vunpack.c.l.b16 %v2372
        %v2518 = vunpack.c.h.b16 %v2372
        %v2519 = vunpack.c.l.b16 %v2373
        %v2520 = vunpack.c.h.b16 %v2373
        %v2521 = vunpack.c.l.b16 %v2374
        %v2522 = vunpack.c.h.b16 %v2374
        %v2523 = vunpack.c.l.b16 %v2375
        %v2524 = vunpack.c.h.b16 %v2375
        %v2525 = vunpack.c.l.b16 %v2376
        %v2526 = vunpack.c.h.b16 %v2376
        %v2527 = vunpack.c.l.b16 %v2377
        %v2528 = vunpack.c.h.b16 %v2377
        %v2529 = vunpack.c.l.b16 %v2378
        %v2530 = vunpack.c.h.b16 %v2378
        %v2531 = vunpack.c.l.b16 %v2379
        %v2532 = vunpack.c.h.b16 %v2379
        %v2533 = vunpack.c.l.b16 %v2380
        %v2534 = vunpack.c.h.b16 %v2380
        %v2535 = vunpack.c.l.b16 %v2381
        %v2536 = vunpack.c.h.b16 %v2381
        %v2537 = vunpack.c.l.b16 %v2382
        %v2538 = vunpack.c.h.b16 %v2382
        %v2539 = vunpack.c.l.b16 %v2383
        %v2540 = vunpack.c.h.b16 %v2383
        %v2541 = vunpack.c.l.b16 %v2384
        %v2542 = vunpack.c.h.b16 %v2384
        %v2543 = vunpack.c.l.b16 %v2385
        %v2544 = vunpack.c.h.b16 %v2385
        %v2545 = vunpack.c.l.b16 %v2386
        %v2546 = vunpack.c.h.b16 %v2386
        %v2547 = vunpack.c.l.b16 %v2387
        %v2548 = vunpack.c.h.b16 %v2387
        %v2549 = vunpack.c.l.b16 %v2388
        %v2550 = vunpack.c.h.b16 %v2388
        %v2551 = vunpack.c.l.b16 %v2389
        %v2552 = vunpack.c.h.b16 %v2389
        %v2553 = vunpack.c.l.b16 %v2390
        %v2554 = vunpack.c.h.b16 %v2390
        %v2555 = vunpack.c.l.b16 %v2391
        %v2556 = vunpack.c.h.b16 %v2391
        %v2557 = vunpack.c.l.b16 %v2392
        %v2558 = vunpack.c.h.b16 %v2392
        %v2559 = vunpack.c.l.b16 %v2393
        %v2560 = vunpack.c.h.b16 %v2393
        %v2561 = vunpack.c.l.b16 %v2394
        %v2562 = vunpack.c.h.b16 %v2394
        %v2563 = vunpack.c.l.b16 %v2395
        %v2564 = vunpack.c.h.b16 %v2395
        %v2565 = vunpack.c.l.b16 %v2396
        %v2566 = vunpack.c.h.b16 %v2396
        %v2567 = vunpack.c.l.b16 %v2397
        %v2568 = vunpack.c.h.b16 %v2397
        %v2569 = vunpack.c.l.b16 %v2398
        %v2570 = vunpack.c.h.b16 %v2398
        %v2571 = vunpack.c.l.b16 %v2399
        %v2572 = vunpack.c.h.b16 %v2399
        %v2573 = vunpack.c.l.b16 %v2400
        %v2574 = vunpack.c.h.b16 %v2400
        %v2575 = vunpack.c.l.b16 %v2401
        %v2576 = vunpack.c.h.b16 %v2401
        %v2577 = vunpack.c.l.b16 %v2402
        %v2578 = vunpack.c.h.b16 %v2402
        %v2579 = vunpack.c.l.b16 %v2403
        %v2580 = vunpack.c.h.b16 %v2403
        %v2581 = vunpack.c.l.b16 %v2404
        %v2582 = vunpack.c.h.b16 %v2404
        %v2583 = vunpack.c.l.b16 %v2405
        %v2584 = vunpack.c.h.b16 %v2405
        %v2585 = vunpack.c.l.b16 %v2406
        %v2586 = vunpack.c.h.b16 %v2406
        %v2587 = vunpack.c.l.b16 %v2407
        %v2588 = vunpack.c.h.b16 %v2407
        %v2589 = vunpack.c.l.b16 %v2408
        %v2590 = vunpack.c.h.b16 %v2408
        %v2591 = vunpack.c.l.b16 %v2409
        %v2592 = vunpack.c.h.b16 %v2409
        %v2593 = vunpack.c.l.b16 %v2410
        %v2594 = vunpack.c.h.b16 %v2410
        %v2595 = vunpack.c.l.b16 %v2411
        %v2596 = vunpack.c.h.b16 %v2411
        %v2597 = vunpack.c.l.b16 %v2412
        %v2598 = vunpack.c.h.b16 %v2412
        %v2599 = vunpack.c.l.b16 %v2413
        %v2600 = vunpack.c.h.b16 %v2413
        %v2601 = vunpack.c.l.b16 %v2414
        %v2602 = vunpack.c.h.b16 %v2414
        %v2603 = vunpack.c.l.b16 %v2415
        %v2604 = vunpack.c.h.b16 %v2415
        %v2605 = vunpack.c.l.b16 %v2416
        %v2606 = vunpack.c.h.b16 %v2416
        %v2607 = vunpack.c.l.b16 %v2417
        %v2608 = vunpack.c.h.b16 %v2417
        %v2609 = vunpack.c.l.b16 %v2418
        %v2610 = vunpack.c.h.b16 %v2418
        %v2611 = vunpack.c.l.b16 %v2419
        %v2612 = vunpack.c.h.b16 %v2419
        %v2613 = vunpack.c.l.b16 %v2420
        %v2614 = vunpack.c.h.b16 %v2420
        %v2615 = vunpack.c.l.b16 %v2421
        %v2616 = vunpack.c.h.b16 %v2421
        %v2617 = vunpack.c.l.b16 %v2422
        %v2618 = vunpack.c.h.b16 %v2422
        %v2619 = vunpack.c.l.b16 %v2423
        %v2620 = vunpack.c.h.b16 %v2423
        %v2621 = vunpack.c.l.b16 %v2424
        %v2622 = vunpack.c.h.b16 %v2424
        %v2623 = vunpack.c.l.b16 %v2425
        %v2624 = vunpack.c.h.b16 %v2425
        %v2625 = vunpack.c.l.b16 %v2426
        %v2626 = vunpack.c.h.b16 %v2426
        %v2627 = vunpack.c.l.b16 %v2427
        %v2628 = vunpack.c.h.b16 %v2427
        %v2629 = vunpack.c.l.b16 %v2428
        %v2630 = vunpack.c.h.b16 %v2428
        %v2631 = vpack.c.b16 %v2507, %v2503
        %v2632 = vpack.c.b16 %v2508, %v2504
        %v2633 = vpack.c.b16 %v2509, %v2505
        %v2634 = vpack.c.b16 %v2510, %v2506
        %v2635 = vpack.c.b16 %v2515, %v2511
        %v2636 = vpack.c.b16 %v2516, %v2512
        %v2637 = vpack.c.b16 %v2517, %v2513
        %v2638 = vpack.c.b16 %v2518, %v2514
        %v2639 = vpack.c.b16 %v2523, %v2519
        %v2640 = vpack.c.b16 %v2524, %v2520
        %v2641 = vpack.c.b16 %v2525, %v2521
        %v2642 = vpack.c.b16 %v2526, %v2522
        %v2643 = vpack.c.b16 %v2531, %v2527
        %v2644 = vpack.c.b16 %v2532, %v2528
        %v2645 = vpack.c.b16 %v2533, %v2529
        %v2646 = vpack.c.b16 %v2534, %v2530
        %v2647 = vpack.c.b16 %v2539, %v2535
        %v2648 = vpack.c.b16 %v2540, %v2536
        %v2649 = vpack.c.b16 %v2541, %v2537
        %v2650 = vpack.c.b16 %v2542, %v2538
        %v2651 = vpack.c.b16 %v2547, %v2543
        %v2652 = vpack.c.b16 %v2548, %v2544
        %v2653 = vpack.c.b16 %v2549, %v2545
        %v2654 = vpack.c.b16 %v2550, %v2546
        %v2655 = vpack.c.b16 %v2555, %v2551
        %v2656 = vpack.c.b16 %v2556, %v2552
        %v2657 = vpack.c.b16 %v2557, %v2553
        %v2658 = vpack.c.b16 %v2558, %v2554
        %v2659 = vpack.c.b16 %v2563, %v2559
        %v2660 = vpack.c.b16 %v2564, %v2560
        %v2661 = vpack.c.b16 %v2565, %v2561
        %v2662 = vpack.c.b16 %v2566, %v2562
        %v2663 = vpack.c.b16 %v2571, %v2567
        %v2664 = vpack.c.b16 %v2572, %v2568
        %v2665 = vpack.c.b16 %v2573, %v2569
        %v2666 = vpack.c.b16 %v2574, %v2570
        %v2667 = vpack.c.b16 %v2579, %v2575
        %v2668 = vpack.c.b16 %v2580, %v2576
        %v2669 = vpack.c.b16 %v2581, %v2577
        %v2670 = vpack.c.b16 %v2582, %v2578
        %v2671 = vpack.c.b16 %v2587, %v2583
        %v2672 = vpack.c.b16 %v2588, %v2584
        %v2673 = vpack.c.b16 %v2589, %v2585
        %v2674 = vpack.c.b16 %v2590, %v2586
        %v2675 = vpack.c.b16 %v2595, %v2591
        %v2676 = vpack.c.b16 %v2596, %v2592
        %v2677 = vpack.c.b16 %v2597, %v2593
        %v2678 = vpack.c.b16 %v2598, %v2594
        %v2679 = vpack.c.b16 %v2603, %v2599
        %v2680 = vpack.c.b16 %v2604, %v2600
        %v2681 = vpack.c.b16 %v2605, %v2601
        %v2682 = vpack.c.b16 %v2606, %v2602
        %v2683 = vpack.c.b16 %v2611, %v2607
        %v2684 = vpack.c.b16 %v2612, %v2608
        %v2685 = vpack.c.b16 %v2613, %v2609
        %v2686 = vpack.c.b16 %v2614, %v2610
        %v2687 = vpack.c.b16 %v2619, %v2615
        %v2688 = vpack.c.b16 %v2620, %v2616
        %v2689 = vpack.c.b16 %v2621, %v2617
        %v2690 = vpack.c.b16 %v2622, %v2618
        %v2691 = vpack.c.b16 %v2627, %v2623
        %v2692 = vpack.c.b16 %v2628, %v2624
        %v2693 = vpack.c.b16 %v2629, %v2625
        %v2694 = vpack.c.b16 %v2630, %v2626
        %2759 = vmatpush.bf16.msra.mxu0 %v2659
        %2760 = vmatpush.bf16.msra.mxu0 %v2655
        %2761 = vmatpush.bf16.msra.mxu0 %v2651
        %2762 = vmatpush.bf16.msra.mxu0 %v2647
        %2763 = vmatpush.bf16.msra.mxu0 %v2643
        %2764 = vmatpush.bf16.msra.mxu0 %v2639
        %2765 = vmatpush.bf16.msra.mxu0 %v2635
        %2766 = vmatpush.bf16.msra.mxu0 %v2631
        %2767 = vmatmul.bf16.gmra.mxu0 %v2363
        %v2768 = vpop.f32.mrf.mxu0
        %v2769 = vadd.f32 %v2431, %v2768
        %v2770 = vpop.f32.mrf.mxu0
        %v2771 = vadd.f32 %v2431, %v2770
        %2772 = vdwg.mxu0
        %2773 = vmatpush.bf16.msra.mxu0 %v2691
        %2774 = vmatpush.bf16.msra.mxu0 %v2687
        %2775 = vmatpush.bf16.msra.mxu0 %v2683
        %2776 = vmatpush.bf16.msra.mxu0 %v2679
        %2777 = vmatpush.bf16.msra.mxu0 %v2675
        %2778 = vmatpush.bf16.msra.mxu0 %v2671
        %2779 = vmatpush.bf16.msra.mxu0 %v2667
        %2780 = vmatpush.bf16.msra.mxu0 %v2663
        %2781 = vmatmul.bf16.gmra.mxu0 %v2364
        %v2782 = vpop.f32.mrf.mxu0
        %v2783 = vadd.f32 %v2769, %v2782
        %v2784 = vpop.f32.mrf.mxu0
        %v2785 = vadd.f32 %v2771, %v2784
        %2786 = vdwg.mxu0
        %2787 = vmatpush.bf16.msra.mxu0 %v2660
        %2788 = vmatpush.bf16.msra.mxu0 %v2656
        %2789 = vmatpush.bf16.msra.mxu0 %v2652
        %2790 = vmatpush.bf16.msra.mxu0 %v2648
        %2791 = vmatpush.bf16.msra.mxu0 %v2644
        %2792 = vmatpush.bf16.msra.mxu0 %v2640
        %2793 = vmatpush.bf16.msra.mxu0 %v2636
        %2794 = vmatpush.bf16.msra.mxu0 %v2632
        %2795 = vmatmul.bf16.gmra.mxu0 %v2363
        %v2796 = vpop.f32.mrf.mxu0
        %v2797 = vadd.f32 %v2432, %v2796
        %v2798 = vpop.f32.mrf.mxu0
        %v2799 = vadd.f32 %v2432, %v2798
        %2800 = vdwg.mxu0
        %2801 = vmatpush.bf16.msra.mxu0 %v2692
        %2802 = vmatpush.bf16.msra.mxu0 %v2688
        %2803 = vmatpush.bf16.msra.mxu0 %v2684
        %2804 = vmatpush.bf16.msra.mxu0 %v2680
        %2805 = vmatpush.bf16.msra.mxu0 %v2676
        %2806 = vmatpush.bf16.msra.mxu0 %v2672
        %2807 = vmatpush.bf16.msra.mxu0 %v2668
        %2808 = vmatpush.bf16.msra.mxu0 %v2664
        %2809 = vmatmul.bf16.gmra.mxu0 %v2364
        %v2810 = vpop.f32.mrf.mxu0
        %v2811 = vadd.f32 %v2797, %v2810
        %v2812 = vpop.f32.mrf.mxu0
        %v2813 = vadd.f32 %v2799, %v2812
        %2814 = vdwg.mxu0
        %2815 = vmatpush.bf16.msra.mxu0 %v2661
        %2816 = vmatpush.bf16.msra.mxu0 %v2657
        %2817 = vmatpush.bf16.msra.mxu0 %v2653
        %2818 = vmatpush.bf16.msra.mxu0 %v2649
        %2819 = vmatpush.bf16.msra.mxu0 %v2645
        %2820 = vmatpush.bf16.msra.mxu0 %v2641
        %2821 = vmatpush.bf16.msra.mxu0 %v2637
        %2822 = vmatpush.bf16.msra.mxu0 %v2633
        %2823 = vmatmul.bf16.gmra.mxu0 %v2363
        %v2824 = vpop.f32.mrf.mxu0
        %v2825 = vadd.f32 %v2433, %v2824
        %v2826 = vpop.f32.mrf.mxu0
        %v2827 = vadd.f32 %v2433, %v2826
        %2828 = vdwg.mxu0
        %2829 = vmatpush.bf16.msra.mxu0 %v2693
        %2830 = vmatpush.bf16.msra.mxu0 %v2689
        %2831 = vmatpush.bf16.msra.mxu0 %v2685
        %2832 = vmatpush.bf16.msra.mxu0 %v2681
        %2833 = vmatpush.bf16.msra.mxu0 %v2677
        %2834 = vmatpush.bf16.msra.mxu0 %v2673
        %2835 = vmatpush.bf16.msra.mxu0 %v2669
        %2836 = vmatpush.bf16.msra.mxu0 %v2665
        %2837 = vmatmul.bf16.gmra.mxu0 %v2364
        %v2838 = vpop.f32.mrf.mxu0
        %v2839 = vadd.f32 %v2825, %v2838
        %v2840 = vpop.f32.mrf.mxu0
        %v2841 = vadd.f32 %v2827, %v2840
        %2842 = vdwg.mxu0
        %2843 = vmatpush.bf16.msra.mxu0 %v2662
        %2844 = vmatpush.bf16.msra.mxu0 %v2658
        %2845 = vmatpush.bf16.msra.mxu0 %v2654
        %2846 = vmatpush.bf16.msra.mxu0 %v2650
        %2847 = vmatpush.bf16.msra.mxu0 %v2646
        %2848 = vmatpush.bf16.msra.mxu0 %v2642
        %2849 = vmatpush.bf16.msra.mxu0 %v2638
        %2850 = vmatpush.bf16.msra.mxu0 %v2634
        %2851 = vmatmul.bf16.gmra.mxu0 %v2363
        %v2852 = vpop.f32.mrf.mxu0
        %v2853 = vadd.f32 %v2434, %v2852
        %v2854 = vpop.f32.mrf.mxu0
        %v2855 = vadd.f32 %v2434, %v2854
        %2856 = vdwg.mxu0
        %2857 = vmatpush.bf16.msra.mxu0 %v2694
        %2858 = vmatpush.bf16.msra.mxu0 %v2690
        %2859 = vmatpush.bf16.msra.mxu0 %v2686
        %2860 = vmatpush.bf16.msra.mxu0 %v2682
        %2861 = vmatpush.bf16.msra.mxu0 %v2678
        %2862 = vmatpush.bf16.msra.mxu0 %v2674
        %2863 = vmatpush.bf16.msra.mxu0 %v2670
        %2864 = vmatpush.bf16.msra.mxu0 %v2666
        %2865 = vmatmul.bf16.gmra.mxu0 %v2364
        %v2866 = vpop.f32.mrf.mxu0
        %v2867 = vadd.f32 %v2853, %v2866
        %v2868 = vpop.f32.mrf.mxu0
        %v2869 = vadd.f32 %v2855, %v2868
        %2870 = vdwg.mxu0
        %v2871 = vmax.f32 %v2783, 0.0
        %v2872 = vmax.f32 %v2811, 0.0
        %v2873 = vmax.f32 %v2839, 0.0
        %v2874 = vmax.f32 %v2867, 0.0
        %v2875 = vmax.f32 %v2785, 0.0
        %v2876 = vmax.f32 %v2813, 0.0
        %v2877 = vmax.f32 %v2841, 0.0
        %v2878 = vmax.f32 %v2869, 0.0
        %v2879 = vpack.c.bf16 %v2875, %v2871
        %v2880 = vpack.c.bf16 %v2876, %v2872
        %v2881 = vpack.c.bf16 %v2877, %v2873
        %v2882 = vpack.c.bf16 %v2878, %v2874
        %v2883 = vld [vmem:[#allocation17] sm:$0xff]
        %v2884 = vld [vmem:[#allocation17 + $0x8] sm:$0xff]
        %v2885 = vld [vmem:[#allocation17 + $0x10] sm:$0xff]
        %v2886 = vld [vmem:[#allocation17 + $0x18] sm:$0xff]
        %v2887 = vld [vmem:[#allocation17 + $0x20] sm:$0xff]
        %v2888 = vld [vmem:[#allocation17 + $0x28] sm:$0xff]
        %v2889 = vld [vmem:[#allocation17 + $0x30] sm:$0xff]
        %v2890 = vld [vmem:[#allocation17 + $0x38] sm:$0xff]
        %v2891 = vld [vmem:[#allocation17 + $0x40] sm:$0xff]
        %v2892 = vld [vmem:[#allocation17 + $0x48] sm:$0xff]
        %v2893 = vld [vmem:[#allocation17 + $0x50] sm:$0xff]
        %v2894 = vld [vmem:[#allocation17 + $0x58] sm:$0xff]
        %v2895 = vld [vmem:[#allocation17 + $0x60] sm:$0xff]
        %v2896 = vld [vmem:[#allocation17 + $0x68] sm:$0xff]
        %v2897 = vld [vmem:[#allocation17 + $0x70] sm:$0xff]
        %v2898 = vld [vmem:[#allocation17 + $0x78] sm:$0xff]
        %v2899 = vld [vmem:[#allocation17 + $0x80] sm:$0xff]
        %v2900 = vld [vmem:[#allocation17 + $0x88] sm:$0xff]
        %v2901 = vld [vmem:[#allocation17 + $0x90] sm:$0xff]
        %v2902 = vld [vmem:[#allocation17 + $0x98] sm:$0xff]
        %v2903 = vld [vmem:[#allocation17 + $0xa0] sm:$0xff]
        %v2904 = vld [vmem:[#allocation17 + $0xa8] sm:$0xff]
        %v2905 = vld [vmem:[#allocation17 + $0xb0] sm:$0xff]
        %v2906 = vld [vmem:[#allocation17 + $0xb8] sm:$0xff]
        %v2907 = vld [vmem:[#allocation17 + $0xc0] sm:$0xff]
        %v2908 = vld [vmem:[#allocation17 + $0xc8] sm:$0xff]
        %v2909 = vld [vmem:[#allocation17 + $0xd0] sm:$0xff]
        %v2910 = vld [vmem:[#allocation17 + $0xd8] sm:$0xff]
        %v2911 = vld [vmem:[#allocation17 + $0xe0] sm:$0xff]
        %v2912 = vld [vmem:[#allocation17 + $0xe8] sm:$0xff]
        %v2913 = vld [vmem:[#allocation17 + $0xf0] sm:$0xff]
        %v2914 = vld [vmem:[#allocation17 + $0xf8] sm:$0xff]
        %v2915 = vld [vmem:[#allocation17 + $0x100] sm:$0xff]
        %v2916 = vld [vmem:[#allocation17 + $0x108] sm:$0xff]
        %v2917 = vld [vmem:[#allocation17 + $0x110] sm:$0xff]
        %v2918 = vld [vmem:[#allocation17 + $0x118] sm:$0xff]
        %v2919 = vld [vmem:[#allocation17 + $0x120] sm:$0xff]
        %v2920 = vld [vmem:[#allocation17 + $0x128] sm:$0xff]
        %v2921 = vld [vmem:[#allocation17 + $0x130] sm:$0xff]
        %v2922 = vld [vmem:[#allocation17 + $0x138] sm:$0xff]
        %v2923 = vld [vmem:[#allocation17 + $0x140] sm:$0xff]
        %v2924 = vld [vmem:[#allocation17 + $0x148] sm:$0xff]
        %v2925 = vld [vmem:[#allocation17 + $0x150] sm:$0xff]
        %v2926 = vld [vmem:[#allocation17 + $0x158] sm:$0xff]
        %v2927 = vld [vmem:[#allocation17 + $0x160] sm:$0xff]
        %v2928 = vld [vmem:[#allocation17 + $0x168] sm:$0xff]
        %v2929 = vld [vmem:[#allocation17 + $0x170] sm:$0xff]
        %v2930 = vld [vmem:[#allocation17 + $0x178] sm:$0xff]
        %v2931 = vld [vmem:[#allocation17 + $0x180] sm:$0xff]
        %v2932 = vld [vmem:[#allocation17 + $0x188] sm:$0xff]
        %v2933 = vld [vmem:[#allocation17 + $0x190] sm:$0xff]
        %v2934 = vld [vmem:[#allocation17 + $0x198] sm:$0xff]
        %v2935 = vld [vmem:[#allocation17 + $0x1a0] sm:$0xff]
        %v2936 = vld [vmem:[#allocation17 + $0x1a8] sm:$0xff]
        %v2937 = vld [vmem:[#allocation17 + $0x1b0] sm:$0xff]
        %v2938 = vld [vmem:[#allocation17 + $0x1b8] sm:$0xff]
        %v2939 = vld [vmem:[#allocation17 + $0x1c0] sm:$0xff]
        %v2940 = vld [vmem:[#allocation17 + $0x1c8] sm:$0xff]
        %v2941 = vld [vmem:[#allocation17 + $0x1d0] sm:$0xff]
        %v2942 = vld [vmem:[#allocation17 + $0x1d8] sm:$0xff]
        %v2943 = vld [vmem:[#allocation17 + $0x1e0] sm:$0xff]
        %v2944 = vld [vmem:[#allocation17 + $0x1e8] sm:$0xff]
        %v2945 = vld [vmem:[#allocation17 + $0x1f0] sm:$0xff]
        %v2946 = vld [vmem:[#allocation17 + $0x1f8] sm:$0xff]
        %v2947 = vld [vmem:[%s15] sm:$0x3]
        %v2949 = vperm.slane %v2947, 0
        %v2950 = vperm.slane %v2947, 1
        %v3017 = vunpack.c.l.b16 %v2883
        %v3018 = vunpack.c.h.b16 %v2883
        %v3019 = vunpack.c.l.b16 %v2884
        %v3020 = vunpack.c.h.b16 %v2884
        %v3021 = vunpack.c.l.b16 %v2885
        %v3022 = vunpack.c.h.b16 %v2885
        %v3023 = vunpack.c.l.b16 %v2886
        %v3024 = vunpack.c.h.b16 %v2886
        %v3025 = vunpack.c.l.b16 %v2887
        %v3026 = vunpack.c.h.b16 %v2887
        %v3027 = vunpack.c.l.b16 %v2888
        %v3028 = vunpack.c.h.b16 %v2888
        %v3029 = vunpack.c.l.b16 %v2889
        %v3030 = vunpack.c.h.b16 %v2889
        %v3031 = vunpack.c.l.b16 %v2890
        %v3032 = vunpack.c.h.b16 %v2890
        %v3033 = vunpack.c.l.b16 %v2891
        %v3034 = vunpack.c.h.b16 %v2891
        %v3035 = vunpack.c.l.b16 %v2892
        %v3036 = vunpack.c.h.b16 %v2892
        %v3037 = vunpack.c.l.b16 %v2893
        %v3038 = vunpack.c.h.b16 %v2893
        %v3039 = vunpack.c.l.b16 %v2894
        %v3040 = vunpack.c.h.b16 %v2894
        %v3041 = vunpack.c.l.b16 %v2895
        %v3042 = vunpack.c.h.b16 %v2895
        %v3043 = vunpack.c.l.b16 %v2896
        %v3044 = vunpack.c.h.b16 %v2896
        %v3045 = vunpack.c.l.b16 %v2897
        %v3046 = vunpack.c.h.b16 %v2897
        %v3047 = vunpack.c.l.b16 %v2898
        %v3048 = vunpack.c.h.b16 %v2898
        %v3049 = vunpack.c.l.b16 %v2899
        %v3050 = vunpack.c.h.b16 %v2899
        %v3051 = vunpack.c.l.b16 %v2900
        %v3052 = vunpack.c.h.b16 %v2900
        %v3053 = vunpack.c.l.b16 %v2901
        %v3054 = vunpack.c.h.b16 %v2901
        %v3055 = vunpack.c.l.b16 %v2902
        %v3056 = vunpack.c.h.b16 %v2902
        %v3057 = vunpack.c.l.b16 %v2903
        %v3058 = vunpack.c.h.b16 %v2903
        %v3059 = vunpack.c.l.b16 %v2904
        %v3060 = vunpack.c.h.b16 %v2904
        %v3061 = vunpack.c.l.b16 %v2905
        %v3062 = vunpack.c.h.b16 %v2905
        %v3063 = vunpack.c.l.b16 %v2906
        %v3064 = vunpack.c.h.b16 %v2906
        %v3065 = vunpack.c.l.b16 %v2907
        %v3066 = vunpack.c.h.b16 %v2907
        %v3067 = vunpack.c.l.b16 %v2908
        %v3068 = vunpack.c.h.b16 %v2908
        %v3069 = vunpack.c.l.b16 %v2909
        %v3070 = vunpack.c.h.b16 %v2909
        %v3071 = vunpack.c.l.b16 %v2910
        %v3072 = vunpack.c.h.b16 %v2910
        %v3073 = vunpack.c.l.b16 %v2911
        %v3074 = vunpack.c.h.b16 %v2911
        %v3075 = vunpack.c.l.b16 %v2912
        %v3076 = vunpack.c.h.b16 %v2912
        %v3077 = vunpack.c.l.b16 %v2913
        %v3078 = vunpack.c.h.b16 %v2913
        %v3079 = vunpack.c.l.b16 %v2914
        %v3080 = vunpack.c.h.b16 %v2914
        %v3081 = vunpack.c.l.b16 %v2915
        %v3082 = vunpack.c.h.b16 %v2915
        %v3083 = vunpack.c.l.b16 %v2916
        %v3084 = vunpack.c.h.b16 %v2916
        %v3085 = vunpack.c.l.b16 %v2917
        %v3086 = vunpack.c.h.b16 %v2917
        %v3087 = vunpack.c.l.b16 %v2918
        %v3088 = vunpack.c.h.b16 %v2918
        %v3089 = vunpack.c.l.b16 %v2919
        %v3090 = vunpack.c.h.b16 %v2919
        %v3091 = vunpack.c.l.b16 %v2920
        %v3092 = vunpack.c.h.b16 %v2920
        %v3093 = vunpack.c.l.b16 %v2921
        %v3094 = vunpack.c.h.b16 %v2921
        %v3095 = vunpack.c.l.b16 %v2922
        %v3096 = vunpack.c.h.b16 %v2922
        %v3097 = vunpack.c.l.b16 %v2923
        %v3098 = vunpack.c.h.b16 %v2923
        %v3099 = vunpack.c.l.b16 %v2924
        %v3100 = vunpack.c.h.b16 %v2924
        %v3101 = vunpack.c.l.b16 %v2925
        %v3102 = vunpack.c.h.b16 %v2925
        %v3103 = vunpack.c.l.b16 %v2926
        %v3104 = vunpack.c.h.b16 %v2926
        %v3105 = vunpack.c.l.b16 %v2927
        %v3106 = vunpack.c.h.b16 %v2927
        %v3107 = vunpack.c.l.b16 %v2928
        %v3108 = vunpack.c.h.b16 %v2928
        %v3109 = vunpack.c.l.b16 %v2929
        %v3110 = vunpack.c.h.b16 %v2929
        %v3111 = vunpack.c.l.b16 %v2930
        %v3112 = vunpack.c.h.b16 %v2930
        %v3113 = vunpack.c.l.b16 %v2931
        %v3114 = vunpack.c.h.b16 %v2931
        %v3115 = vunpack.c.l.b16 %v2932
        %v3116 = vunpack.c.h.b16 %v2932
        %v3117 = vunpack.c.l.b16 %v2933
        %v3118 = vunpack.c.h.b16 %v2933
        %v3119 = vunpack.c.l.b16 %v2934
        %v3120 = vunpack.c.h.b16 %v2934
        %v3121 = vunpack.c.l.b16 %v2935
        %v3122 = vunpack.c.h.b16 %v2935
        %v3123 = vunpack.c.l.b16 %v2936
        %v3124 = vunpack.c.h.b16 %v2936
        %v3125 = vunpack.c.l.b16 %v2937
        %v3126 = vunpack.c.h.b16 %v2937
        %v3127 = vunpack.c.l.b16 %v2938
        %v3128 = vunpack.c.h.b16 %v2938
        %v3129 = vunpack.c.l.b16 %v2939
        %v3130 = vunpack.c.h.b16 %v2939
        %v3131 = vunpack.c.l.b16 %v2940
        %v3132 = vunpack.c.h.b16 %v2940
        %v3133 = vunpack.c.l.b16 %v2941
        %v3134 = vunpack.c.h.b16 %v2941
        %v3135 = vunpack.c.l.b16 %v2942
        %v3136 = vunpack.c.h.b16 %v2942
        %v3137 = vunpack.c.l.b16 %v2943
        %v3138 = vunpack.c.h.b16 %v2943
        %v3139 = vunpack.c.l.b16 %v2944
        %v3140 = vunpack.c.h.b16 %v2944
        %v3141 = vunpack.c.l.b16 %v2945
        %v3142 = vunpack.c.h.b16 %v2945
        %v3143 = vunpack.c.l.b16 %v2946
        %v3144 = vunpack.c.h.b16 %v2946
        %v3145 = vpack.c.b16 %v3019, %v3017
        %v3146 = vpack.c.b16 %v3020, %v3018
        %v3147 = vpack.c.b16 %v3023, %v3021
        %v3148 = vpack.c.b16 %v3024, %v3022
        %v3149 = vpack.c.b16 %v3027, %v3025
        %v3150 = vpack.c.b16 %v3028, %v3026
        %v3151 = vpack.c.b16 %v3031, %v3029
        %v3152 = vpack.c.b16 %v3032, %v3030
        %v3153 = vpack.c.b16 %v3035, %v3033
        %v3154 = vpack.c.b16 %v3036, %v3034
        %v3155 = vpack.c.b16 %v3039, %v3037
        %v3156 = vpack.c.b16 %v3040, %v3038
        %v3157 = vpack.c.b16 %v3043, %v3041
        %v3158 = vpack.c.b16 %v3044, %v3042
        %v3159 = vpack.c.b16 %v3047, %v3045
        %v3160 = vpack.c.b16 %v3048, %v3046
        %v3161 = vpack.c.b16 %v3051, %v3049
        %v3162 = vpack.c.b16 %v3052, %v3050
        %v3163 = vpack.c.b16 %v3055, %v3053
        %v3164 = vpack.c.b16 %v3056, %v3054
        %v3165 = vpack.c.b16 %v3059, %v3057
        %v3166 = vpack.c.b16 %v3060, %v3058
        %v3167 = vpack.c.b16 %v3063, %v3061
        %v3168 = vpack.c.b16 %v3064, %v3062
        %v3169 = vpack.c.b16 %v3067, %v3065
        %v3170 = vpack.c.b16 %v3068, %v3066
        %v3171 = vpack.c.b16 %v3071, %v3069
        %v3172 = vpack.c.b16 %v3072, %v3070
        %v3173 = vpack.c.b16 %v3075, %v3073
        %v3174 = vpack.c.b16 %v3076, %v3074
        %v3175 = vpack.c.b16 %v3079, %v3077
        %v3176 = vpack.c.b16 %v3080, %v3078
        %v3177 = vpack.c.b16 %v3083, %v3081
        %v3178 = vpack.c.b16 %v3084, %v3082
        %v3179 = vpack.c.b16 %v3087, %v3085
        %v3180 = vpack.c.b16 %v3088, %v3086
        %v3181 = vpack.c.b16 %v3091, %v3089
        %v3182 = vpack.c.b16 %v3092, %v3090
        %v3183 = vpack.c.b16 %v3095, %v3093
        %v3184 = vpack.c.b16 %v3096, %v3094
        %v3185 = vpack.c.b16 %v3099, %v3097
        %v3186 = vpack.c.b16 %v3100, %v3098
        %v3187 = vpack.c.b16 %v3103, %v3101
        %v3188 = vpack.c.b16 %v3104, %v3102
        %v3189 = vpack.c.b16 %v3107, %v3105
        %v3190 = vpack.c.b16 %v3108, %v3106
        %v3191 = vpack.c.b16 %v3111, %v3109
        %v3192 = vpack.c.b16 %v3112, %v3110
        %v3193 = vpack.c.b16 %v3115, %v3113
        %v3194 = vpack.c.b16 %v3116, %v3114
        %v3195 = vpack.c.b16 %v3119, %v3117
        %v3196 = vpack.c.b16 %v3120, %v3118
        %v3197 = vpack.c.b16 %v3123, %v3121
        %v3198 = vpack.c.b16 %v3124, %v3122
        %v3199 = vpack.c.b16 %v3127, %v3125
        %v3200 = vpack.c.b16 %v3128, %v3126
        %v3201 = vpack.c.b16 %v3131, %v3129
        %v3202 = vpack.c.b16 %v3132, %v3130
        %v3203 = vpack.c.b16 %v3135, %v3133
        %v3204 = vpack.c.b16 %v3136, %v3134
        %v3205 = vpack.c.b16 %v3139, %v3137
        %v3206 = vpack.c.b16 %v3140, %v3138
        %v3207 = vpack.c.b16 %v3143, %v3141
        %v3208 = vpack.c.b16 %v3144, %v3142
        %3273 = vmatpush.bf16.msra.mxu0 %v3159
        %3274 = vmatpush.bf16.msra.mxu0 %v3157
        %3275 = vmatpush.bf16.msra.mxu0 %v3155
        %3276 = vmatpush.bf16.msra.mxu0 %v3153
        %3277 = vmatpush.bf16.msra.mxu0 %v3151
        %3278 = vmatpush.bf16.msra.mxu0 %v3149
        %3279 = vmatpush.bf16.msra.mxu0 %v3147
        %3280 = vmatpush.bf16.msra.mxu0 %v3145
        %3281 = vmatmul.bf16.gmra.mxu0 %v2879
        %v3282 = vpop.f32.mrf.mxu0
        %v3283 = vadd.f32 %v2949, %v3282
        %v3284 = vpop.f32.mrf.mxu0
        %v3285 = vadd.f32 %v2949, %v3284
        %3286 = vdwg.mxu0
        %3287 = vmatpush.bf16.msra.mxu0 %v3175
        %3288 = vmatpush.bf16.msra.mxu0 %v3173
        %3289 = vmatpush.bf16.msra.mxu0 %v3171
        %3290 = vmatpush.bf16.msra.mxu0 %v3169
        %3291 = vmatpush.bf16.msra.mxu0 %v3167
        %3292 = vmatpush.bf16.msra.mxu0 %v3165
        %3293 = vmatpush.bf16.msra.mxu0 %v3163
        %3294 = vmatpush.bf16.msra.mxu0 %v3161
        %3295 = vmatmul.bf16.gmra.mxu0 %v2880
        %v3296 = vpop.f32.mrf.mxu0
        %v3297 = vadd.f32 %v3283, %v3296
        %v3298 = vpop.f32.mrf.mxu0
        %v3299 = vadd.f32 %v3285, %v3298
        %3300 = vdwg.mxu0
        %3301 = vmatpush.bf16.msra.mxu0 %v3191
        %3302 = vmatpush.bf16.msra.mxu0 %v3189
        %3303 = vmatpush.bf16.msra.mxu0 %v3187
        %3304 = vmatpush.bf16.msra.mxu0 %v3185
        %3305 = vmatpush.bf16.msra.mxu0 %v3183
        %3306 = vmatpush.bf16.msra.mxu0 %v3181
        %3307 = vmatpush.bf16.msra.mxu0 %v3179
        %3308 = vmatpush.bf16.msra.mxu0 %v3177
        %3309 = vmatmul.bf16.gmra.mxu0 %v2881
        %v3310 = vpop.f32.mrf.mxu0
        %v3311 = vadd.f32 %v3297, %v3310
        %v3312 = vpop.f32.mrf.mxu0
        %v3313 = vadd.f32 %v3299, %v3312
        %3314 = vdwg.mxu0
        %3315 = vmatpush.bf16.msra.mxu0 %v3207
        %3316 = vmatpush.bf16.msra.mxu0 %v3205
        %3317 = vmatpush.bf16.msra.mxu0 %v3203
        %3318 = vmatpush.bf16.msra.mxu0 %v3201
        %3319 = vmatpush.bf16.msra.mxu0 %v3199
        %3320 = vmatpush.bf16.msra.mxu0 %v3197
        %3321 = vmatpush.bf16.msra.mxu0 %v3195
        %3322 = vmatpush.bf16.msra.mxu0 %v3193
        %3323 = vmatmul.bf16.gmra.mxu0 %v2882
        %v3324 = vpop.f32.mrf.mxu0
        %v3325 = vadd.f32 %v3311, %v3324
        %v3326 = vpop.f32.mrf.mxu0
        %v3327 = vadd.f32 %v3313, %v3326
        %3328 = vdwg.mxu0
        %3329 = vmatpush.bf16.msra.mxu0 %v3160
        %3330 = vmatpush.bf16.msra.mxu0 %v3158
        %3331 = vmatpush.bf16.msra.mxu0 %v3156
        %3332 = vmatpush.bf16.msra.mxu0 %v3154
        %3333 = vmatpush.bf16.msra.mxu0 %v3152
        %3334 = vmatpush.bf16.msra.mxu0 %v3150
        %3335 = vmatpush.bf16.msra.mxu0 %v3148
        %3336 = vmatpush.bf16.msra.mxu0 %v3146
        %3337 = vmatmul.bf16.gmra.mxu0 %v2879
        %v3338 = vpop.f32.mrf.mxu0
        %v3339 = vadd.f32 %v2950, %v3338
        %v3340 = vpop.f32.mrf.mxu0
        %v3341 = vadd.f32 %v2950, %v3340
        %3342 = vdwg.mxu0
        %3343 = vmatpush.bf16.msra.mxu0 %v3176
        %3344 = vmatpush.bf16.msra.mxu0 %v3174
        %3345 = vmatpush.bf16.msra.mxu0 %v3172
        %3346 = vmatpush.bf16.msra.mxu0 %v3170
        %3347 = vmatpush.bf16.msra.mxu0 %v3168
        %3348 = vmatpush.bf16.msra.mxu0 %v3166
        %3349 = vmatpush.bf16.msra.mxu0 %v3164
        %3350 = vmatpush.bf16.msra.mxu0 %v3162
        %3351 = vmatmul.bf16.gmra.mxu0 %v2880
        %v3352 = vpop.f32.mrf.mxu0
        %v3353 = vadd.f32 %v3339, %v3352
        %v3354 = vpop.f32.mrf.mxu0
        %v3355 = vadd.f32 %v3341, %v3354
        %3356 = vdwg.mxu0
        %3357 = vmatpush.bf16.msra.mxu0 %v3192
        %3358 = vmatpush.bf16.msra.mxu0 %v3190
        %3359 = vmatpush.bf16.msra.mxu0 %v3188
        %3360 = vmatpush.bf16.msra.mxu0 %v3186
        %3361 = vmatpush.bf16.msra.mxu0 %v3184
        %3362 = vmatpush.bf16.msra.mxu0 %v3182
        %3363 = vmatpush.bf16.msra.mxu0 %v3180
        %3364 = vmatpush.bf16.msra.mxu0 %v3178
        %3365 = vmatmul.bf16.gmra.mxu0 %v2881
        %v3366 = vpop.f32.mrf.mxu0
        %v3367 = vadd.f32 %v3353, %v3366
        %v3368 = vpop.f32.mrf.mxu0
        %v3369 = vadd.f32 %v3355, %v3368
        %3370 = vdwg.mxu0
        %3371 = vmatpush.bf16.msra.mxu0 %v3208
        %3372 = vmatpush.bf16.msra.mxu0 %v3206
        %3373 = vmatpush.bf16.msra.mxu0 %v3204
        %3374 = vmatpush.bf16.msra.mxu0 %v3202
        %3375 = vmatpush.bf16.msra.mxu0 %v3200
        %3376 = vmatpush.bf16.msra.mxu0 %v3198
        %3377 = vmatpush.bf16.msra.mxu0 %v3196
        %3378 = vmatpush.bf16.msra.mxu0 %v3194
        %3379 = vmatmul.bf16.gmra.mxu0 %v2882
        %v3380 = vpop.f32.mrf.mxu0
        %v3381 = vadd.f32 %v3367, %v3380
        %v3382 = vpop.f32.mrf.mxu0
        %v3383 = vadd.f32 %v3369, %v3382
        %3384 = vdwg.mxu0
        %v3385 = vxor.u32 %v3325, 2147483648
        %v3386 = vxor.u32 %v3381, 2147483648
        %v3387 = vxor.u32 %v3327, 2147483648
        %v3388 = vxor.u32 %v3383, 2147483648
        %v3389 = vmul.f32 %v3385, 1.442695
        %v3390 = vpow.pop %v3389
        %v3391 = vmul.f32 %v3386, 1.442695
        %v3392 = vpow.pop %v3391
        %v3393 = vmul.f32 %v3387, 1.442695
        %v3394 = vpow.pop %v3393
        %v3395 = vmul.f32 %v3388, 1.442695
        %v3396 = vpow.pop %v3395
        %v3397 = vadd.f32 %v3390, 1.0
        %v3398 = vadd.f32 %v3392, 1.0
        %v3399 = vadd.f32 %v3394, 1.0
        %v3400 = vadd.f32 %v3396, 1.0
        %v3401 = vrcp.pop %v3397
        %v3402 = vmul.f32 %v3397, %v3401
        %v3403 = vsub.f32 1.0, %v3402
        %v3404 = vmul.f32 %v3401, %v3403
        %v3405 = vadd.f32 %v3401, %v3404
        %vm3406 = vweird.f32 %v3397
        %vm3407 = vweird.f32 %v3401
        %vm3408 = vmor %vm3406, %vm3407
        %v3409 = vsel %vm3408, %v3401, %v3405
        %v3410 = vand.u32 2147483647, %v3397
        %vm3411 = vcmp.eq.f32.partialorder %v3410, 8.507059e+37
        %v3412 = vand.u32 %v3397, 2147483648
        %v3413 = vor.u32 1.1754944e-38, %v3412
        %v3414 = vsel %vm3411, %v3413, %v3409
        %v3415 = vmul.f32 1.0, %v3414
        %v3416 = vrcp.pop %v3398
        %v3417 = vmul.f32 %v3398, %v3416
        %v3418 = vsub.f32 1.0, %v3417
        %v3419 = vmul.f32 %v3416, %v3418
        %v3420 = vadd.f32 %v3416, %v3419
        %vm3421 = vweird.f32 %v3398
        %vm3422 = vweird.f32 %v3416
        %vm3423 = vmor %vm3421, %vm3422
        %v3424 = vsel %vm3423, %v3416, %v3420
        %v3425 = vand.u32 2147483647, %v3398
        %vm3426 = vcmp.eq.f32.partialorder %v3425, 8.507059e+37
        %v3427 = vand.u32 %v3398, 2147483648
        %v3428 = vor.u32 1.1754944e-38, %v3427
        %v3429 = vsel %vm3426, %v3428, %v3424
        %v3430 = vmul.f32 1.0, %v3429
        %v3431 = vrcp.pop %v3399
        %v3432 = vmul.f32 %v3399, %v3431
        %v3433 = vsub.f32 1.0, %v3432
        %v3434 = vmul.f32 %v3431, %v3433
        %v3435 = vadd.f32 %v3431, %v3434
        %vm3436 = vweird.f32 %v3399
        %vm3437 = vweird.f32 %v3431
        %vm3438 = vmor %vm3436, %vm3437
        %v3439 = vsel %vm3438, %v3431, %v3435
        %v3440 = vand.u32 2147483647, %v3399
        %vm3441 = vcmp.eq.f32.partialorder %v3440, 8.507059e+37
        %v3442 = vand.u32 %v3399, 2147483648
        %v3443 = vor.u32 1.1754944e-38, %v3442
        %v3444 = vsel %vm3441, %v3443, %v3439
        %v3445 = vmul.f32 1.0, %v3444
        %v3446 = vrcp.pop %v3400
        %v3447 = vmul.f32 %v3400, %v3446
        %v3448 = vsub.f32 1.0, %v3447
        %v3449 = vmul.f32 %v3446, %v3448
        %v3450 = vadd.f32 %v3446, %v3449
        %vm3451 = vweird.f32 %v3400
        %vm3452 = vweird.f32 %v3446
        %vm3453 = vmor %vm3451, %vm3452
        %v3454 = vsel %vm3453, %v3446, %v3450
        %v3455 = vand.u32 2147483647, %v3400
        %vm3456 = vcmp.eq.f32.partialorder %v3455, 8.507059e+37
        %v3457 = vand.u32 %v3400, 2147483648
        %v3458 = vor.u32 1.1754944e-38, %v3457
        %v3459 = vsel %vm3456, %v3458, %v3454
        %v3460 = vmul.f32 1.0, %v3459
        %3461 = vst [vmem:[%s759] sm:$0xff] %v3415
        %3462 = vst [vmem:[%s759 + $0x8] sm:$0xff] %v3430
        %3463 = vst [vmem:[%s759 + $0x10] sm:$0xff] %v3445
        %3464 = vst [vmem:[%s759 + $0x18] sm:$0xff] %v3460
        %3465 = vst [vmem:[%s766] sm:$0xff] %v2180
        %3466 = vst [vmem:[%s766 + $0x8] sm:$0xff] %v2208
        %3467 = vst [vmem:[%s766 + $0x10] sm:$0xff] %v2182
        %3468 = vst [vmem:[%s766 + $0x18] sm:$0xff] %v2210
        %s3469 = sand.u32 %s404, 1
        %s3470 = scalar_lea.sflag [#allocation4], %s3469
        %s3471 = sand.u32 %s404, 1
        %s3472 = smul.addr %s3471, 32
        %s3473 = scalar_lea.vmem [#allocation19], %s3472
        %s3474 = sand.u32 %s430, 1
        %s3475 = scalar_lea.sflag [#allocation21], %s3474
        %s3476 = sand.u32 %s430, 1
        %s3477 = smul.addr %s3476, 32
        %s3478 = scalar_lea.vmem [#allocation20], %s3477
        // Predicated region
        $region125: #{tpu_custom_call.1} parent=83 // pred_check
          %p3479 = pneg %p414
        $region126: #{tpu_custom_call.1} parent=83 // pred_check_branch
          %3481 = sbr.rel (%p3479) target = $region128
        $region127: #{tpu_custom_call.1} parent=83 // pred_region
          %s3482 = smul.u32 2, %s45
          %3484 = vsyncadd %s3470, 0
          %s3485 = smul.addr %s3482, 2
          %s3486 = smul.addr %s3485, 8
          %s3487 = scalar_lea.hbm %s16, %s3486
          %s3488 = sshll.u32 %s3473, 4
          %s3489 = int_to_ptr.vmem [resolvable:$true] %s3488
          %s3490 = sshll.u32 %s3487, 4
          %s3491 = int_to_ptr.hbm [resolvable:$true] %s3490
          %3496 = dma.vmem_to_hbm [thread:$0]  %s3489, 512, %s3491, %s3470, 256, 256, 16
        $region128: #{tpu_custom_call.1} parent=83 // pred_fallthru
          _
        // Predicated region
        $region129: #{tpu_custom_call.1} parent=83 // pred_check
          %p3497 = pneg %p440
        $region130: #{tpu_custom_call.1} parent=83 // pred_check_branch
          %3499 = sbr.rel (%p3497) target = $region132
        $region131: #{tpu_custom_call.1} parent=83 // pred_region
          %s3500 = smul.u32 2, %s45
          %3502 = vsyncadd %s3475, 0
          %s3503 = smul.addr %s3500, 2
          %s3504 = smul.addr %s3503, 8
          %s3505 = scalar_lea.hbm %s17, %s3504
          %s3506 = sshll.u32 %s3478, 4
          %s3507 = int_to_ptr.vmem [resolvable:$true] %s3506
          %s3508 = sshll.u32 %s3505, 4
          %s3509 = int_to_ptr.hbm [resolvable:$true] %s3508
          %3514 = dma.vmem_to_hbm [thread:$0]  %s3507, 512, %s3509, %s3475, 256, 256, 16
        $region132: #{tpu_custom_call.1} parent=83 // pred_fallthru
          _
      $region84: #{tpu_custom_call.1} parent=5 // pred_fallthru
        _
      %p3515 = scmp.le.s32.totalorder 2, %s40
      // Predicated region
      $region133: #{tpu_custom_call.1} parent=5 // pred_check
        %p3516 = pneg %p3515
      $region134: #{tpu_custom_call.1} parent=5 // pred_check_branch
        %3518 = sbr.rel (%p3516) target = $region136
      $region135: #{tpu_custom_call.1} parent=5 // pred_region
        %s3519 = ssub.s32 %s40, 2
        // Predicated region
        $region137: #{tpu_custom_call.1} parent=135 // pred_check
          %p3520 = pneg %p420
        $region138: #{tpu_custom_call.1} parent=135 // pred_check_branch
          %3522 = sbr.rel (%p3520) target = $region140
        $region139: #{tpu_custom_call.1} parent=135 // pred_region
          %s3523 = sand.u32 %s405, 1
          %s3524 = scalar_lea.sflag [#allocation4], %s3523
          %s3525 = sand.u32 %s405, 1
          %s3526 = smul.addr %s3525, 32
          %s3527 = scalar_lea.vmem [#allocation19], %s3526
          %3529 = dma.done %s3524, 512
        $region140: #{tpu_custom_call.1} parent=135 // pred_fallthru
          _
        // Predicated region
        $region141: #{tpu_custom_call.1} parent=135 // pred_check
          %p3530 = pneg %p446
        $region142: #{tpu_custom_call.1} parent=135 // pred_check_branch
          %3532 = sbr.rel (%p3530) target = $region144
        $region143: #{tpu_custom_call.1} parent=135 // pred_region
          %s3533 = sand.u32 %s431, 1
          %s3534 = scalar_lea.sflag [#allocation21], %s3533
          %s3535 = sand.u32 %s431, 1
          %s3536 = smul.addr %s3535, 32
          %s3537 = scalar_lea.vmem [#allocation20], %s3536
          %3539 = dma.done %s3534, 512
        $region144: #{tpu_custom_call.1} parent=135 // pred_fallthru
          _
      $region136: #{tpu_custom_call.1} parent=5 // pred_fallthru
        _
    $region6: #{tpu_custom_call.1} parent=1 // loop_footer
      %s44 = sadd.s32 1, %s40
    $region7: #{tpu_custom_call.1} parent=1 // loop_footer_branch
      %39 = sbr.rel target = $region3
    $region8: #{tpu_custom_call.1} parent=1 // loop_exit
      _
    %3540 = vsyncpa [#allocation3], 1
    %s3541 = scalar_lea.sflag [#allocation3], 1
    %3542 = vsyncpa %s3541, 1
    %3543 = vsyncpa [#allocation6], 1
    %s3544 = scalar_lea.sflag [#allocation6], 1
    %3545 = vsyncpa %s3544, 1
    %3546 = vsyncpa [#allocation9], 1
    %3547 = vsyncpa [#allocation12], 1
    %3548 = vsyncpa [#allocation15], 1
    %3549 = vsyncpa [#allocation18], 1
    %3550 = vsyncpa [#allocation4], 1
    %s3551 = scalar_lea.sflag [#allocation4], 1
    %3552 = vsyncpa %s3551, 1
    %3553 = vsyncpa [#allocation21], 1
    %s3554 = scalar_lea.sflag [#allocation21], 1
    %3555 = vsyncpa %s3554, 1

</llo_original>
